<compile_context>
chip_gen: v7x
topology: tpu7x:2x2x1
jax: 0.10.0
libtpu: 0.0.40
codegen_flags: <defaults>
</compile_context>

<pallas_src>
import functools

import jax
import jax.numpy as jnp
import numpy as np
from jax import lax
from jax.experimental import pallas as pl
from jax.experimental.pallas import tpu as pltpu

LANE = 128
VMEM_LIMIT = 32 * 1024 * 1024     # scoped-VMEM request for every pallas_call
VMEM_BUDGET = 18 * 1024 * 1024    # target per-kernel working set for tile picks


# --------------------------------------------------------------------------
# small helpers
# --------------------------------------------------------------------------
def _round_up(x, m):
    return (x + m - 1) // m * m


def _pad_last(a, to):
    pad = to - a.shape[-1]
    if pad == 0:
        return a
    return jnp.pad(a, [(0, 0)] * (a.ndim - 1) + [(0, pad)])


def _pad_to(a, shape):
    pads = [(0, t - s) for s, t in zip(a.shape, shape)]
    if not any(p[1] for p in pads):
        return a
    return jnp.pad(a, pads)


def _fold_bn(w_kc, gamma, beta, mean, var, eps):
    """Fold eval-mode BN into a (K, Cout) matmul weight + per-Cout bias."""
    scale = gamma / jnp.sqrt(var + eps)
    return w_kc * scale[None, :], beta - mean * scale


# --------------------------------------------------------------------------
# kernel 1: single-shot matmul + (bias, residual, ReLU) epilogue
#   grid = (M tiles,); weights/bias resident in VMEM; no scratch, no k loop.
# --------------------------------------------------------------------------
def _mm_bias_act_kernel(*refs, relu, has_res):
    if has_res:
        x_ref, w_ref, b_ref, r_ref, o_ref = refs
    else:
        x_ref, w_ref, b_ref, o_ref = refs
        r_ref = None
    y = jnp.dot(x_ref[...], w_ref[...], preferred_element_type=jnp.float32)
    y = y + b_ref[...]                       # folded BN bias (f32)
    if has_res:
        y = y + r_ref[...].astype(jnp.float32)   # fused residual add
    if relu:
        y = jnp.maximum(y, 0.0)
    o_ref[...] = y.astype(o_ref.dtype)


def _matmul_bn_act(x2d, w2d, bias2d, *, residual=None, relu=True,
                   out_dtype=jnp.bfloat16):
    """out = act(x2d @ w2d + bias [+ residual]).  K and Nc must be multiples of 128."""
    M, K = x2d.shape
    K2, Nc = w2d.shape
    assert K == K2 and K % LANE == 0 and Nc % LANE == 0

    # bf16 MXU inputs and bf16 streaming of the residual; f32 accumulate/epilogue.
    x2d = x2d.astype(jnp.bfloat16)
    w2d = w2d.astype(jnp.bfloat16)
    bias2d = bias2d.astype(jnp.float32)
    if residual is not None:
        residual = residual.astype(jnp.bfloat16)

    out_bytes = np.dtype(out_dtype).itemsize
    res_bytes = 2 if residual is not None else 0
    w_bytes = K * Nc * 2 + Nc * 4            # resident weight + bias

    def footprint(tm):
        return (w_bytes + 2 * tm * K * 2 + 2 * tm * Nc * out_bytes
                + 2 * tm * Nc * res_bytes + tm * Nc * 4)

    # Large M tiles, but >= 2 of them when possible (v7x megacore sharding).
    TM = min(512, max(16, _round_up((M + 1) // 2, 16)))
    while TM > 16 and footprint(TM) > VMEM_BUDGET:
        TM = max(16, (TM // 2) // 16 * 16)

    Mp = _round_up(M, TM)
    if Mp != M:
        x2d = jnp.pad(x2d, ((0, Mp - M), (0, 0)))
        if residual is not None:
            residual = jnp.pad(residual, ((0, Mp - M), (0, 0)))

    in_specs = [pl.BlockSpec((TM, K), lambda i: (i, 0)),
                pl.BlockSpec((K, Nc), lambda i: (0, 0)),   # weight stays resident
                pl.BlockSpec((1, Nc), lambda i: (0, 0))]
    args = [x2d, w2d, bias2d]
    if residual is not None:
        in_specs.append(pl.BlockSpec((TM, Nc), lambda i: (i, 0)))
        args.append(residual)

    bytes_accessed = (Mp * K * 2 + K * Nc * 2 + Nc * 4
                      + Mp * Nc * out_bytes + Mp * Nc * res_bytes)
    cost = pl.CostEstimate(flops=2 * Mp * K * Nc, transcendentals=0,
                           bytes_accessed=int(bytes_accessed))

    out = pl.pallas_call(
        functools.partial(_mm_bias_act_kernel, relu=relu,
                          has_res=residual is not None),
        out_shape=jax.ShapeDtypeStruct((Mp, Nc), out_dtype),
        grid=(Mp // TM,),
        in_specs=in_specs,
        out_specs=pl.BlockSpec((TM, Nc), lambda i: (i, 0)),
        compiler_params=pltpu.CompilerParams(
            dimension_semantics=("parallel",),
            vmem_limit_bytes=VMEM_LIMIT),
        cost_estimate=cost,
    )(*args)

    return out[:M] if Mp != M else out


# --------------------------------------------------------------------------
# kernel 2: direct 3x3 stride-1 conv (+ folded BN bias + ReLU), no im2col.
#   Input is a halo'd block of the flattened spatially-padded NHWC slab;
#   each of the 9 taps is a static row-offset slice (off = kh*d*Wp + kw*d).
# --------------------------------------------------------------------------
def _conv3x3_kernel(x_ref, w_ref, b_ref, o_ref, *, offs, cpad, npix):
    acc = None
    for t, off in enumerate(offs):
        xs = x_ref[off:off + npix, :]                 # (npix, cpad) bf16
        wt = w_ref[t * cpad:(t + 1) * cpad, :]        # (cpad, cout) bf16
        part = jnp.dot(xs, wt, preferred_element_type=jnp.float32)
        acc = part if acc is None else acc + part
    y = jnp.maximum(acc + b_ref[...], 0.0)
    o_ref[...] = y.astype(o_ref.dtype)


def _pick_th(N, H, Wp, C, Cout, d):
    """Largest divisor of H whose per-block working set fits the VMEM budget."""
    def footprint(th):
        slab = th * Wp + 2 * d * (Wp + 1)
        npix = th * Wp
        return (2 * slab * C * 2 + 9 * C * Cout * 2
                + 2 * npix * Cout * 2 + 3 * npix * Cout * 4)
    divisors = [t for t in range(H, 0, -1) if H % t == 0]
    th = next((t for t in divisors if footprint(t) <= VMEM_BUDGET), None)
    if th is None:
        return None
    if N * (H // th) < 2:                 # give the v7x megacore >= 2 grid steps
        smaller = next((t for t in divisors if t < th), None)
        if smaller is not None:
            th = smaller
    return th


def _conv3x3_direct(x_nhwc, w_flat, bias2d, *, dil):
    """3x3 stride-1 conv with folded BN + ReLU, without a materialized im2col.
    Returns flattened (N*H*W, Cout) bf16, or None if it does not fit VMEM."""
    N, H, W, C = x_nhwc.shape
    Cout = w_flat.shape[1]
    d = dil
    Hp, Wp = H + 2 * d, W + 2 * d

    TH = _pick_th(N, H, Wp, C, Cout, d)
    if TH is None:
        return None                        # caller falls back to im2col
    nb = H // TH
    SLAB = TH * Wp + 2 * d * (Wp + 1)      # block rows incl. tap halo + guard
    NPIX = TH * Wp                         # outputs computed on padded-width grid

    xb = x_nhwc.astype(jnp.bfloat16)
    w_flat = w_flat.astype(jnp.bfloat16)
    bias2d = bias2d.astype(jnp.float32)

    # spatially pad, flatten rows, add guard rows so the last taps never go OOB
    xp = jnp.pad(xb, ((0, 0), (d, d), (d, d), (0, 0))).reshape(N, Hp * Wp, C)
    xp = jnp.pad(xp, ((0, 0), (0, 2 * d), (0, 0)))
    blocks = jnp.stack([xp[:, b * TH * Wp: b * TH * Wp + SLAB, :]
                        for b in range(nb)], axis=1).reshape(N * nb, SLAB, C)

    offs = tuple(kh * d * Wp + kw * d for kh in range(3) for kw in range(3))

    cost = pl.CostEstimate(
        flops=2 * (N * nb) * NPIX * (9 * C) * Cout, transcendentals=0,
        bytes_accessed=int(blocks.size * 2 + w_flat.size * 2 + Cout * 4
                           + N * nb * NPIX * Cout * 2))

    out = pl.pallas_call(
        functools.partial(_conv3x3_kernel, offs=offs, cpad=C, npix=NPIX),
        out_shape=jax.ShapeDtypeStruct((N * nb, NPIX, Cout), jnp.bfloat16),
        grid=(N * nb,),
        in_specs=[pl.BlockSpec((None, SLAB, C), lambda i: (i, 0, 0)),
                  pl.BlockSpec((9 * C, Cout), lambda i: (0, 0)),   # resident W
                  pl.BlockSpec((1, Cout), lambda i: (0, 0))],
        out_specs=pl.BlockSpec((None, NPIX, Cout), lambda i: (i, 0, 0)),
        compiler_params=pltpu.CompilerParams(
            dimension_semantics=("parallel",),
            vmem_limit_bytes=VMEM_LIMIT),
        cost_estimate=cost,
    )(blocks, w_flat, bias2d)

    # (N*nb, TH*Wp, Cout) -> (N, H, Wp, Cout); drop the garbage padded-width cols.
    return out.reshape(N, H, Wp, Cout)[:, :, :W, :].reshape(N * H * W, Cout)


# --------------------------------------------------------------------------
# im2col fallback (stride != 1): plain-JAX patch extraction + matmul kernel
# --------------------------------------------------------------------------
def _im2col_3x3(x_nhwc, stride, dilation):
    """(N,H,W,C) -> (N*Ho*Wo, 9*C) patches, (kh,kw)-major / channel ordering."""
    N, H, W, C = x_nhwc.shape
    pad = dilation
    Ho = (H + 2 * pad - dilation * 2 - 1) // stride + 1
    Wo = (W + 2 * pad - dilation * 2 - 1) // stride + 1
    xp = jnp.pad(x_nhwc, ((0, 0), (pad, pad), (pad, pad), (0, 0)))
    cols = []
    for kh in range(3):
        for kw in range(3):
            h0, w0 = kh * dilation, kw * dilation
            cols.append(xp[:, h0:h0 + (Ho - 1) * stride + 1:stride,
                           w0:w0 + (Wo - 1) * stride + 1:stride, :])
    pat = jnp.concatenate(cols, axis=-1)
    return pat.reshape(N * Ho * Wo, 9 * C), Ho, Wo


# --------------------------------------------------------------------------
# Bottleneck forward (eval-mode BN folded into weights)
# --------------------------------------------------------------------------
def bottleneck_forward(x_nchw, p, ds=None, *, stride=1, dilation=1, eps=1e-5):
    """ResNet Bottleneck forward (eval-mode BN). x: NCHW f32, returns NCHW f32."""
    N, cin, H, W = x_nchw.shape
    width = p["w1"].shape[0]
    cout = p["w3"].shape[0]

    cin_p = _round_up(cin, LANE)
    wid_p = _round_up(width, LANE)
    cout_p = _round_up(cout, LANE)

    # one NCHW->NHWC pass for the whole block (not per conv)
    x_nhwc = jnp.transpose(x_nchw, (0, 2, 3, 1)).astype(jnp.float32)

    # ---- conv1 (1x1) + bn1 + relu -----------------------------------------
    w1 = p["w1"].reshape(width, cin).T                        # (cin, width)
    w1f, b1f = _fold_bn(w1, p["g1"], p["b1"], p["m1"], p["v1"], eps)
    w1f = _pad_to(w1f, (cin_p, wid_p))
    b1f = _pad_last(b1f, wid_p).reshape(1, wid_p)
    x1 = _pad_last(x_nhwc, cin_p).reshape(N * H * W, cin_p)
    y1 = _matmul_bn_act(x1, w1f, b1f, relu=True, out_dtype=jnp.bfloat16)

    # ---- conv2 (3x3, stride, dilation) + bn2 + relu ------------------------
    w2 = jnp.transpose(p["w2"], (2, 3, 1, 0))                 # (3,3,cin=width,cout)
    scale2 = p["g2"] / jnp.sqrt(p["v2"] + eps)
    w2f = w2 * scale2                                         # fold BN scale
    b2f = p["b2"] - p["m2"] * scale2
    w2f = jnp.pad(w2f, ((0, 0), (0, 0),
                        (0, wid_p - width), (0, wid_p - width)))
    w2f = w2f.reshape(9 * wid_p, wid_p)
    b2f = _pad_last(b2f, wid_p).reshape(1, wid_p)

    y1 = y1.reshape(N, H, W, wid_p)
    y2 = None
    Ho, Wo = H, W
    if stride == 1:
        y2 = _conv3x3_direct(y1, w2f, b2f, dil=dilation)      # no im2col
    if y2 is None:                                            # stride!=1 fallback
        cols, Ho, Wo = _im2col_3x3(y1, stride, dilation)
        y2 = _matmul_bn_act(cols, w2f, b2f, relu=True, out_dtype=jnp.bfloat16)

    # ---- identity / downsample path ----------------------------------------
    if ds is None:
        if stride != 1 or cin != cout:
            raise ValueError("identity residual requires stride=1 and cin==cout")
        ident = _pad_last(x_nhwc, cout_p).reshape(N * H * W, cout_p)
        ident = ident.astype(jnp.bfloat16)
    else:
        wd = ds["w"].reshape(cout, cin).T                     # (cin, cout)
        wdf, bdf = _fold_bn(wd, ds["g"], ds["b"], ds["m"], ds["v"], eps)
        wdf = _pad_to(wdf, (cin_p, cout_p))
        bdf = _pad_last(bdf, cout_p).reshape(1, cout_p)
        xs = x_nhwc[:, ::stride, ::stride, :]                 # 1x1 conv stride
        xs2 = _pad_last(xs, cin_p).reshape(N * Ho * Wo, cin_p)
        ident = _matmul_bn_act(xs2, wdf, bdf, relu=False, out_dtype=jnp.bfloat16)

    # ---- conv3 (1x1) + bn3 + residual add + relu (fused epilogue) ----------
    w3 = p["w3"].reshape(cout, width).T                       # (width, cout)
    w3f, b3f = _fold_bn(w3, p["g3"], p["b3"], p["m3"], p["v3"], eps)
    w3f = _pad_to(w3f, (wid_p, cout_p))
    b3f = _pad_last(b3f, cout_p).reshape(1, cout_p)
    y3 = _matmul_bn_act(y2, w3f, b3f, relu=True, residual=ident,
                        out_dtype=jnp.float32)                # (N*Ho*Wo, cout_p)

    out = y3.reshape(N, Ho, Wo, cout_p)[..., :cout]
    return jnp.transpose(out, (0, 3, 1, 2))                   # back to NCHW


bottleneck = jax.jit(bottleneck_forward,
                     static_argnames=("stride", "dilation", "eps"))


# --------------------------------------------------------------------------
# reference (pure XLA, f32) and test
# --------------------------------------------------------------------------
def _bn_ref(y, g, b, m, v, eps):
    return ((y - m[None, :, None, None]) /
            jnp.sqrt(v[None, :, None, None] + eps) *
            g[None, :, None, None] + b[None, :, None, None])


def _reference(x, p, ds, *, stride, dilation, eps=1e-5):
    def conv2d(x, w, s, pad, dil=1):
        return lax.conv_general_dilated(
            x, w, (s, s), ((pad, pad), (pad, pad)),
            rhs_dilation=(dil, dil),
            dimension_numbers=("NCHW", "OIHW", "NCHW"))

    out = conv2d(x, p["w1"], 1, 0)
    out = jnp.maximum(_bn_ref(out, p["g1"], p["b1"], p["m1"], p["v1"], eps), 0.)
    out = conv2d(out, p["w2"], stride, dilation, dilation)
    out = jnp.maximum(_bn_ref(out, p["g2"], p["b2"], p["m2"], p["v2"], eps), 0.)
    out = conv2d(out, p["w3"], 1, 0)
    out = _bn_ref(out, p["g3"], p["b3"], p["m3"], p["v3"], eps)
    if ds is None:
        ident = x
    else:
        ident = conv2d(x, ds["w"], stride, 0)
        ident = _bn_ref(ident, ds["g"], ds["b"], ds["m"], ds["v"], eps)
    return jnp.maximum(out + ident, 0.)


def _make_params(key, inplanes, planes, *, with_downsample=False):
    width = planes            # base_width=64, groups=1
    cout = planes * 4
    keys = jax.random.split(key, 16)

    def bn(ks, c):
        return (jax.random.uniform(ks[0], (c,), jnp.float32, 0.5, 1.5),
                jax.random.normal(ks[1], (c,), jnp.float32) * 0.1,
                jax.random.normal(ks[2], (c,), jnp.float32) * 0.1,
                jax.random.uniform(ks[3], (c,), jnp.float32, 0.5, 1.5))

    p = {}
    p["w1"] = jax.random.normal(keys[0], (width, inplanes, 1, 1),
                                jnp.float32) / np.sqrt(inplanes)
    p["g1"], p["b1"], p["m1"], p["v1"] = bn(keys[1:5], width)
    p["w2"] = jax.random.normal(keys[5], (width, width, 3, 3),
                                jnp.float32) / np.sqrt(9 * width)
    p["g2"], p["b2"], p["m2"], p["v2"] = bn(keys[6:10], width)
    p["w3"] = jax.random.normal(keys[10], (cout, width, 1, 1),
                                jnp.float32) / np.sqrt(width)
    p["g3"], p["b3"], p["m3"], p["v3"] = bn(keys[11:15], cout)

    ds = None
    if with_downsample:
        dk = jax.random.split(keys[15], 5)
        ds = {"w": jax.random.normal(dk[0], (cout, inplanes, 1, 1),
                                     jnp.float32) / np.sqrt(inplanes)}
        ds["g"], ds["b"], ds["m"], ds["v"] = bn(dk[1:5], cout)
    return p, ds


if __name__ == "__main__":
    key = jax.random.PRNGKey(0)
    kx1, kp1, kx2, kp2 = jax.random.split(key, 4)

    # Test 1: stride=1, identity residual (inplanes == planes*4) -> direct 3x3 path.
    N, inplanes, H, W = 2, 16, 16, 16
    planes = 4
    x = jax.random.normal(kx1, (N, inplanes, H, W), jnp.float32)
    p, ds = _make_params(kp1, inplanes, planes, with_downsample=False)
    out = jax.block_until_ready(bottleneck(x, p, None, stride=1, dilation=1))
    ref = _reference(x, p, None, stride=1, dilation=1)
    np.testing.assert_allclose(np.asarray(out), np.asarray(ref),
                               rtol=5e-2, atol=5e-2)

    # Test 2: stride=2 with 1x1-conv + BN downsample -> im2col fallback path.
    planes2 = 8
    x2 = jax.random.normal(kx2, (N, inplanes, H, W), jnp.float32)
    p2, ds2 = _make_params(kp2, inplanes, planes2, with_downsample=True)
    out2 = jax.block_until_ready(bottleneck(x2, p2, ds2, stride=2, dilation=1))
    ref2 = _reference(x2, p2, ds2, stride=2, dilation=1)
    np.testing.assert_allclose(np.asarray(out2), np.asarray(ref2),
                               rtol=5e-2, atol=5e-2)

    print("KERNEL_OK")
</pallas_src>

<mosaic_0001>
module attributes {stable_mosaic.version = 11 : i64} {
  func.func @_mm_bias_act_kernel(%arg0: i32, %arg1: memref<256x128xbf16, #tpu.memory_space<vmem>>, %arg2: memref<128x128xbf16, #tpu.memory_space<vmem>>, %arg3: memref<1x128xf32, #tpu.memory_space<vmem>>, %arg4: memref<256x128xbf16, #tpu.memory_space<vmem>>) attributes {dimension_semantics = [#tpu.dimension_semantics<parallel>], iteration_bounds = array<i64: 2>, scalar_prefetch = 0 : i64, scratch_operands = 0 : i64, tpu.core_type = #tpu.core_type<tc>, window_params = [{transform_indices = @transform_0, window_bounds = array<i64: 256, 128>}, {pipeline_mode = #tpu.pipeline_mode<synchronous>, transform_indices = @transform_1, window_bounds = array<i64: 128, 128>}, {pipeline_mode = #tpu.pipeline_mode<synchronous>, transform_indices = @transform_2, window_bounds = array<i64: 1, 128>}, {transform_indices = @transform_3, window_bounds = array<i64: 256, 128>}]} {
    %c0 = arith.constant 0 : index
    %c0_0 = arith.constant 0 : index
    %0 = vector.load %arg1[%c0, %c0_0] : memref<256x128xbf16, #tpu.memory_space<vmem>>, vector<256x128xbf16>
    %c0_1 = arith.constant 0 : index
    %c0_2 = arith.constant 0 : index
    %1 = vector.load %arg2[%c0_1, %c0_2] : memref<128x128xbf16, #tpu.memory_space<vmem>>, vector<128x128xbf16>
    %cst = arith.constant dense<0.000000e+00> : vector<256x128xf32>
    %2 = tpu.matmul %0, %1, %cst {dimension_numbers = #tpu.dot_dimension_numbers<[1], [0], [0], [1], [0, 0, 1, 1], [], []>} : vector<256x128xbf16>, vector<128x128xbf16>, vector<256x128xf32> -> vector<256x128xf32>
    %c0_3 = arith.constant 0 : index
    %c0_4 = arith.constant 0 : index
    %3 = vector.load %arg3[%c0_3, %c0_4] : memref<1x128xf32, #tpu.memory_space<vmem>>, vector<1x128xf32>
    %4 = vector.broadcast %3 : vector<1x128xf32> to vector<256x128xf32>
    %5 = arith.addf %2, %4 : vector<256x128xf32>
    %cst_5 = arith.constant 0.000000e+00 : f32
    %6 = vector.broadcast %cst_5 : f32 to vector<256x128xf32>
    %7 = arith.maximumf %5, %6 : vector<256x128xf32>
    %8 = arith.truncf %7 : vector<256x128xf32> to vector<256x128xbf16>
    %c0_6 = arith.constant 0 : index
    %c0_7 = arith.constant 0 : index
    %9 = vector.load %arg4[%c0_6, %c0_7] : memref<256x128xbf16, #tpu.memory_space<vmem>>, vector<256x128xbf16>
    tpu.vector_store %arg4[%c0_6, %c0_7], %8 {strides = array<i32>} : memref<256x128xbf16, #tpu.memory_space<vmem>>, vector<256x128xbf16>,
    return
  }
  func.func @transform_0(%arg0: i32) -> (i32, i32) {
    %c0_i32 = arith.constant 0 : i32
    %c0_i32_0 = arith.constant 0 : i32
    return %arg0, %c0_i32 : i32, i32
  }
  func.func @transform_1(%arg0: i32) -> (i32, i32) {
    %c0_i32 = arith.constant 0 : i32
    %c0_i32_0 = arith.constant 0 : i32
    %c0_i32_1 = arith.constant 0 : i32
    return %c0_i32, %c0_i32_0 : i32, i32
  }
  func.func @transform_2(%arg0: i32) -> (i32, i32) {
    %c0_i32 = arith.constant 0 : i32
    %c0_i32_0 = arith.constant 0 : i32
    %c0_i32_1 = arith.constant 0 : i32
    return %c0_i32, %c0_i32_0 : i32, i32
  }
  func.func @transform_3(%arg0: i32) -> (i32, i32) {
    %c0_i32 = arith.constant 0 : i32
    %c0_i32_0 = arith.constant 0 : i32
    return %arg0, %c0_i32 : i32, i32
  }
}

module attributes {stable_mosaic.version = 11 : i64} {
  func.func @_conv3x3_kernel(%arg0: i32, %arg1: memref<1x326x128xbf16, #tpu.memory_space<vmem>>, %arg2: memref<1152x128xbf16, #tpu.memory_space<vmem>>, %arg3: memref<1x128xf32, #tpu.memory_space<vmem>>, %arg4: memref<1x288x128xbf16, #tpu.memory_space<vmem>>) attributes {dimension_semantics = [#tpu.dimension_semantics<parallel>], iteration_bounds = array<i64: 2>, scalar_prefetch = 0 : i64, scratch_operands = 0 : i64, tpu.core_type = #tpu.core_type<tc>, window_params = [{transform_indices = @transform_0, window_bounds = array<i64: 1, 326, 128>}, {pipeline_mode = #tpu.pipeline_mode<synchronous>, transform_indices = @transform_1, window_bounds = array<i64: 1152, 128>}, {pipeline_mode = #tpu.pipeline_mode<synchronous>, transform_indices = @transform_2, window_bounds = array<i64: 1, 128>}, {transform_indices = @transform_3, window_bounds = array<i64: 1, 288, 128>}]} {
    %c0 = arith.constant 0 : index
    %c0_0 = arith.constant 0 : index
    %c0_1 = arith.constant 0 : index
    %0 = vector.load %arg1[%c0, %c0_0, %c0_1] : memref<1x326x128xbf16, #tpu.memory_space<vmem>>, vector<1x288x128xbf16>
    %1 = vector.shape_cast %0 : vector<1x288x128xbf16> to vector<288x128xbf16>
    %c0_2 = arith.constant 0 : index
    %c0_3 = arith.constant 0 : index
    %2 = vector.load %arg2[%c0_2, %c0_3] : memref<1152x128xbf16, #tpu.memory_space<vmem>>, vector<128x128xbf16>
    %cst = arith.constant dense<0.000000e+00> : vector<288x128xf32>
    %3 = tpu.matmul %1, %2, %cst {dimension_numbers = #tpu.dot_dimension_numbers<[1], [0], [0], [1], [0, 0, 1, 1], [], []>} : vector<288x128xbf16>, vector<128x128xbf16>, vector<288x128xf32> -> vector<288x128xf32>
    %c0_4 = arith.constant 0 : index
    %c1 = arith.constant 1 : index
    %c0_5 = arith.constant 0 : index
    %4 = vector.load %arg1[%c0_4, %c1, %c0_5] : memref<1x326x128xbf16, #tpu.memory_space<vmem>>, vector<1x288x128xbf16>
    %5 = vector.shape_cast %4 : vector<1x288x128xbf16> to vector<288x128xbf16>
    %c128 = arith.constant 128 : index
    %c0_6 = arith.constant 0 : index
    %6 = vector.load %arg2[%c128, %c0_6] : memref<1152x128xbf16, #tpu.memory_space<vmem>>, vector<128x128xbf16>
    %cst_7 = arith.constant dense<0.000000e+00> : vector<288x128xf32>
    %7 = tpu.matmul %5, %6, %cst_7 {dimension_numbers = #tpu.dot_dimension_numbers<[1], [0], [0], [1], [0, 0, 1, 1], [], []>} : vector<288x128xbf16>, vector<128x128xbf16>, vector<288x128xf32> -> vector<288x128xf32>
    %8 = arith.addf %3, %7 : vector<288x128xf32>
    %c0_8 = arith.constant 0 : index
    %c2 = arith.constant 2 : index
    %c0_9 = arith.constant 0 : index
    %9 = vector.load %arg1[%c0_8, %c2, %c0_9] : memref<1x326x128xbf16, #tpu.memory_space<vmem>>, vector<1x288x128xbf16>
    %10 = vector.shape_cast %9 : vector<1x288x128xbf16> to vector<288x128xbf16>
    %c256 = arith.constant 256 : index
    %c0_10 = arith.constant 0 : index
    %11 = vector.load %arg2[%c256, %c0_10] : memref<1152x128xbf16, #tpu.memory_space<vmem>>, vector<128x128xbf16>
    %cst_11 = arith.constant dense<0.000000e+00> : vector<288x128xf32>
    %12 = tpu.matmul %10, %11, %cst_11 {dimension_numbers = #tpu.dot_dimension_numbers<[1], [0], [0], [1], [0, 0, 1, 1], [], []>} : vector<288x128xbf16>, vector<128x128xbf16>, vector<288x128xf32> -> vector<288x128xf32>
    %13 = arith.addf %8, %12 : vector<288x128xf32>
    %c0_12 = arith.constant 0 : index
    %c18 = arith.constant 18 : index
    %c0_13 = arith.constant 0 : index
    %14 = vector.load %arg1[%c0_12, %c18, %c0_13] : memref<1x326x128xbf16, #tpu.memory_space<vmem>>, vector<1x288x128xbf16>
    %15 = vector.shape_cast %14 : vector<1x288x128xbf16> to vector<288x128xbf16>
    %c384 = arith.constant 384 : index
    %c0_14 = arith.constant 0 : index
    %16 = vector.load %arg2[%c384, %c0_14] : memref<1152x128xbf16, #tpu.memory_space<vmem>>, vector<128x128xbf16>
    %cst_15 = arith.constant dense<0.000000e+00> : vector<288x128xf32>
    %17 = tpu.matmul %15, %16, %cst_15 {dimension_numbers = #tpu.dot_dimension_numbers<[1], [0], [0], [1], [0, 0, 1, 1], [], []>} : vector<288x128xbf16>, vector<128x128xbf16>, vector<288x128xf32> -> vector<288x128xf32>
    %18 = arith.addf %13, %17 : vector<288x128xf32>
    %c0_16 = arith.constant 0 : index
    %c19 = arith.constant 19 : index
    %c0_17 = arith.constant 0 : index
    %19 = vector.load %arg1[%c0_16, %c19, %c0_17] : memref<1x326x128xbf16, #tpu.memory_space<vmem>>, vector<1x288x128xbf16>
    %20 = vector.shape_cast %19 : vector<1x288x128xbf16> to vector<288x128xbf16>
    %c512 = arith.constant 512 : index
    %c0_18 = arith.constant 0 : index
    %21 = vector.load %arg2[%c512, %c0_18] : memref<1152x128xbf16, #tpu.memory_space<vmem>>, vector<128x128xbf16>
    %cst_19 = arith.constant dense<0.000000e+00> : vector<288x128xf32>
    %22 = tpu.matmul %20, %21, %cst_19 {dimension_numbers = #tpu.dot_dimension_numbers<[1], [0], [0], [1], [0, 0, 1, 1], [], []>} : vector<288x128xbf16>, vector<128x128xbf16>, vector<288x128xf32> -> vector<288x128xf32>
    %23 = arith.addf %18, %22 : vector<288x128xf32>
    %c0_20 = arith.constant 0 : index
    %c20 = arith.constant 20 : index
    %c0_21 = arith.constant 0 : index
    %24 = vector.load %arg1[%c0_20, %c20, %c0_21] : memref<1x326x128xbf16, #tpu.memory_space<vmem>>, vector<1x288x128xbf16>
    %25 = vector.shape_cast %24 : vector<1x288x128xbf16> to vector<288x128xbf16>
    %c640 = arith.constant 640 : index
    %c0_22 = arith.constant 0 : index
    %26 = vector.load %arg2[%c640, %c0_22] : memref<1152x128xbf16, #tpu.memory_space<vmem>>, vector<128x128xbf16>
    %cst_23 = arith.constant dense<0.000000e+00> : vector<288x128xf32>
    %27 = tpu.matmul %25, %26, %cst_23 {dimension_numbers = #tpu.dot_dimension_numbers<[1], [0], [0], [1], [0, 0, 1, 1], [], []>} : vector<288x128xbf16>, vector<128x128xbf16>, vector<288x128xf32> -> vector<288x128xf32>
    %28 = arith.addf %23, %27 : vector<288x128xf32>
    %c0_24 = arith.constant 0 : index
    %c36 = arith.constant 36 : index
    %c0_25 = arith.constant 0 : index
    %29 = vector.load %arg1[%c0_24, %c36, %c0_25] : memref<1x326x128xbf16, #tpu.memory_space<vmem>>, vector<1x288x128xbf16>
    %30 = vector.shape_cast %29 : vector<1x288x128xbf16> to vector<288x128xbf16>
    %c768 = arith.constant 768 : index
    %c0_26 = arith.constant 0 : index
    %31 = vector.load %arg2[%c768, %c0_26] : memref<1152x128xbf16, #tpu.memory_space<vmem>>, vector<128x128xbf16>
    %cst_27 = arith.constant dense<0.000000e+00> : vector<288x128xf32>
    %32 = tpu.matmul %30, %31, %cst_27 {dimension_numbers = #tpu.dot_dimension_numbers<[1], [0], [0], [1], [0, 0, 1, 1], [], []>} : vector<288x128xbf16>, vector<128x128xbf16>, vector<288x128xf32> -> vector<288x128xf32>
    %33 = arith.addf %28, %32 : vector<288x128xf32>
    %c0_28 = arith.constant 0 : index
    %c37 = arith.constant 37 : index
    %c0_29 = arith.constant 0 : index
    %34 = vector.load %arg1[%c0_28, %c37, %c0_29] : memref<1x326x128xbf16, #tpu.memory_space<vmem>>, vector<1x288x128xbf16>
    %35 = vector.shape_cast %34 : vector<1x288x128xbf16> to vector<288x128xbf16>
    %c896 = arith.constant 896 : index
    %c0_30 = arith.constant 0 : index
    %36 = vector.load %arg2[%c896, %c0_30] : memref<1152x128xbf16, #tpu.memory_space<vmem>>, vector<128x128xbf16>
    %cst_31 = arith.constant dense<0.000000e+00> : vector<288x128xf32>
    %37 = tpu.matmul %35, %36, %cst_31 {dimension_numbers = #tpu.dot_dimension_numbers<[1], [0], [0], [1], [0, 0, 1, 1], [], []>} : vector<288x128xbf16>, vector<128x128xbf16>, vector<288x128xf32> -> vector<288x128xf32>
    %38 = arith.addf %33, %37 : vector<288x128xf32>
    %c0_32 = arith.constant 0 : index
    %c38 = arith.constant 38 : index
    %c0_33 = arith.constant 0 : index
    %39 = vector.load %arg1[%c0_32, %c38, %c0_33] : memref<1x326x128xbf16, #tpu.memory_space<vmem>>, vector<1x288x128xbf16>
    %40 = vector.shape_cast %39 : vector<1x288x128xbf16> to vector<288x128xbf16>
    %c1024 = arith.constant 1024 : index
    %c0_34 = arith.constant 0 : index
    %41 = vector.load %arg2[%c1024, %c0_34] : memref<1152x128xbf16, #tpu.memory_space<vmem>>, vector<128x128xbf16>
    %cst_35 = arith.constant dense<0.000000e+00> : vector<288x128xf32>
    %42 = tpu.matmul %40, %41, %cst_35 {dimension_numbers = #tpu.dot_dimension_numbers<[1], [0], [0], [1], [0, 0, 1, 1], [], []>} : vector<288x128xbf16>, vector<128x128xbf16>, vector<288x128xf32> -> vector<288x128xf32>
    %43 = arith.addf %38, %42 : vector<288x128xf32>
    %c0_36 = arith.constant 0 : index
    %c0_37 = arith.constant 0 : index
    %44 = vector.load %arg3[%c0_36, %c0_37] : memref<1x128xf32, #tpu.memory_space<vmem>>, vector<1x128xf32>
    %45 = vector.broadcast %44 : vector<1x128xf32> to vector<288x128xf32>
    %46 = arith.addf %43, %45 : vector<288x128xf32>
    %cst_38 = arith.constant 0.000000e+00 : f32
    %47 = vector.broadcast %cst_38 : f32 to vector<288x128xf32>
    %48 = arith.maximumf %46, %47 : vector<288x128xf32>
    %49 = arith.truncf %48 : vector<288x128xf32> to vector<288x128xbf16>
    %c0_39 = arith.constant 0 : index
    %c0_40 = arith.constant 0 : index
    %c0_41 = arith.constant 0 : index
    %50 = vector.load %arg4[%c0_39, %c0_40, %c0_41] : memref<1x288x128xbf16, #tpu.memory_space<vmem>>, vector<1x288x128xbf16>
    %51 = vector.shape_cast %50 : vector<1x288x128xbf16> to vector<288x128xbf16>
    %52 = vector.shape_cast %49 : vector<288x128xbf16> to vector<1x288x128xbf16>
    tpu.vector_store %arg4[%c0_39, %c0_40, %c0_41], %52 {strides = array<i32>} : memref<1x288x128xbf16, #tpu.memory_space<vmem>>, vector<1x288x128xbf16>,
    return
  }
  func.func @transform_0(%arg0: i32) -> (i32, i32, i32) {
    %c0_i32 = arith.constant 0 : i32
    %c0_i32_0 = arith.constant 0 : i32
    %c0_i32_1 = arith.constant 0 : i32
    return %arg0, %c0_i32, %c0_i32_0 : i32, i32, i32
  }
  func.func @transform_1(%arg0: i32) -> (i32, i32) {
    %c0_i32 = arith.constant 0 : i32
    %c0_i32_0 = arith.constant 0 : i32
    %c0_i32_1 = arith.constant 0 : i32
    return %c0_i32, %c0_i32_0 : i32, i32
  }
  func.func @transform_2(%arg0: i32) -> (i32, i32) {
    %c0_i32 = arith.constant 0 : i32
    %c0_i32_0 = arith.constant 0 : i32
    %c0_i32_1 = arith.constant 0 : i32
    return %c0_i32, %c0_i32_0 : i32, i32
  }
  func.func @transform_3(%arg0: i32) -> (i32, i32, i32) {
    %c0_i32 = arith.constant 0 : i32
    %c0_i32_0 = arith.constant 0 : i32
    %c0_i32_1 = arith.constant 0 : i32
    return %arg0, %c0_i32, %c0_i32_0 : i32, i32, i32
  }
}

module attributes {stable_mosaic.version = 11 : i64} {
  func.func @_mm_bias_act_kernel(%arg0: i32, %arg1: memref<256x128xbf16, #tpu.memory_space<vmem>>, %arg2: memref<128x128xbf16, #tpu.memory_space<vmem>>, %arg3: memref<1x128xf32, #tpu.memory_space<vmem>>, %arg4: memref<256x128xbf16, #tpu.memory_space<vmem>>, %arg5: memref<256x128xf32, #tpu.memory_space<vmem>>) attributes {dimension_semantics = [#tpu.dimension_semantics<parallel>], iteration_bounds = array<i64: 2>, scalar_prefetch = 0 : i64, scratch_operands = 0 : i64, tpu.core_type = #tpu.core_type<tc>, window_params = [{transform_indices = @transform_0, window_bounds = array<i64: 256, 128>}, {pipeline_mode = #tpu.pipeline_mode<synchronous>, transform_indices = @transform_1, window_bounds = array<i64: 128, 128>}, {pipeline_mode = #tpu.pipeline_mode<synchronous>, transform_indices = @transform_2, window_bounds = array<i64: 1, 128>}, {transform_indices = @transform_3, window_bounds = array<i64: 256, 128>}, {transform_indices = @transform_4, window_bounds = array<i64: 256, 128>}]} {
    %c0 = arith.constant 0 : index
    %c0_0 = arith.constant 0 : index
    %0 = vector.load %arg1[%c0, %c0_0] : memref<256x128xbf16, #tpu.memory_space<vmem>>, vector<256x128xbf16>
    %c0_1 = arith.constant 0 : index
    %c0_2 = arith.constant 0 : index
    %1 = vector.load %arg2[%c0_1, %c0_2] : memref<128x128xbf16, #tpu.memory_space<vmem>>, vector<128x128xbf16>
    %cst = arith.constant dense<0.000000e+00> : vector<256x128xf32>
    %2 = tpu.matmul %0, %1, %cst {dimension_numbers = #tpu.dot_dimension_numbers<[1], [0], [0], [1], [0, 0, 1, 1], [], []>} : vector<256x128xbf16>, vector<128x128xbf16>, vector<256x128xf32> -> vector<256x128xf32>
    %c0_3 = arith.constant 0 : index
    %c0_4 = arith.constant 0 : index
    %3 = vector.load %arg3[%c0_3, %c0_4] : memref<1x128xf32, #tpu.memory_space<vmem>>, vector<1x128xf32>
    %4 = vector.broadcast %3 : vector<1x128xf32> to vector<256x128xf32>
    %5 = arith.addf %2, %4 : vector<256x128xf32>
    %c0_5 = arith.constant 0 : index
    %c0_6 = arith.constant 0 : index
    %6 = vector.load %arg4[%c0_5, %c0_6] : memref<256x128xbf16, #tpu.memory_space<vmem>>, vector<256x128xbf16>
    %7 = arith.extf %6 : vector<256x128xbf16> to vector<256x128xf32>
    %8 = arith.addf %5, %7 : vector<256x128xf32>
    %cst_7 = arith.constant 0.000000e+00 : f32
    %9 = vector.broadcast %cst_7 : f32 to vector<256x128xf32>
    %10 = arith.maximumf %8, %9 : vector<256x128xf32>
    %c0_8 = arith.constant 0 : index
    %c0_9 = arith.constant 0 : index
    %11 = vector.load %arg5[%c0_8, %c0_9] : memref<256x128xf32, #tpu.memory_space<vmem>>, vector<256x128xf32>
    tpu.vector_store %arg5[%c0_8, %c0_9], %10 {strides = array<i32>} : memref<256x128xf32, #tpu.memory_space<vmem>>, vector<256x128xf32>,
    return
  }
  func.func @transform_0(%arg0: i32) -> (i32, i32) {
    %c0_i32 = arith.constant 0 : i32
    %c0_i32_0 = arith.constant 0 : i32
    return %arg0, %c0_i32 : i32, i32
  }
  func.func @transform_1(%arg0: i32) -> (i32, i32) {
    %c0_i32 = arith.constant 0 : i32
    %c0_i32_0 = arith.constant 0 : i32
    %c0_i32_1 = arith.constant 0 : i32
    return %c0_i32, %c0_i32_0 : i32, i32
  }
  func.func @transform_2(%arg0: i32) -> (i32, i32) {
    %c0_i32 = arith.constant 0 : i32
    %c0_i32_0 = arith.constant 0 : i32
    %c0_i32_1 = arith.constant 0 : i32
    return %c0_i32, %c0_i32_0 : i32, i32
  }
  func.func @transform_3(%arg0: i32) -> (i32, i32) {
    %c0_i32 = arith.constant 0 : i32
    %c0_i32_0 = arith.constant 0 : i32
    return %arg0, %c0_i32 : i32, i32
  }
  func.func @transform_4(%arg0: i32) -> (i32, i32) {
    %c0_i32 = arith.constant 0 : i32
    %c0_i32_0 = arith.constant 0 : i32
    return %arg0, %c0_i32 : i32, i32
  }
}

</mosaic_0001>

<llo_original>
// kernel: bottleneck_forward.3
$region0: #{bottleneck_forward.3}
  #allocation0 [shape = 'u32[]', space=smem, size = 0x4, offset = 0x4, fixed_abs, tag = 'smem constant byte address 0x4 - core index']
  #allocation1 [shape = 'u32[144,128]{1,0:T(1,128)}', space=vmem, size = 0x12000, scoped, tag = 'internal scratch']
  %s0 = inlined_call_operand.vmem [shape: bf16[512,128], index: 0, kind: input, shape index: {}]
  %s1 = inlined_call_operand.vmem [shape: bf16[128,128], index: 1, kind: input, shape index: {}]
  %s2 = inlined_call_operand.vmem [shape: f32[1,128], index: 2, kind: input, shape index: {}]
  %s3 = inlined_call_operand.vmem [shape: bf16[512,128], index: 3, kind: output, shape index: {}]
  %s4 = sld [smem:[#allocation0]]
  $region45: #{bottleneck_forward.3} parent=0
    _
  %s6 = ssub.s32 1, %s4
  %s7 = scalar_select 0, %s6, %s4
  loop: start=0, step=1, limit=4
  $region2: #{bottleneck_forward.3} parent=0 // loop_pre_header
    _
  $region3: #{bottleneck_forward.3} parent=0 // loop_header
    %s9 = sphi 0, %s13
    %p10 = scmp.ge.s32.totalorder %s9, 4
    %s19 = sphi 0, %s21
    %s22 = sphi 0, %s19
    %s23 = sphi 0, %s22
    %s39 = sphi 0, %s23
    %s43 = sphi 0, %s43
    %s45 = sphi 0, %s43
    %s46 = sphi 0, %s45
    %s60 = sphi 0, %s46
    %s64 = sphi 0, %s64
    %s66 = sphi 0, %s64
    %s67 = sphi 0, %s66
    %s81 = sphi 0, %s67
    %s87 = sphi 0, %s89
    %s90 = sphi 0, %s87
    %s91 = sphi 0, %s90
    %s107 = sphi 0, %s91
  $region4: #{bottleneck_forward.3} parent=0 // loop_header_branch
    %12 = sbr.rel (%p10) target = $region8
  $region5: #{bottleneck_forward.3} parent=0 // loop_body
    %s14 = ssub.s32 %s9, 1
    %s15 = ssub.s32 %s9, 2
    %s16 = sadd.s32 %s9, 1
    %s17 = ssub.s32 %s9, %s16
    %p18 = scmp.eq.s32.totalorder %s17, 0
    %s20 = sadd.s32 %s19, 1
    %s21 = scalar_select %p18, %s19, %s20
    %p24 = pneg %p18
    %p25 = scmp.eq.s32.totalorder %s9, 1
    %p26 = por %p24, %p25
    %p27 = scmp.ne.s32.totalorder %s19, %s22
    %p28 = scmp.eq.s32.totalorder %s9, 0
    %p29 = por %p27, %p28
    %p30 = scmp.ne.s32.totalorder %s19, %s22
    %p31 = scmp.eq.s32.totalorder %s14, 1
    %p32 = por %p30, %p31
    %p33 = scmp.ne.s32.totalorder %s22, %s23
    %p34 = scmp.eq.s32.totalorder %s14, 0
    %p35 = por %p33, %p34
    %p36 = scmp.ne.s32.totalorder %s22, %s23
    %p37 = scmp.eq.s32.totalorder %s15, 1
    %p38 = por %p36, %p37
    %p40 = scmp.ne.s32.totalorder %s23, %s39
    %p41 = scmp.eq.s32.totalorder %s15, 0
    %p42 = por %p40, %p41
    %s44 = sadd.s32 %s43, 1
    %p47 = scmp.eq.s32.totalorder %s9, 1
    %p48 = scmp.ne.s32.totalorder %s43, %s45
    %p49 = scmp.eq.s32.totalorder %s9, 0
    %p50 = por %p48, %p49
    %p51 = scmp.ne.s32.totalorder %s43, %s45
    %p52 = scmp.eq.s32.totalorder %s14, 1
    %p53 = por %p51, %p52
    %p54 = scmp.ne.s32.totalorder %s45, %s46
    %p55 = scmp.eq.s32.totalorder %s14, 0
    %p56 = por %p54, %p55
    %p57 = scmp.ne.s32.totalorder %s45, %s46
    %p58 = scmp.eq.s32.totalorder %s15, 1
    %p59 = por %p57, %p58
    %p61 = scmp.ne.s32.totalorder %s46, %s60
    %p62 = scmp.eq.s32.totalorder %s15, 0
    %p63 = por %p61, %p62
    %s65 = sadd.s32 %s64, 1
    %p68 = scmp.eq.s32.totalorder %s9, 1
    %p69 = scmp.ne.s32.totalorder %s64, %s66
    %p70 = scmp.eq.s32.totalorder %s9, 0
    %p71 = por %p69, %p70
    %p72 = scmp.ne.s32.totalorder %s64, %s66
    %p73 = scmp.eq.s32.totalorder %s14, 1
    %p74 = por %p72, %p73
    %p75 = scmp.ne.s32.totalorder %s66, %s67
    %p76 = scmp.eq.s32.totalorder %s14, 0
    %p77 = por %p75, %p76
    %p78 = scmp.ne.s32.totalorder %s66, %s67
    %p79 = scmp.eq.s32.totalorder %s15, 1
    %p80 = por %p78, %p79
    %p82 = scmp.ne.s32.totalorder %s67, %s81
    %p83 = scmp.eq.s32.totalorder %s15, 0
    %p84 = por %p82, %p83
    %s85 = ssub.s32 %s9, %s16
    %p86 = scmp.eq.s32.totalorder %s85, 0
    %s88 = sadd.s32 %s87, 1
    %s89 = scalar_select %p86, %s87, %s88
    %p92 = pneg %p86
    %p93 = scmp.eq.s32.totalorder %s9, 1
    %p94 = por %p92, %p93
    %p95 = scmp.ne.s32.totalorder %s87, %s90
    %p96 = scmp.eq.s32.totalorder %s9, 0
    %p97 = por %p95, %p96
    %p98 = scmp.ne.s32.totalorder %s87, %s90
    %p99 = scmp.eq.s32.totalorder %s14, 1
    %p100 = por %p98, %p99
    %p101 = scmp.ne.s32.totalorder %s90, %s91
    %p102 = scmp.eq.s32.totalorder %s14, 0
    %p103 = por %p101, %p102
    %p104 = scmp.ne.s32.totalorder %s90, %s91
    %p105 = scmp.eq.s32.totalorder %s15, 1
    %p106 = por %p104, %p105
    %p108 = scmp.ne.s32.totalorder %s91, %s107
    %p109 = scmp.eq.s32.totalorder %s15, 0
    %p110 = por %p108, %p109
    %p111 = scmp.le.s32.totalorder 1, %s9
    %p112 = scmp.lt.s32.totalorder %s9, 3
    %p113 = pnand %p111, %p112
    %p114 = pneg %p113
    // Predicated region
    $region9: #{bottleneck_forward.3} parent=5 // pred_check
      _
    $region10: #{bottleneck_forward.3} parent=5 // pred_check_branch
      %116 = sbr.rel (%p113) target = $region12
    $region11: #{bottleneck_forward.3} parent=5 // pred_region
      %s117 = ssub.s32 %s9, 1
      // Predicated region
      $region13: #{bottleneck_forward.3} parent=11 // pred_check
        %p118 = pneg %p56
      $region14: #{bottleneck_forward.3} parent=11 // pred_check_branch
        %120 = sbr.rel (%p118) target = $region16
      $region15: #{bottleneck_forward.3} parent=11 // pred_region
        _
      $region16: #{bottleneck_forward.3} parent=11 // pred_fallthru
        _
      // Predicated region
      $region17: #{bottleneck_forward.3} parent=11 // pred_check
        %p121 = pneg %p77
      $region18: #{bottleneck_forward.3} parent=11 // pred_check_branch
        %123 = sbr.rel (%p121) target = $region20
      $region19: #{bottleneck_forward.3} parent=11 // pred_region
        _
      $region20: #{bottleneck_forward.3} parent=11 // pred_fallthru
        _
    $region12: #{bottleneck_forward.3} parent=5 // pred_fallthru
      _
    %p124 = scmp.lt.s32.totalorder %s9, 2
    // Predicated region
    $region21: #{bottleneck_forward.3} parent=5 // pred_check
      %p125 = pneg %p124
    $region22: #{bottleneck_forward.3} parent=5 // pred_check_branch
      %127 = sbr.rel (%p125) target = $region24
    $region23: #{bottleneck_forward.3} parent=5 // pred_region
      // Predicated region
      $region25: #{bottleneck_forward.3} parent=23 // pred_check
        %p128 = pneg %p29
      $region26: #{bottleneck_forward.3} parent=23 // pred_check_branch
        %130 = sbr.rel (%p128) target = $region28
      $region27: #{bottleneck_forward.3} parent=23 // pred_region
        %s131 = smul.u32 32, %s9
        %p132 = scmp.lt.s32.totalorder %s131, 63
        %s133 = scalar_select %p132, %s131, 63
        %s134 = smul.addr %s133, 4
        %s135 = scalar_lea.vmem %s0, %s134
        %s136 = smul.u32 32, %s9
      $region28: #{bottleneck_forward.3} parent=23 // pred_fallthru
        _
    $region24: #{bottleneck_forward.3} parent=5 // pred_fallthru
      _
    %p137 = scmp.le.s32.totalorder 1, %s9
    %p138 = scmp.lt.s32.totalorder %s9, 3
    %p139 = pnand %p137, %p138
    %p140 = pneg %p139
    // Predicated region
    $region29: #{bottleneck_forward.3} parent=5 // pred_check
      _
    $region30: #{bottleneck_forward.3} parent=5 // pred_check_branch
      %142 = sbr.rel (%p139) target = $region32
    $region31: #{bottleneck_forward.3} parent=5 // pred_region
      %s143 = ssub.s32 %s9, 1
      %s144 = smul.u32 32, %s14
      %p145 = scmp.lt.s32.totalorder %s144, 63
      %s146 = scalar_select %p145, %s144, 63
      %s147 = smul.addr %s146, 4
      %s148 = scalar_lea.vmem %s0, %s147
      %p149 = pneg %p35
      %p150 = pneg %p32
      %p151 = pneg %p56
      %p152 = pneg %p53
      %p153 = pneg %p77
      %p154 = pneg %p74
      %p155 = pneg %p103
      %p156 = pneg %p100
      %s157 = smul.u32 32, %s14
      %p158 = scmp.lt.s32.totalorder %s157, 63
      %s159 = scalar_select %p158, %s157, 63
      %s160 = smul.addr %s159, 4
      %s161 = scalar_lea.vmem %s3, %s160
      %s162 = smul.u32 32, %s14
      %p163 = scmp.lt.s32.totalorder %s162, 63
      %s164 = scalar_select %p163, %s162, 63
      %s165 = smul.addr %s164, 4
      %s166 = scalar_lea.vmem %s0, %s165
      %s167 = smul.u32 32, %s14
      %s168 = smul.u32 32, %s14
      %p169 = scmp.lt.s32.totalorder %s168, 63
      %s170 = scalar_select %p169, %s168, 63
      %s171 = smul.addr %s170, 4
      %s172 = scalar_lea.vmem %s3, %s171
      %s173 = smul.u32 32, %s14
      %v175 = vld [vmem:[%s166] sm:$0xf]
      %v176 = vld [vmem:[%s166 + $0x4] sm:$0xf]
      %v177 = vld [vmem:[%s166 + $0x8] sm:$0xf]
      %v178 = vld [vmem:[%s166 + $0xc] sm:$0xf]
      %v179 = vld [vmem:[%s166 + $0x10] sm:$0xf]
      %v180 = vld [vmem:[%s166 + $0x14] sm:$0xf]
      %v181 = vld [vmem:[%s166 + $0x18] sm:$0xf]
      %v182 = vld [vmem:[%s166 + $0x1c] sm:$0xf]
      %v183 = vld [vmem:[%s166 + $0x20] sm:$0xf]
      %v184 = vld [vmem:[%s166 + $0x24] sm:$0xf]
      %v185 = vld [vmem:[%s166 + $0x28] sm:$0xf]
      %v186 = vld [vmem:[%s166 + $0x2c] sm:$0xf]
      %v187 = vld [vmem:[%s166 + $0x30] sm:$0xf]
      %v188 = vld [vmem:[%s166 + $0x34] sm:$0xf]
      %v189 = vld [vmem:[%s166 + $0x38] sm:$0xf]
      %v190 = vld [vmem:[%s166 + $0x3c] sm:$0xf]
      %v191 = vld [vmem:[%s166 + $0x40] sm:$0xf]
      %v192 = vld [vmem:[%s166 + $0x44] sm:$0xf]
      %v193 = vld [vmem:[%s166 + $0x48] sm:$0xf]
      %v194 = vld [vmem:[%s166 + $0x4c] sm:$0xf]
      %v195 = vld [vmem:[%s166 + $0x50] sm:$0xf]
      %v196 = vld [vmem:[%s166 + $0x54] sm:$0xf]
      %v197 = vld [vmem:[%s166 + $0x58] sm:$0xf]
      %v198 = vld [vmem:[%s166 + $0x5c] sm:$0xf]
      %v199 = vld [vmem:[%s166 + $0x60] sm:$0xf]
      %v200 = vld [vmem:[%s166 + $0x64] sm:$0xf]
      %v201 = vld [vmem:[%s166 + $0x68] sm:$0xf]
      %v202 = vld [vmem:[%s166 + $0x6c] sm:$0xf]
      %v203 = vld [vmem:[%s166 + $0x70] sm:$0xf]
      %v204 = vld [vmem:[%s166 + $0x74] sm:$0xf]
      %v205 = vld [vmem:[%s166 + $0x78] sm:$0xf]
      %v206 = vld [vmem:[%s166 + $0x7c] sm:$0xf]
      %v207 = vld [vmem:[%s1] sm:$0xf]
      %v208 = vld [vmem:[%s1 + $0x4] sm:$0xf]
      %v209 = vld [vmem:[%s1 + $0x8] sm:$0xf]
      %v210 = vld [vmem:[%s1 + $0xc] sm:$0xf]
      %v211 = vld [vmem:[%s1 + $0x10] sm:$0xf]
      %v212 = vld [vmem:[%s1 + $0x14] sm:$0xf]
      %v213 = vld [vmem:[%s1 + $0x18] sm:$0xf]
      %v214 = vld [vmem:[%s1 + $0x1c] sm:$0xf]
      %v215 = vld [vmem:[%s1 + $0x20] sm:$0xf]
      %v216 = vld [vmem:[%s1 + $0x24] sm:$0xf]
      %v217 = vld [vmem:[%s1 + $0x28] sm:$0xf]
      %v218 = vld [vmem:[%s1 + $0x2c] sm:$0xf]
      %v219 = vld [vmem:[%s1 + $0x30] sm:$0xf]
      %v220 = vld [vmem:[%s1 + $0x34] sm:$0xf]
      %v221 = vld [vmem:[%s1 + $0x38] sm:$0xf]
      %v222 = vld [vmem:[%s1 + $0x3c] sm:$0xf]
      %v223 = vld [vmem:[%s2] sm:$0x1]
      %v225 = vlaneseq
      %v226 = vshrl.u32 %v225, 7
      %v227 = vsub.s32 0, %v226
      %v228 = vrot.slane %v223, %v227
      %v262 = vunpack.c.l.b16 %v175
      %v263 = vunpack.c.l.b16 %v176
      %v264 = vunpack.c.l.b16 %v177
      %v265 = vunpack.c.l.b16 %v178
      %v266 = vunpack.c.l.b16 %v179
      %v267 = vunpack.c.l.b16 %v180
      %v268 = vunpack.c.l.b16 %v181
      %v269 = vunpack.c.l.b16 %v182
      %v270 = vunpack.c.l.b16 %v183
      %v271 = vunpack.c.l.b16 %v184
      %v272 = vunpack.c.l.b16 %v185
      %v273 = vunpack.c.l.b16 %v186
      %v274 = vunpack.c.l.b16 %v187
      %v275 = vunpack.c.l.b16 %v188
      %v276 = vunpack.c.l.b16 %v189
      %v277 = vunpack.c.l.b16 %v190
      %v278 = vunpack.c.l.b16 %v191
      %v279 = vunpack.c.l.b16 %v192
      %v280 = vunpack.c.l.b16 %v193
      %v281 = vunpack.c.l.b16 %v194
      %v282 = vunpack.c.l.b16 %v195
      %v283 = vunpack.c.l.b16 %v196
      %v284 = vunpack.c.l.b16 %v197
      %v285 = vunpack.c.l.b16 %v198
      %v286 = vunpack.c.l.b16 %v199
      %v287 = vunpack.c.l.b16 %v200
      %v288 = vunpack.c.l.b16 %v201
      %v289 = vunpack.c.l.b16 %v202
      %v290 = vunpack.c.l.b16 %v203
      %v291 = vunpack.c.l.b16 %v204
      %v292 = vunpack.c.l.b16 %v205
      %v293 = vunpack.c.l.b16 %v206
      %v294 = vpack.c.b16 %v263, %v262
      %v295 = vpack.c.b16 %v265, %v264
      %v296 = vpack.c.b16 %v267, %v266
      %v297 = vpack.c.b16 %v269, %v268
      %v298 = vpack.c.b16 %v271, %v270
      %v299 = vpack.c.b16 %v273, %v272
      %v300 = vpack.c.b16 %v275, %v274
      %v301 = vpack.c.b16 %v277, %v276
      %v302 = vpack.c.b16 %v279, %v278
      %v303 = vpack.c.b16 %v281, %v280
      %v304 = vpack.c.b16 %v283, %v282
      %v305 = vpack.c.b16 %v285, %v284
      %v306 = vpack.c.b16 %v287, %v286
      %v307 = vpack.c.b16 %v289, %v288
      %v308 = vpack.c.b16 %v291, %v290
      %v309 = vpack.c.b16 %v293, %v292
      %v342 = vunpack.c.l.b16 %v207
      %v343 = vunpack.c.l.b16 %v208
      %v344 = vunpack.c.l.b16 %v209
      %v345 = vunpack.c.l.b16 %v210
      %v346 = vunpack.c.l.b16 %v211
      %v347 = vunpack.c.l.b16 %v212
      %v348 = vunpack.c.l.b16 %v213
      %v349 = vunpack.c.l.b16 %v214
      %v350 = vunpack.c.l.b16 %v215
      %v351 = vunpack.c.l.b16 %v216
      %v352 = vunpack.c.l.b16 %v217
      %v353 = vunpack.c.l.b16 %v218
      %v354 = vunpack.c.l.b16 %v219
      %v355 = vunpack.c.l.b16 %v220
      %v356 = vunpack.c.l.b16 %v221
      %v357 = vunpack.c.l.b16 %v222
      %v358 = vpack.c.b16 %v343, %v342
      %v359 = vpack.c.b16 %v345, %v344
      %v360 = vpack.c.b16 %v347, %v346
      %v361 = vpack.c.b16 %v349, %v348
      %v362 = vpack.c.b16 %v351, %v350
      %v363 = vpack.c.b16 %v353, %v352
      %v364 = vpack.c.b16 %v355, %v354
      %v365 = vpack.c.b16 %v357, %v356
      %374 = vmatprep.subr.bf16.mxu0 0
      %375 = vmatpush1.bf16.msra.mxu0 %v358
      %376 = vmatprep.subr.bf16.mxu0 0
      %377 = vmatpush1.bf16.msra.mxu0 %v359
      %378 = vmatprep.subr.bf16.mxu0 0
      %379 = vmatpush1.bf16.msra.mxu0 %v360
      %380 = vmatprep.subr.bf16.mxu0 0
      %381 = vmatpush1.bf16.msra.mxu0 %v361
      %382 = vmatprep.subr.bf16.mxu0 0
      %383 = vmatpush1.bf16.msra.mxu0 %v362
      %384 = vmatprep.subr.bf16.mxu0 0
      %385 = vmatpush1.bf16.msra.mxu0 %v363
      %386 = vmatprep.subr.bf16.mxu0 0
      %387 = vmatpush1.bf16.msra.mxu0 %v364
      %388 = vmatprep.subr.bf16.mxu0 0
      %389 = vmatpush1.bf16.msra.mxu0 %v365
      %390 = vmatprep.subr.bf16.mxu0 0
      %391 = vmatpush1.bf16.msra.mxu0 0
      %392 = vmatprep.subr.bf16.mxu0 0
      %393 = vmatpush1.bf16.msra.mxu0 0
      %394 = vmatprep.subr.bf16.mxu0 0
      %395 = vmatpush1.bf16.msra.mxu0 0
      %396 = vmatprep.subr.bf16.mxu0 0
      %397 = vmatpush1.bf16.msra.mxu0 0
      %398 = vmatprep.subr.bf16.mxu0 0
      %399 = vmatpush1.bf16.msra.mxu0 0
      %400 = vmatprep.subr.bf16.mxu0 0
      %401 = vmatpush1.bf16.msra.mxu0 0
      %402 = vmatprep.subr.bf16.mxu0 0
      %403 = vmatpush1.bf16.msra.mxu0 0
      %404 = vmatprep.subr.bf16.mxu0 0
      %405 = vmatpush1.bf16.msra.mxu0 0
      %406 = vmatprep.mubr.bf16.mxu0 0
      %407 = vmatmul.mubr.bf16.gmra.mrb[0].mxu0 %v294
      %v408 = vpop.f32.mrb[0].mxu0
      %v409 = vadd.f32 %v228, %v408
      %v410 = vpop.f32.mrb[0].mxu0
      %v411 = vpop.f32.mrb[0].mxu0
      %v412 = vadd.f32 %v228, %v411
      %v413 = vpop.f32.mrb[0].mxu0
      %414 = vmatprep.mubr.bf16.mxu0 0
      %415 = vmatmul.mubr.bf16.gmra.mrb[0].mxu0 %v295
      %v416 = vpop.f32.mrb[0].mxu0
      %v417 = vadd.f32 %v228, %v416
      %v418 = vpop.f32.mrb[0].mxu0
      %v419 = vpop.f32.mrb[0].mxu0
      %v420 = vadd.f32 %v228, %v419
      %v421 = vpop.f32.mrb[0].mxu0
      %422 = vmatprep.mubr.bf16.mxu0 0
      %423 = vmatmul.mubr.bf16.gmra.mrb[0].mxu0 %v296
      %v424 = vpop.f32.mrb[0].mxu0
      %v425 = vadd.f32 %v228, %v424
      %v426 = vpop.f32.mrb[0].mxu0
      %v427 = vpop.f32.mrb[0].mxu0
      %v428 = vadd.f32 %v228, %v427
      %v429 = vpop.f32.mrb[0].mxu0
      %430 = vmatprep.mubr.bf16.mxu0 0
      %431 = vmatmul.mubr.bf16.gmra.mrb[0].mxu0 %v297
      %v432 = vpop.f32.mrb[0].mxu0
      %v433 = vadd.f32 %v228, %v432
      %v434 = vpop.f32.mrb[0].mxu0
      %v435 = vpop.f32.mrb[0].mxu0
      %v436 = vadd.f32 %v228, %v435
      %v437 = vpop.f32.mrb[0].mxu0
      %438 = vmatprep.mubr.bf16.mxu0 0
      %439 = vmatmul.mubr.bf16.gmra.mrb[0].mxu0 %v298
      %v440 = vpop.f32.mrb[0].mxu0
      %v441 = vadd.f32 %v228, %v440
      %v442 = vpop.f32.mrb[0].mxu0
      %v443 = vpop.f32.mrb[0].mxu0
      %v444 = vadd.f32 %v228, %v443
      %v445 = vpop.f32.mrb[0].mxu0
      %446 = vmatprep.mubr.bf16.mxu0 0
      %447 = vmatmul.mubr.bf16.gmra.mrb[0].mxu0 %v299
      %v448 = vpop.f32.mrb[0].mxu0
      %v449 = vadd.f32 %v228, %v448
      %v450 = vpop.f32.mrb[0].mxu0
      %v451 = vpop.f32.mrb[0].mxu0
      %v452 = vadd.f32 %v228, %v451
      %v453 = vpop.f32.mrb[0].mxu0
      %454 = vmatprep.mubr.bf16.mxu0 0
      %455 = vmatmul.mubr.bf16.gmra.mrb[0].mxu0 %v300
      %v456 = vpop.f32.mrb[0].mxu0
      %v457 = vadd.f32 %v228, %v456
      %v458 = vpop.f32.mrb[0].mxu0
      %v459 = vpop.f32.mrb[0].mxu0
      %v460 = vadd.f32 %v228, %v459
      %v461 = vpop.f32.mrb[0].mxu0
      %462 = vmatprep.mubr.bf16.mxu0 0
      %463 = vmatmul.mubr.bf16.gmra.mrb[0].mxu0 %v301
      %v464 = vpop.f32.mrb[0].mxu0
      %v465 = vadd.f32 %v228, %v464
      %v466 = vpop.f32.mrb[0].mxu0
      %v467 = vpop.f32.mrb[0].mxu0
      %v468 = vadd.f32 %v228, %v467
      %v469 = vpop.f32.mrb[0].mxu0
      %470 = vmatprep.mubr.bf16.mxu0 0
      %471 = vmatmul.mubr.bf16.gmra.mrb[0].mxu0 %v302
      %v472 = vpop.f32.mrb[0].mxu0
      %v473 = vadd.f32 %v228, %v472
      %v474 = vpop.f32.mrb[0].mxu0
      %v475 = vpop.f32.mrb[0].mxu0
      %v476 = vadd.f32 %v228, %v475
      %v477 = vpop.f32.mrb[0].mxu0
      %478 = vmatprep.mubr.bf16.mxu0 0
      %479 = vmatmul.mubr.bf16.gmra.mrb[0].mxu0 %v303
      %v480 = vpop.f32.mrb[0].mxu0
      %v481 = vadd.f32 %v228, %v480
      %v482 = vpop.f32.mrb[0].mxu0
      %v483 = vpop.f32.mrb[0].mxu0
      %v484 = vadd.f32 %v228, %v483
      %v485 = vpop.f32.mrb[0].mxu0
      %486 = vmatprep.mubr.bf16.mxu0 0
      %487 = vmatmul.mubr.bf16.gmra.mrb[0].mxu0 %v304
      %v488 = vpop.f32.mrb[0].mxu0
      %v489 = vadd.f32 %v228, %v488
      %v490 = vpop.f32.mrb[0].mxu0
      %v491 = vpop.f32.mrb[0].mxu0
      %v492 = vadd.f32 %v228, %v491
      %v493 = vpop.f32.mrb[0].mxu0
      %494 = vmatprep.mubr.bf16.mxu0 0
      %495 = vmatmul.mubr.bf16.gmra.mrb[0].mxu0 %v305
      %v496 = vpop.f32.mrb[0].mxu0
      %v497 = vadd.f32 %v228, %v496
      %v498 = vpop.f32.mrb[0].mxu0
      %v499 = vpop.f32.mrb[0].mxu0
      %v500 = vadd.f32 %v228, %v499
      %v501 = vpop.f32.mrb[0].mxu0
      %502 = vmatprep.mubr.bf16.mxu0 0
      %503 = vmatmul.mubr.bf16.gmra.mrb[0].mxu0 %v306
      %v504 = vpop.f32.mrb[0].mxu0
      %v505 = vadd.f32 %v228, %v504
      %v506 = vpop.f32.mrb[0].mxu0
      %v507 = vpop.f32.mrb[0].mxu0
      %v508 = vadd.f32 %v228, %v507
      %v509 = vpop.f32.mrb[0].mxu0
      %510 = vmatprep.mubr.bf16.mxu0 0
      %511 = vmatmul.mubr.bf16.gmra.mrb[0].mxu0 %v307
      %v512 = vpop.f32.mrb[0].mxu0
      %v513 = vadd.f32 %v228, %v512
      %v514 = vpop.f32.mrb[0].mxu0
      %v515 = vpop.f32.mrb[0].mxu0
      %v516 = vadd.f32 %v228, %v515
      %v517 = vpop.f32.mrb[0].mxu0
      %518 = vmatprep.mubr.bf16.mxu0 0
      %519 = vmatmul.mubr.bf16.gmra.mrb[0].mxu0 %v308
      %v520 = vpop.f32.mrb[0].mxu0
      %v521 = vadd.f32 %v228, %v520
      %v522 = vpop.f32.mrb[0].mxu0
      %v523 = vpop.f32.mrb[0].mxu0
      %v524 = vadd.f32 %v228, %v523
      %v525 = vpop.f32.mrb[0].mxu0
      %526 = vmatprep.mubr.bf16.mxu0 0
      %527 = vmatmul.mubr.bf16.gmra.mrb[0].mxu0 %v309
      %v528 = vpop.f32.mrb[0].mxu0
      %v529 = vadd.f32 %v228, %v528
      %v530 = vpop.f32.mrb[0].mxu0
      %v531 = vpop.f32.mrb[0].mxu0
      %v532 = vadd.f32 %v228, %v531
      %v533 = vpop.f32.mrb[0].mxu0
      %534 = vdwg.mxu0
      %v535 = vmax.f32 %v409, 0.0
      %v536 = vmax.f32 %v412, 0.0
      %v537 = vmax.f32 %v417, 0.0
      %v538 = vmax.f32 %v420, 0.0
      %v539 = vmax.f32 %v425, 0.0
      %v540 = vmax.f32 %v428, 0.0
      %v541 = vmax.f32 %v433, 0.0
      %v542 = vmax.f32 %v436, 0.0
      %v543 = vmax.f32 %v441, 0.0
      %v544 = vmax.f32 %v444, 0.0
      %v545 = vmax.f32 %v449, 0.0
      %v546 = vmax.f32 %v452, 0.0
      %v547 = vmax.f32 %v457, 0.0
      %v548 = vmax.f32 %v460, 0.0
      %v549 = vmax.f32 %v465, 0.0
      %v550 = vmax.f32 %v468, 0.0
      %v551 = vmax.f32 %v473, 0.0
      %v552 = vmax.f32 %v476, 0.0
      %v553 = vmax.f32 %v481, 0.0
      %v554 = vmax.f32 %v484, 0.0
      %v555 = vmax.f32 %v489, 0.0
      %v556 = vmax.f32 %v492, 0.0
      %v557 = vmax.f32 %v497, 0.0
      %v558 = vmax.f32 %v500, 0.0
      %v559 = vmax.f32 %v505, 0.0
      %v560 = vmax.f32 %v508, 0.0
      %v561 = vmax.f32 %v513, 0.0
      %v562 = vmax.f32 %v516, 0.0
      %v563 = vmax.f32 %v521, 0.0
      %v564 = vmax.f32 %v524, 0.0
      %v565 = vmax.f32 %v529, 0.0
      %v566 = vmax.f32 %v532, 0.0
      %v567 = vpack.c.bf16 %v536, %v535
      %v568 = vpack.c.bf16 %v538, %v537
      %v569 = vpack.c.bf16 %v540, %v539
      %v570 = vpack.c.bf16 %v542, %v541
      %v571 = vpack.c.bf16 %v544, %v543
      %v572 = vpack.c.bf16 %v546, %v545
      %v573 = vpack.c.bf16 %v548, %v547
      %v574 = vpack.c.bf16 %v550, %v549
      %v575 = vpack.c.bf16 %v552, %v551
      %v576 = vpack.c.bf16 %v554, %v553
      %v577 = vpack.c.bf16 %v556, %v555
      %v578 = vpack.c.bf16 %v558, %v557
      %v579 = vpack.c.bf16 %v560, %v559
      %v580 = vpack.c.bf16 %v562, %v561
      %v581 = vpack.c.bf16 %v564, %v563
      %v582 = vpack.c.bf16 %v566, %v565
      %v599 = vunpack.c.l.b16 %v567
      %v600 = vunpack.c.h.b16 %v567
      %v601 = vunpack.c.l.b16 %v568
      %v602 = vunpack.c.h.b16 %v568
      %v603 = vunpack.c.l.b16 %v569
      %v604 = vunpack.c.h.b16 %v569
      %v605 = vunpack.c.l.b16 %v570
      %v606 = vunpack.c.h.b16 %v570
      %v607 = vunpack.c.l.b16 %v571
      %v608 = vunpack.c.h.b16 %v571
      %v609 = vunpack.c.l.b16 %v572
      %v610 = vunpack.c.h.b16 %v572
      %v611 = vunpack.c.l.b16 %v573
      %v612 = vunpack.c.h.b16 %v573
      %v613 = vunpack.c.l.b16 %v574
      %v614 = vunpack.c.h.b16 %v574
      %v615 = vunpack.c.l.b16 %v575
      %v616 = vunpack.c.h.b16 %v575
      %v617 = vunpack.c.l.b16 %v576
      %v618 = vunpack.c.h.b16 %v576
      %v619 = vunpack.c.l.b16 %v577
      %v620 = vunpack.c.h.b16 %v577
      %v621 = vunpack.c.l.b16 %v578
      %v622 = vunpack.c.h.b16 %v578
      %v623 = vunpack.c.l.b16 %v579
      %v624 = vunpack.c.h.b16 %v579
      %v625 = vunpack.c.l.b16 %v580
      %v626 = vunpack.c.h.b16 %v580
      %v627 = vunpack.c.l.b16 %v581
      %v628 = vunpack.c.h.b16 %v581
      %v629 = vunpack.c.l.b16 %v582
      %v630 = vunpack.c.h.b16 %v582
      %v631 = vpack.c.b16 %v599, %v599
      %v632 = vpack.c.b16 %v600, %v600
      %v633 = vpack.c.b16 %v601, %v601
      %v634 = vpack.c.b16 %v602, %v602
      %v635 = vpack.c.b16 %v603, %v603
      %v636 = vpack.c.b16 %v604, %v604
      %v637 = vpack.c.b16 %v605, %v605
      %v638 = vpack.c.b16 %v606, %v606
      %v639 = vpack.c.b16 %v607, %v607
      %v640 = vpack.c.b16 %v608, %v608
      %v641 = vpack.c.b16 %v609, %v609
      %v642 = vpack.c.b16 %v610, %v610
      %v643 = vpack.c.b16 %v611, %v611
      %v644 = vpack.c.b16 %v612, %v612
      %v645 = vpack.c.b16 %v613, %v613
      %v646 = vpack.c.b16 %v614, %v614
      %v647 = vpack.c.b16 %v615, %v615
      %v648 = vpack.c.b16 %v616, %v616
      %v649 = vpack.c.b16 %v617, %v617
      %v650 = vpack.c.b16 %v618, %v618
      %v651 = vpack.c.b16 %v619, %v619
      %v652 = vpack.c.b16 %v620, %v620
      %v653 = vpack.c.b16 %v621, %v621
      %v654 = vpack.c.b16 %v622, %v622
      %v655 = vpack.c.b16 %v623, %v623
      %v656 = vpack.c.b16 %v624, %v624
      %v657 = vpack.c.b16 %v625, %v625
      %v658 = vpack.c.b16 %v626, %v626
      %v659 = vpack.c.b16 %v627, %v627
      %v660 = vpack.c.b16 %v628, %v628
      %v661 = vpack.c.b16 %v629, %v629
      %v662 = vpack.c.b16 %v630, %v630
      %695 = vst [vmem:[%s172] sm:$0xf] %v631
      %696 = vst [vmem:[%s172 + $0x4] sm:$0xf] %v632
      %697 = vst [vmem:[%s172 + $0x8] sm:$0xf] %v633
      %698 = vst [vmem:[%s172 + $0xc] sm:$0xf] %v634
      %699 = vst [vmem:[%s172 + $0x10] sm:$0xf] %v635
      %700 = vst [vmem:[%s172 + $0x14] sm:$0xf] %v636
      %701 = vst [vmem:[%s172 + $0x18] sm:$0xf] %v637
      %702 = vst [vmem:[%s172 + $0x1c] sm:$0xf] %v638
      %703 = vst [vmem:[%s172 + $0x20] sm:$0xf] %v639
      %704 = vst [vmem:[%s172 + $0x24] sm:$0xf] %v640
      %705 = vst [vmem:[%s172 + $0x28] sm:$0xf] %v641
      %706 = vst [vmem:[%s172 + $0x2c] sm:$0xf] %v642
      %707 = vst [vmem:[%s172 + $0x30] sm:$0xf] %v643
      %708 = vst [vmem:[%s172 + $0x34] sm:$0xf] %v644
      %709 = vst [vmem:[%s172 + $0x38] sm:$0xf] %v645
      %710 = vst [vmem:[%s172 + $0x3c] sm:$0xf] %v646
      %711 = vst [vmem:[%s172 + $0x40] sm:$0xf] %v647
      %712 = vst [vmem:[%s172 + $0x44] sm:$0xf] %v648
      %713 = vst [vmem:[%s172 + $0x48] sm:$0xf] %v649
      %714 = vst [vmem:[%s172 + $0x4c] sm:$0xf] %v650
      %715 = vst [vmem:[%s172 + $0x50] sm:$0xf] %v651
      %716 = vst [vmem:[%s172 + $0x54] sm:$0xf] %v652
      %717 = vst [vmem:[%s172 + $0x58] sm:$0xf] %v653
      %718 = vst [vmem:[%s172 + $0x5c] sm:$0xf] %v654
      %719 = vst [vmem:[%s172 + $0x60] sm:$0xf] %v655
      %720 = vst [vmem:[%s172 + $0x64] sm:$0xf] %v656
      %721 = vst [vmem:[%s172 + $0x68] sm:$0xf] %v657
      %722 = vst [vmem:[%s172 + $0x6c] sm:$0xf] %v658
      %723 = vst [vmem:[%s172 + $0x70] sm:$0xf] %v659
      %724 = vst [vmem:[%s172 + $0x74] sm:$0xf] %v660
      %725 = vst [vmem:[%s172 + $0x78] sm:$0xf] %v661
      %726 = vst [vmem:[%s172 + $0x7c] sm:$0xf] %v662
      %s727 = smul.u32 32, %s14
      %p728 = scmp.lt.s32.totalorder %s727, 63
      %s729 = scalar_select %p728, %s727, 63
      %s730 = smul.addr %s729, 4
      %s731 = scalar_lea.vmem %s3, %s730
      // Predicated region
      $region33: #{bottleneck_forward.3} parent=31 // pred_check
        %p732 = pneg %p100
      $region34: #{bottleneck_forward.3} parent=31 // pred_check_branch
        %734 = sbr.rel (%p732) target = $region36
      $region35: #{bottleneck_forward.3} parent=31 // pred_region
        %s735 = smul.u32 32, %s14
      $region36: #{bottleneck_forward.3} parent=31 // pred_fallthru
        _
    $region32: #{bottleneck_forward.3} parent=5 // pred_fallthru
      _
    %p736 = scmp.le.s32.totalorder 2, %s9
    // Predicated region
    $region37: #{bottleneck_forward.3} parent=5 // pred_check
      %p737 = pneg %p736
    $region38: #{bottleneck_forward.3} parent=5 // pred_check_branch
      %739 = sbr.rel (%p737) target = $region40
    $region39: #{bottleneck_forward.3} parent=5 // pred_region
      %s740 = ssub.s32 %s9, 2
      // Predicated region
      $region41: #{bottleneck_forward.3} parent=39 // pred_check
        %p741 = pneg %p106
      $region42: #{bottleneck_forward.3} parent=39 // pred_check_branch
        %743 = sbr.rel (%p741) target = $region44
      $region43: #{bottleneck_forward.3} parent=39 // pred_region
        %s744 = smul.u32 32, %s15
        %p745 = scmp.lt.s32.totalorder %s744, 63
        %s746 = scalar_select %p745, %s744, 63
        %s747 = smul.addr %s746, 4
        %s748 = scalar_lea.vmem %s3, %s747
      $region44: #{bottleneck_forward.3} parent=39 // pred_fallthru
        _
    $region40: #{bottleneck_forward.3} parent=5 // pred_fallthru
      _
  $region6: #{bottleneck_forward.3} parent=0 // loop_footer
    %s13 = sadd.s32 1, %s9
  $region7: #{bottleneck_forward.3} parent=0 // loop_footer_branch
    %8 = sbr.rel target = $region3
  $region8: #{bottleneck_forward.3} parent=0 // loop_exit
    _

// kernel: bottleneck_forward.5
$region0: #{bottleneck_forward.5}
  #allocation0 [shape = 'u32[]', space=smem, size = 0x4, offset = 0x4, fixed_abs, tag = 'smem constant byte address 0x4 - core index']
  #allocation1 [shape = 'u32[144,128]{1,0:T(1,128)}', space=vmem, size = 0x12000, scoped, tag = 'internal scratch']
  %s0 = inlined_call_operand.vmem [shape: bf16[512,128], index: 0, kind: input, shape index: {}]
  %s1 = inlined_call_operand.vmem [shape: bf16[128,128], index: 1, kind: input, shape index: {}]
  %s2 = inlined_call_operand.vmem [shape: f32[1,128], index: 2, kind: input, shape index: {}]
  %s3 = inlined_call_operand.vmem [shape: bf16[512,128], index: 3, kind: input, shape index: {}]
  %s4 = inlined_call_operand.vmem [shape: f32[512,128], index: 4, kind: output, shape index: {}]
  %s5 = sld [smem:[#allocation0]]
  $region49: #{bottleneck_forward.5} parent=0
    _
  %s7 = ssub.s32 1, %s5
  %s8 = scalar_select 0, %s7, %s5
  loop: start=0, step=1, limit=4
  $region2: #{bottleneck_forward.5} parent=0 // loop_pre_header
    _
  $region3: #{bottleneck_forward.5} parent=0 // loop_header
    %s10 = sphi 0, %s14
    %p11 = scmp.ge.s32.totalorder %s10, 4
    %s20 = sphi 0, %s22
    %s23 = sphi 0, %s20
    %s24 = sphi 0, %s23
    %s40 = sphi 0, %s24
    %s44 = sphi 0, %s44
    %s46 = sphi 0, %s44
    %s47 = sphi 0, %s46
    %s61 = sphi 0, %s47
    %s65 = sphi 0, %s65
    %s67 = sphi 0, %s65
    %s68 = sphi 0, %s67
    %s82 = sphi 0, %s68
    %s88 = sphi 0, %s90
    %s91 = sphi 0, %s88
    %s92 = sphi 0, %s91
    %s108 = sphi 0, %s92
    %s114 = sphi 0, %s116
    %s117 = sphi 0, %s114
    %s118 = sphi 0, %s117
    %s134 = sphi 0, %s118
  $region4: #{bottleneck_forward.5} parent=0 // loop_header_branch
    %13 = sbr.rel (%p11) target = $region8
  $region5: #{bottleneck_forward.5} parent=0 // loop_body
    %s15 = ssub.s32 %s10, 1
    %s16 = ssub.s32 %s10, 2
    %s17 = sadd.s32 %s10, 1
    %s18 = ssub.s32 %s10, %s17
    %p19 = scmp.eq.s32.totalorder %s18, 0
    %s21 = sadd.s32 %s20, 1
    %s22 = scalar_select %p19, %s20, %s21
    %p25 = pneg %p19
    %p26 = scmp.eq.s32.totalorder %s10, 1
    %p27 = por %p25, %p26
    %p28 = scmp.ne.s32.totalorder %s20, %s23
    %p29 = scmp.eq.s32.totalorder %s10, 0
    %p30 = por %p28, %p29
    %p31 = scmp.ne.s32.totalorder %s20, %s23
    %p32 = scmp.eq.s32.totalorder %s15, 1
    %p33 = por %p31, %p32
    %p34 = scmp.ne.s32.totalorder %s23, %s24
    %p35 = scmp.eq.s32.totalorder %s15, 0
    %p36 = por %p34, %p35
    %p37 = scmp.ne.s32.totalorder %s23, %s24
    %p38 = scmp.eq.s32.totalorder %s16, 1
    %p39 = por %p37, %p38
    %p41 = scmp.ne.s32.totalorder %s24, %s40
    %p42 = scmp.eq.s32.totalorder %s16, 0
    %p43 = por %p41, %p42
    %s45 = sadd.s32 %s44, 1
    %p48 = scmp.eq.s32.totalorder %s10, 1
    %p49 = scmp.ne.s32.totalorder %s44, %s46
    %p50 = scmp.eq.s32.totalorder %s10, 0
    %p51 = por %p49, %p50
    %p52 = scmp.ne.s32.totalorder %s44, %s46
    %p53 = scmp.eq.s32.totalorder %s15, 1
    %p54 = por %p52, %p53
    %p55 = scmp.ne.s32.totalorder %s46, %s47
    %p56 = scmp.eq.s32.totalorder %s15, 0
    %p57 = por %p55, %p56
    %p58 = scmp.ne.s32.totalorder %s46, %s47
    %p59 = scmp.eq.s32.totalorder %s16, 1
    %p60 = por %p58, %p59
    %p62 = scmp.ne.s32.totalorder %s47, %s61
    %p63 = scmp.eq.s32.totalorder %s16, 0
    %p64 = por %p62, %p63
    %s66 = sadd.s32 %s65, 1
    %p69 = scmp.eq.s32.totalorder %s10, 1
    %p70 = scmp.ne.s32.totalorder %s65, %s67
    %p71 = scmp.eq.s32.totalorder %s10, 0
    %p72 = por %p70, %p71
    %p73 = scmp.ne.s32.totalorder %s65, %s67
    %p74 = scmp.eq.s32.totalorder %s15, 1
    %p75 = por %p73, %p74
    %p76 = scmp.ne.s32.totalorder %s67, %s68
    %p77 = scmp.eq.s32.totalorder %s15, 0
    %p78 = por %p76, %p77
    %p79 = scmp.ne.s32.totalorder %s67, %s68
    %p80 = scmp.eq.s32.totalorder %s16, 1
    %p81 = por %p79, %p80
    %p83 = scmp.ne.s32.totalorder %s68, %s82
    %p84 = scmp.eq.s32.totalorder %s16, 0
    %p85 = por %p83, %p84
    %s86 = ssub.s32 %s10, %s17
    %p87 = scmp.eq.s32.totalorder %s86, 0
    %s89 = sadd.s32 %s88, 1
    %s90 = scalar_select %p87, %s88, %s89
    %p93 = pneg %p87
    %p94 = scmp.eq.s32.totalorder %s10, 1
    %p95 = por %p93, %p94
    %p96 = scmp.ne.s32.totalorder %s88, %s91
    %p97 = scmp.eq.s32.totalorder %s10, 0
    %p98 = por %p96, %p97
    %p99 = scmp.ne.s32.totalorder %s88, %s91
    %p100 = scmp.eq.s32.totalorder %s15, 1
    %p101 = por %p99, %p100
    %p102 = scmp.ne.s32.totalorder %s91, %s92
    %p103 = scmp.eq.s32.totalorder %s15, 0
    %p104 = por %p102, %p103
    %p105 = scmp.ne.s32.totalorder %s91, %s92
    %p106 = scmp.eq.s32.totalorder %s16, 1
    %p107 = por %p105, %p106
    %p109 = scmp.ne.s32.totalorder %s92, %s108
    %p110 = scmp.eq.s32.totalorder %s16, 0
    %p111 = por %p109, %p110
    %s112 = ssub.s32 %s10, %s17
    %p113 = scmp.eq.s32.totalorder %s112, 0
    %s115 = sadd.s32 %s114, 1
    %s116 = scalar_select %p113, %s114, %s115
    %p119 = pneg %p113
    %p120 = scmp.eq.s32.totalorder %s10, 1
    %p121 = por %p119, %p120
    %p122 = scmp.ne.s32.totalorder %s114, %s117
    %p123 = scmp.eq.s32.totalorder %s10, 0
    %p124 = por %p122, %p123
    %p125 = scmp.ne.s32.totalorder %s114, %s117
    %p126 = scmp.eq.s32.totalorder %s15, 1
    %p127 = por %p125, %p126
    %p128 = scmp.ne.s32.totalorder %s117, %s118
    %p129 = scmp.eq.s32.totalorder %s15, 0
    %p130 = por %p128, %p129
    %p131 = scmp.ne.s32.totalorder %s117, %s118
    %p132 = scmp.eq.s32.totalorder %s16, 1
    %p133 = por %p131, %p132
    %p135 = scmp.ne.s32.totalorder %s118, %s134
    %p136 = scmp.eq.s32.totalorder %s16, 0
    %p137 = por %p135, %p136
    %p138 = scmp.le.s32.totalorder 1, %s10
    %p139 = scmp.lt.s32.totalorder %s10, 3
    %p140 = pnand %p138, %p139
    %p141 = pneg %p140
    // Predicated region
    $region9: #{bottleneck_forward.5} parent=5 // pred_check
      _
    $region10: #{bottleneck_forward.5} parent=5 // pred_check_branch
      %143 = sbr.rel (%p140) target = $region12
    $region11: #{bottleneck_forward.5} parent=5 // pred_region
      %s144 = ssub.s32 %s10, 1
      // Predicated region
      $region13: #{bottleneck_forward.5} parent=11 // pred_check
        %p145 = pneg %p57
      $region14: #{bottleneck_forward.5} parent=11 // pred_check_branch
        %147 = sbr.rel (%p145) target = $region16
      $region15: #{bottleneck_forward.5} parent=11 // pred_region
        _
      $region16: #{bottleneck_forward.5} parent=11 // pred_fallthru
        _
      // Predicated region
      $region17: #{bottleneck_forward.5} parent=11 // pred_check
        %p148 = pneg %p78
      $region18: #{bottleneck_forward.5} parent=11 // pred_check_branch
        %150 = sbr.rel (%p148) target = $region20
      $region19: #{bottleneck_forward.5} parent=11 // pred_region
        _
      $region20: #{bottleneck_forward.5} parent=11 // pred_fallthru
        _
    $region12: #{bottleneck_forward.5} parent=5 // pred_fallthru
      _
    %p151 = scmp.lt.s32.totalorder %s10, 2
    // Predicated region
    $region21: #{bottleneck_forward.5} parent=5 // pred_check
      %p152 = pneg %p151
    $region22: #{bottleneck_forward.5} parent=5 // pred_check_branch
      %154 = sbr.rel (%p152) target = $region24
    $region23: #{bottleneck_forward.5} parent=5 // pred_region
      // Predicated region
      $region25: #{bottleneck_forward.5} parent=23 // pred_check
        %p155 = pneg %p30
      $region26: #{bottleneck_forward.5} parent=23 // pred_check_branch
        %157 = sbr.rel (%p155) target = $region28
      $region27: #{bottleneck_forward.5} parent=23 // pred_region
        %s158 = smul.u32 32, %s10
        %p159 = scmp.lt.s32.totalorder %s158, 63
        %s160 = scalar_select %p159, %s158, 63
        %s161 = smul.addr %s160, 4
        %s162 = scalar_lea.vmem %s0, %s161
        %s163 = smul.u32 32, %s10
      $region28: #{bottleneck_forward.5} parent=23 // pred_fallthru
        _
      // Predicated region
      $region29: #{bottleneck_forward.5} parent=23 // pred_check
        %p164 = pneg %p98
      $region30: #{bottleneck_forward.5} parent=23 // pred_check_branch
        %166 = sbr.rel (%p164) target = $region32
      $region31: #{bottleneck_forward.5} parent=23 // pred_region
        %s167 = smul.u32 32, %s10
        %p168 = scmp.lt.s32.totalorder %s167, 63
        %s169 = scalar_select %p168, %s167, 63
        %s170 = smul.addr %s169, 4
        %s171 = scalar_lea.vmem %s3, %s170
        %s172 = smul.u32 32, %s10
      $region32: #{bottleneck_forward.5} parent=23 // pred_fallthru
        _
    $region24: #{bottleneck_forward.5} parent=5 // pred_fallthru
      _
    %p173 = scmp.le.s32.totalorder 1, %s10
    %p174 = scmp.lt.s32.totalorder %s10, 3
    %p175 = pnand %p173, %p174
    %p176 = pneg %p175
    // Predicated region
    $region33: #{bottleneck_forward.5} parent=5 // pred_check
      _
    $region34: #{bottleneck_forward.5} parent=5 // pred_check_branch
      %178 = sbr.rel (%p175) target = $region36
    $region35: #{bottleneck_forward.5} parent=5 // pred_region
      %s179 = ssub.s32 %s10, 1
      %s180 = smul.u32 32, %s15
      %p181 = scmp.lt.s32.totalorder %s180, 63
      %s182 = scalar_select %p181, %s180, 63
      %s183 = smul.addr %s182, 4
      %s184 = scalar_lea.vmem %s0, %s183
      %p185 = pneg %p36
      %p186 = pneg %p33
      %p187 = pneg %p57
      %p188 = pneg %p54
      %p189 = pneg %p78
      %p190 = pneg %p75
      %s191 = smul.u32 32, %s15
      %p192 = scmp.lt.s32.totalorder %s191, 63
      %s193 = scalar_select %p192, %s191, 63
      %s194 = smul.addr %s193, 4
      %s195 = scalar_lea.vmem %s3, %s194
      %p196 = pneg %p104
      %p197 = pneg %p101
      %p198 = pneg %p130
      %p199 = pneg %p127
      %s200 = smul.u32 32, %s15
      %p201 = scmp.lt.s32.totalorder %s200, 63
      %s202 = scalar_select %p201, %s200, 63
      %s203 = smul.addr %s202, 8
      %s204 = scalar_lea.vmem %s4, %s203
      %s205 = smul.u32 32, %s15
      %p206 = scmp.lt.s32.totalorder %s205, 63
      %s207 = scalar_select %p206, %s205, 63
      %s208 = smul.addr %s207, 4
      %s209 = scalar_lea.vmem %s0, %s208
      %s210 = smul.u32 32, %s15
      %s211 = smul.u32 32, %s15
      %p212 = scmp.lt.s32.totalorder %s211, 63
      %s213 = scalar_select %p212, %s211, 63
      %s214 = smul.addr %s213, 4
      %s215 = scalar_lea.vmem %s3, %s214
      %s216 = smul.u32 32, %s15
      %s217 = smul.u32 32, %s15
      %p218 = scmp.lt.s32.totalorder %s217, 63
      %s219 = scalar_select %p218, %s217, 63
      %s220 = smul.addr %s219, 8
      %s221 = scalar_lea.vmem %s4, %s220
      %s222 = smul.u32 32, %s15
      %v224 = vld [vmem:[%s209] sm:$0xf]
      %v225 = vld [vmem:[%s209 + $0x4] sm:$0xf]
      %v226 = vld [vmem:[%s209 + $0x8] sm:$0xf]
      %v227 = vld [vmem:[%s209 + $0xc] sm:$0xf]
      %v228 = vld [vmem:[%s209 + $0x10] sm:$0xf]
      %v229 = vld [vmem:[%s209 + $0x14] sm:$0xf]
      %v230 = vld [vmem:[%s209 + $0x18] sm:$0xf]
      %v231 = vld [vmem:[%s209 + $0x1c] sm:$0xf]
      %v232 = vld [vmem:[%s209 + $0x20] sm:$0xf]
      %v233 = vld [vmem:[%s209 + $0x24] sm:$0xf]
      %v234 = vld [vmem:[%s209 + $0x28] sm:$0xf]
      %v235 = vld [vmem:[%s209 + $0x2c] sm:$0xf]
      %v236 = vld [vmem:[%s209 + $0x30] sm:$0xf]
      %v237 = vld [vmem:[%s209 + $0x34] sm:$0xf]
      %v238 = vld [vmem:[%s209 + $0x38] sm:$0xf]
      %v239 = vld [vmem:[%s209 + $0x3c] sm:$0xf]
      %v240 = vld [vmem:[%s209 + $0x40] sm:$0xf]
      %v241 = vld [vmem:[%s209 + $0x44] sm:$0xf]
      %v242 = vld [vmem:[%s209 + $0x48] sm:$0xf]
      %v243 = vld [vmem:[%s209 + $0x4c] sm:$0xf]
      %v244 = vld [vmem:[%s209 + $0x50] sm:$0xf]
      %v245 = vld [vmem:[%s209 + $0x54] sm:$0xf]
      %v246 = vld [vmem:[%s209 + $0x58] sm:$0xf]
      %v247 = vld [vmem:[%s209 + $0x5c] sm:$0xf]
      %v248 = vld [vmem:[%s209 + $0x60] sm:$0xf]
      %v249 = vld [vmem:[%s209 + $0x64] sm:$0xf]
      %v250 = vld [vmem:[%s209 + $0x68] sm:$0xf]
      %v251 = vld [vmem:[%s209 + $0x6c] sm:$0xf]
      %v252 = vld [vmem:[%s209 + $0x70] sm:$0xf]
      %v253 = vld [vmem:[%s209 + $0x74] sm:$0xf]
      %v254 = vld [vmem:[%s209 + $0x78] sm:$0xf]
      %v255 = vld [vmem:[%s209 + $0x7c] sm:$0xf]
      %v256 = vld [vmem:[%s1] sm:$0xf]
      %v257 = vld [vmem:[%s1 + $0x4] sm:$0xf]
      %v258 = vld [vmem:[%s1 + $0x8] sm:$0xf]
      %v259 = vld [vmem:[%s1 + $0xc] sm:$0xf]
      %v260 = vld [vmem:[%s1 + $0x10] sm:$0xf]
      %v261 = vld [vmem:[%s1 + $0x14] sm:$0xf]
      %v262 = vld [vmem:[%s1 + $0x18] sm:$0xf]
      %v263 = vld [vmem:[%s1 + $0x1c] sm:$0xf]
      %v264 = vld [vmem:[%s1 + $0x20] sm:$0xf]
      %v265 = vld [vmem:[%s1 + $0x24] sm:$0xf]
      %v266 = vld [vmem:[%s1 + $0x28] sm:$0xf]
      %v267 = vld [vmem:[%s1 + $0x2c] sm:$0xf]
      %v268 = vld [vmem:[%s1 + $0x30] sm:$0xf]
      %v269 = vld [vmem:[%s1 + $0x34] sm:$0xf]
      %v270 = vld [vmem:[%s1 + $0x38] sm:$0xf]
      %v271 = vld [vmem:[%s1 + $0x3c] sm:$0xf]
      %v272 = vld [vmem:[%s2] sm:$0x1]
      %v274 = vlaneseq
      %v275 = vshrl.u32 %v274, 7
      %v276 = vsub.s32 0, %v275
      %v277 = vrot.slane %v272, %v276
      %v311 = vunpack.c.l.b16 %v224
      %v312 = vunpack.c.l.b16 %v225
      %v313 = vunpack.c.l.b16 %v226
      %v314 = vunpack.c.l.b16 %v227
      %v315 = vunpack.c.l.b16 %v228
      %v316 = vunpack.c.l.b16 %v229
      %v317 = vunpack.c.l.b16 %v230
      %v318 = vunpack.c.l.b16 %v231
      %v319 = vunpack.c.l.b16 %v232
      %v320 = vunpack.c.l.b16 %v233
      %v321 = vunpack.c.l.b16 %v234
      %v322 = vunpack.c.l.b16 %v235
      %v323 = vunpack.c.l.b16 %v236
      %v324 = vunpack.c.l.b16 %v237
      %v325 = vunpack.c.l.b16 %v238
      %v326 = vunpack.c.l.b16 %v239
      %v327 = vunpack.c.l.b16 %v240
      %v328 = vunpack.c.l.b16 %v241
      %v329 = vunpack.c.l.b16 %v242
      %v330 = vunpack.c.l.b16 %v243
      %v331 = vunpack.c.l.b16 %v244
      %v332 = vunpack.c.l.b16 %v245
      %v333 = vunpack.c.l.b16 %v246
      %v334 = vunpack.c.l.b16 %v247
      %v335 = vunpack.c.l.b16 %v248
      %v336 = vunpack.c.l.b16 %v249
      %v337 = vunpack.c.l.b16 %v250
      %v338 = vunpack.c.l.b16 %v251
      %v339 = vunpack.c.l.b16 %v252
      %v340 = vunpack.c.l.b16 %v253
      %v341 = vunpack.c.l.b16 %v254
      %v342 = vunpack.c.l.b16 %v255
      %v343 = vpack.c.b16 %v312, %v311
      %v344 = vpack.c.b16 %v314, %v313
      %v345 = vpack.c.b16 %v316, %v315
      %v346 = vpack.c.b16 %v318, %v317
      %v347 = vpack.c.b16 %v320, %v319
      %v348 = vpack.c.b16 %v322, %v321
      %v349 = vpack.c.b16 %v324, %v323
      %v350 = vpack.c.b16 %v326, %v325
      %v351 = vpack.c.b16 %v328, %v327
      %v352 = vpack.c.b16 %v330, %v329
      %v353 = vpack.c.b16 %v332, %v331
      %v354 = vpack.c.b16 %v334, %v333
      %v355 = vpack.c.b16 %v336, %v335
      %v356 = vpack.c.b16 %v338, %v337
      %v357 = vpack.c.b16 %v340, %v339
      %v358 = vpack.c.b16 %v342, %v341
      %v391 = vunpack.c.l.b16 %v256
      %v392 = vunpack.c.l.b16 %v257
      %v393 = vunpack.c.l.b16 %v258
      %v394 = vunpack.c.l.b16 %v259
      %v395 = vunpack.c.l.b16 %v260
      %v396 = vunpack.c.l.b16 %v261
      %v397 = vunpack.c.l.b16 %v262
      %v398 = vunpack.c.l.b16 %v263
      %v399 = vunpack.c.l.b16 %v264
      %v400 = vunpack.c.l.b16 %v265
      %v401 = vunpack.c.l.b16 %v266
      %v402 = vunpack.c.l.b16 %v267
      %v403 = vunpack.c.l.b16 %v268
      %v404 = vunpack.c.l.b16 %v269
      %v405 = vunpack.c.l.b16 %v270
      %v406 = vunpack.c.l.b16 %v271
      %v407 = vpack.c.b16 %v392, %v391
      %v408 = vpack.c.b16 %v394, %v393
      %v409 = vpack.c.b16 %v396, %v395
      %v410 = vpack.c.b16 %v398, %v397
      %v411 = vpack.c.b16 %v400, %v399
      %v412 = vpack.c.b16 %v402, %v401
      %v413 = vpack.c.b16 %v404, %v403
      %v414 = vpack.c.b16 %v406, %v405
      %423 = vmatprep.subr.bf16.mxu0 0
      %424 = vmatpush1.bf16.msra.mxu0 %v407
      %425 = vmatprep.subr.bf16.mxu0 0
      %426 = vmatpush1.bf16.msra.mxu0 %v408
      %427 = vmatprep.subr.bf16.mxu0 0
      %428 = vmatpush1.bf16.msra.mxu0 %v409
      %429 = vmatprep.subr.bf16.mxu0 0
      %430 = vmatpush1.bf16.msra.mxu0 %v410
      %431 = vmatprep.subr.bf16.mxu0 0
      %432 = vmatpush1.bf16.msra.mxu0 %v411
      %433 = vmatprep.subr.bf16.mxu0 0
      %434 = vmatpush1.bf16.msra.mxu0 %v412
      %435 = vmatprep.subr.bf16.mxu0 0
      %436 = vmatpush1.bf16.msra.mxu0 %v413
      %437 = vmatprep.subr.bf16.mxu0 0
      %438 = vmatpush1.bf16.msra.mxu0 %v414
      %439 = vmatprep.subr.bf16.mxu0 0
      %440 = vmatpush1.bf16.msra.mxu0 0
      %441 = vmatprep.subr.bf16.mxu0 0
      %442 = vmatpush1.bf16.msra.mxu0 0
      %443 = vmatprep.subr.bf16.mxu0 0
      %444 = vmatpush1.bf16.msra.mxu0 0
      %445 = vmatprep.subr.bf16.mxu0 0
      %446 = vmatpush1.bf16.msra.mxu0 0
      %447 = vmatprep.subr.bf16.mxu0 0
      %448 = vmatpush1.bf16.msra.mxu0 0
      %449 = vmatprep.subr.bf16.mxu0 0
      %450 = vmatpush1.bf16.msra.mxu0 0
      %451 = vmatprep.subr.bf16.mxu0 0
      %452 = vmatpush1.bf16.msra.mxu0 0
      %453 = vmatprep.subr.bf16.mxu0 0
      %454 = vmatpush1.bf16.msra.mxu0 0
      %455 = vmatprep.mubr.bf16.mxu0 0
      %456 = vmatmul.mubr.bf16.gmra.mrb[0].mxu0 %v343
      %v457 = vpop.f32.mrb[0].mxu0
      %v458 = vadd.f32 %v277, %v457
      %v459 = vpop.f32.mrb[0].mxu0
      %v460 = vpop.f32.mrb[0].mxu0
      %v461 = vadd.f32 %v277, %v460
      %v462 = vpop.f32.mrb[0].mxu0
      %463 = vmatprep.mubr.bf16.mxu0 0
      %464 = vmatmul.mubr.bf16.gmra.mrb[0].mxu0 %v344
      %v465 = vpop.f32.mrb[0].mxu0
      %v466 = vadd.f32 %v277, %v465
      %v467 = vpop.f32.mrb[0].mxu0
      %v468 = vpop.f32.mrb[0].mxu0
      %v469 = vadd.f32 %v277, %v468
      %v470 = vpop.f32.mrb[0].mxu0
      %471 = vmatprep.mubr.bf16.mxu0 0
      %472 = vmatmul.mubr.bf16.gmra.mrb[0].mxu0 %v345
      %v473 = vpop.f32.mrb[0].mxu0
      %v474 = vadd.f32 %v277, %v473
      %v475 = vpop.f32.mrb[0].mxu0
      %v476 = vpop.f32.mrb[0].mxu0
      %v477 = vadd.f32 %v277, %v476
      %v478 = vpop.f32.mrb[0].mxu0
      %479 = vmatprep.mubr.bf16.mxu0 0
      %480 = vmatmul.mubr.bf16.gmra.mrb[0].mxu0 %v346
      %v481 = vpop.f32.mrb[0].mxu0
      %v482 = vadd.f32 %v277, %v481
      %v483 = vpop.f32.mrb[0].mxu0
      %v484 = vpop.f32.mrb[0].mxu0
      %v485 = vadd.f32 %v277, %v484
      %v486 = vpop.f32.mrb[0].mxu0
      %487 = vmatprep.mubr.bf16.mxu0 0
      %488 = vmatmul.mubr.bf16.gmra.mrb[0].mxu0 %v347
      %v489 = vpop.f32.mrb[0].mxu0
      %v490 = vadd.f32 %v277, %v489
      %v491 = vpop.f32.mrb[0].mxu0
      %v492 = vpop.f32.mrb[0].mxu0
      %v493 = vadd.f32 %v277, %v492
      %v494 = vpop.f32.mrb[0].mxu0
      %495 = vmatprep.mubr.bf16.mxu0 0
      %496 = vmatmul.mubr.bf16.gmra.mrb[0].mxu0 %v348
      %v497 = vpop.f32.mrb[0].mxu0
      %v498 = vadd.f32 %v277, %v497
      %v499 = vpop.f32.mrb[0].mxu0
      %v500 = vpop.f32.mrb[0].mxu0
      %v501 = vadd.f32 %v277, %v500
      %v502 = vpop.f32.mrb[0].mxu0
      %503 = vmatprep.mubr.bf16.mxu0 0
      %504 = vmatmul.mubr.bf16.gmra.mrb[0].mxu0 %v349
      %v505 = vpop.f32.mrb[0].mxu0
      %v506 = vadd.f32 %v277, %v505
      %v507 = vpop.f32.mrb[0].mxu0
      %v508 = vpop.f32.mrb[0].mxu0
      %v509 = vadd.f32 %v277, %v508
      %v510 = vpop.f32.mrb[0].mxu0
      %511 = vmatprep.mubr.bf16.mxu0 0
      %512 = vmatmul.mubr.bf16.gmra.mrb[0].mxu0 %v350
      %v513 = vpop.f32.mrb[0].mxu0
      %v514 = vadd.f32 %v277, %v513
      %v515 = vpop.f32.mrb[0].mxu0
      %v516 = vpop.f32.mrb[0].mxu0
      %v517 = vadd.f32 %v277, %v516
      %v518 = vpop.f32.mrb[0].mxu0
      %519 = vmatprep.mubr.bf16.mxu0 0
      %520 = vmatmul.mubr.bf16.gmra.mrb[0].mxu0 %v351
      %v521 = vpop.f32.mrb[0].mxu0
      %v522 = vadd.f32 %v277, %v521
      %v523 = vpop.f32.mrb[0].mxu0
      %v524 = vpop.f32.mrb[0].mxu0
      %v525 = vadd.f32 %v277, %v524
      %v526 = vpop.f32.mrb[0].mxu0
      %527 = vmatprep.mubr.bf16.mxu0 0
      %528 = vmatmul.mubr.bf16.gmra.mrb[0].mxu0 %v352
      %v529 = vpop.f32.mrb[0].mxu0
      %v530 = vadd.f32 %v277, %v529
      %v531 = vpop.f32.mrb[0].mxu0
      %v532 = vpop.f32.mrb[0].mxu0
      %v533 = vadd.f32 %v277, %v532
      %v534 = vpop.f32.mrb[0].mxu0
      %535 = vmatprep.mubr.bf16.mxu0 0
      %536 = vmatmul.mubr.bf16.gmra.mrb[0].mxu0 %v353
      %v537 = vpop.f32.mrb[0].mxu0
      %v538 = vadd.f32 %v277, %v537
      %v539 = vpop.f32.mrb[0].mxu0
      %v540 = vpop.f32.mrb[0].mxu0
      %v541 = vadd.f32 %v277, %v540
      %v542 = vpop.f32.mrb[0].mxu0
      %543 = vmatprep.mubr.bf16.mxu0 0
      %544 = vmatmul.mubr.bf16.gmra.mrb[0].mxu0 %v354
      %v545 = vpop.f32.mrb[0].mxu0
      %v546 = vadd.f32 %v277, %v545
      %v547 = vpop.f32.mrb[0].mxu0
      %v548 = vpop.f32.mrb[0].mxu0
      %v549 = vadd.f32 %v277, %v548
      %v550 = vpop.f32.mrb[0].mxu0
      %551 = vmatprep.mubr.bf16.mxu0 0
      %552 = vmatmul.mubr.bf16.gmra.mrb[0].mxu0 %v355
      %v553 = vpop.f32.mrb[0].mxu0
      %v554 = vadd.f32 %v277, %v553
      %v555 = vpop.f32.mrb[0].mxu0
      %v556 = vpop.f32.mrb[0].mxu0
      %v557 = vadd.f32 %v277, %v556
      %v558 = vpop.f32.mrb[0].mxu0
      %559 = vmatprep.mubr.bf16.mxu0 0
      %560 = vmatmul.mubr.bf16.gmra.mrb[0].mxu0 %v356
      %v561 = vpop.f32.mrb[0].mxu0
      %v562 = vadd.f32 %v277, %v561
      %v563 = vpop.f32.mrb[0].mxu0
      %v564 = vpop.f32.mrb[0].mxu0
      %v565 = vadd.f32 %v277, %v564
      %v566 = vpop.f32.mrb[0].mxu0
      %567 = vmatprep.mubr.bf16.mxu0 0
      %568 = vmatmul.mubr.bf16.gmra.mrb[0].mxu0 %v357
      %v569 = vpop.f32.mrb[0].mxu0
      %v570 = vadd.f32 %v277, %v569
      %v571 = vpop.f32.mrb[0].mxu0
      %v572 = vpop.f32.mrb[0].mxu0
      %v573 = vadd.f32 %v277, %v572
      %v574 = vpop.f32.mrb[0].mxu0
      %575 = vmatprep.mubr.bf16.mxu0 0
      %576 = vmatmul.mubr.bf16.gmra.mrb[0].mxu0 %v358
      %v577 = vpop.f32.mrb[0].mxu0
      %v578 = vadd.f32 %v277, %v577
      %v579 = vpop.f32.mrb[0].mxu0
      %v580 = vpop.f32.mrb[0].mxu0
      %v581 = vadd.f32 %v277, %v580
      %v582 = vpop.f32.mrb[0].mxu0
      %583 = vdwg.mxu0
      %v584 = vld [vmem:[%s215] sm:$0xf]
      %v585 = vld [vmem:[%s215 + $0x4] sm:$0xf]
      %v586 = vld [vmem:[%s215 + $0x8] sm:$0xf]
      %v587 = vld [vmem:[%s215 + $0xc] sm:$0xf]
      %v588 = vld [vmem:[%s215 + $0x10] sm:$0xf]
      %v589 = vld [vmem:[%s215 + $0x14] sm:$0xf]
      %v590 = vld [vmem:[%s215 + $0x18] sm:$0xf]
      %v591 = vld [vmem:[%s215 + $0x1c] sm:$0xf]
      %v592 = vld [vmem:[%s215 + $0x20] sm:$0xf]
      %v593 = vld [vmem:[%s215 + $0x24] sm:$0xf]
      %v594 = vld [vmem:[%s215 + $0x28] sm:$0xf]
      %v595 = vld [vmem:[%s215 + $0x2c] sm:$0xf]
      %v596 = vld [vmem:[%s215 + $0x30] sm:$0xf]
      %v597 = vld [vmem:[%s215 + $0x34] sm:$0xf]
      %v598 = vld [vmem:[%s215 + $0x38] sm:$0xf]
      %v599 = vld [vmem:[%s215 + $0x3c] sm:$0xf]
      %v600 = vld [vmem:[%s215 + $0x40] sm:$0xf]
      %v601 = vld [vmem:[%s215 + $0x44] sm:$0xf]
      %v602 = vld [vmem:[%s215 + $0x48] sm:$0xf]
      %v603 = vld [vmem:[%s215 + $0x4c] sm:$0xf]
      %v604 = vld [vmem:[%s215 + $0x50] sm:$0xf]
      %v605 = vld [vmem:[%s215 + $0x54] sm:$0xf]
      %v606 = vld [vmem:[%s215 + $0x58] sm:$0xf]
      %v607 = vld [vmem:[%s215 + $0x5c] sm:$0xf]
      %v608 = vld [vmem:[%s215 + $0x60] sm:$0xf]
      %v609 = vld [vmem:[%s215 + $0x64] sm:$0xf]
      %v610 = vld [vmem:[%s215 + $0x68] sm:$0xf]
      %v611 = vld [vmem:[%s215 + $0x6c] sm:$0xf]
      %v612 = vld [vmem:[%s215 + $0x70] sm:$0xf]
      %v613 = vld [vmem:[%s215 + $0x74] sm:$0xf]
      %v614 = vld [vmem:[%s215 + $0x78] sm:$0xf]
      %v615 = vld [vmem:[%s215 + $0x7c] sm:$0xf]
      %v616 = vunpack.c.l.bf16 %v584
      %v617 = vunpack.c.l.bf16 %v585
      %v618 = vunpack.c.l.bf16 %v586
      %v619 = vunpack.c.l.bf16 %v587
      %v620 = vunpack.c.l.bf16 %v588
      %v621 = vunpack.c.l.bf16 %v589
      %v622 = vunpack.c.l.bf16 %v590
      %v623 = vunpack.c.l.bf16 %v591
      %v624 = vunpack.c.l.bf16 %v592
      %v625 = vunpack.c.l.bf16 %v593
      %v626 = vunpack.c.l.bf16 %v594
      %v627 = vunpack.c.l.bf16 %v595
      %v628 = vunpack.c.l.bf16 %v596
      %v629 = vunpack.c.l.bf16 %v597
      %v630 = vunpack.c.l.bf16 %v598
      %v631 = vunpack.c.l.bf16 %v599
      %v632 = vunpack.c.l.bf16 %v600
      %v633 = vunpack.c.l.bf16 %v601
      %v634 = vunpack.c.l.bf16 %v602
      %v635 = vunpack.c.l.bf16 %v603
      %v636 = vunpack.c.l.bf16 %v604
      %v637 = vunpack.c.l.bf16 %v605
      %v638 = vunpack.c.l.bf16 %v606
      %v639 = vunpack.c.l.bf16 %v607
      %v640 = vunpack.c.l.bf16 %v608
      %v641 = vunpack.c.l.bf16 %v609
      %v642 = vunpack.c.l.bf16 %v610
      %v643 = vunpack.c.l.bf16 %v611
      %v644 = vunpack.c.l.bf16 %v612
      %v645 = vunpack.c.l.bf16 %v613
      %v646 = vunpack.c.l.bf16 %v614
      %v647 = vunpack.c.l.bf16 %v615
      %v648 = vadd.f32 %v458, %v616
      %v649 = vadd.f32 %v461, %v617
      %v650 = vadd.f32 %v466, %v618
      %v651 = vadd.f32 %v469, %v619
      %v652 = vadd.f32 %v474, %v620
      %v653 = vadd.f32 %v477, %v621
      %v654 = vadd.f32 %v482, %v622
      %v655 = vadd.f32 %v485, %v623
      %v656 = vadd.f32 %v490, %v624
      %v657 = vadd.f32 %v493, %v625
      %v658 = vadd.f32 %v498, %v626
      %v659 = vadd.f32 %v501, %v627
      %v660 = vadd.f32 %v506, %v628
      %v661 = vadd.f32 %v509, %v629
      %v662 = vadd.f32 %v514, %v630
      %v663 = vadd.f32 %v517, %v631
      %v664 = vadd.f32 %v522, %v632
      %v665 = vadd.f32 %v525, %v633
      %v666 = vadd.f32 %v530, %v634
      %v667 = vadd.f32 %v533, %v635
      %v668 = vadd.f32 %v538, %v636
      %v669 = vadd.f32 %v541, %v637
      %v670 = vadd.f32 %v546, %v638
      %v671 = vadd.f32 %v549, %v639
      %v672 = vadd.f32 %v554, %v640
      %v673 = vadd.f32 %v557, %v641
      %v674 = vadd.f32 %v562, %v642
      %v675 = vadd.f32 %v565, %v643
      %v676 = vadd.f32 %v570, %v644
      %v677 = vadd.f32 %v573, %v645
      %v678 = vadd.f32 %v578, %v646
      %v679 = vadd.f32 %v581, %v647
      %v680 = vmax.f32 %v648, 0.0
      %v681 = vmax.f32 %v649, 0.0
      %v682 = vmax.f32 %v650, 0.0
      %v683 = vmax.f32 %v651, 0.0
      %v684 = vmax.f32 %v652, 0.0
      %v685 = vmax.f32 %v653, 0.0
      %v686 = vmax.f32 %v654, 0.0
      %v687 = vmax.f32 %v655, 0.0
      %v688 = vmax.f32 %v656, 0.0
      %v689 = vmax.f32 %v657, 0.0
      %v690 = vmax.f32 %v658, 0.0
      %v691 = vmax.f32 %v659, 0.0
      %v692 = vmax.f32 %v660, 0.0
      %v693 = vmax.f32 %v661, 0.0
      %v694 = vmax.f32 %v662, 0.0
      %v695 = vmax.f32 %v663, 0.0
      %v696 = vmax.f32 %v664, 0.0
      %v697 = vmax.f32 %v665, 0.0
      %v698 = vmax.f32 %v666, 0.0
      %v699 = vmax.f32 %v667, 0.0
      %v700 = vmax.f32 %v668, 0.0
      %v701 = vmax.f32 %v669, 0.0
      %v702 = vmax.f32 %v670, 0.0
      %v703 = vmax.f32 %v671, 0.0
      %v704 = vmax.f32 %v672, 0.0
      %v705 = vmax.f32 %v673, 0.0
      %v706 = vmax.f32 %v674, 0.0
      %v707 = vmax.f32 %v675, 0.0
      %v708 = vmax.f32 %v676, 0.0
      %v709 = vmax.f32 %v677, 0.0
      %v710 = vmax.f32 %v678, 0.0
      %v711 = vmax.f32 %v679, 0.0
      %712 = vst [vmem:[%s221] sm:$0xff] %v680
      %713 = vst [vmem:[%s221 + $0x8] sm:$0xff] %v681
      %714 = vst [vmem:[%s221 + $0x10] sm:$0xff] %v682
      %715 = vst [vmem:[%s221 + $0x18] sm:$0xff] %v683
      %716 = vst [vmem:[%s221 + $0x20] sm:$0xff] %v684
      %717 = vst [vmem:[%s221 + $0x28] sm:$0xff] %v685
      %718 = vst [vmem:[%s221 + $0x30] sm:$0xff] %v686
      %719 = vst [vmem:[%s221 + $0x38] sm:$0xff] %v687
      %720 = vst [vmem:[%s221 + $0x40] sm:$0xff] %v688
      %721 = vst [vmem:[%s221 + $0x48] sm:$0xff] %v689
      %722 = vst [vmem:[%s221 + $0x50] sm:$0xff] %v690
      %723 = vst [vmem:[%s221 + $0x58] sm:$0xff] %v691
      %724 = vst [vmem:[%s221 + $0x60] sm:$0xff] %v692
      %725 = vst [vmem:[%s221 + $0x68] sm:$0xff] %v693
      %726 = vst [vmem:[%s221 + $0x70] sm:$0xff] %v694
      %727 = vst [vmem:[%s221 + $0x78] sm:$0xff] %v695
      %728 = vst [vmem:[%s221 + $0x80] sm:$0xff] %v696
      %729 = vst [vmem:[%s221 + $0x88] sm:$0xff] %v697
      %730 = vst [vmem:[%s221 + $0x90] sm:$0xff] %v698
      %731 = vst [vmem:[%s221 + $0x98] sm:$0xff] %v699
      %732 = vst [vmem:[%s221 + $0xa0] sm:$0xff] %v700
      %733 = vst [vmem:[%s221 + $0xa8] sm:$0xff] %v701
      %734 = vst [vmem:[%s221 + $0xb0] sm:$0xff] %v702
      %735 = vst [vmem:[%s221 + $0xb8] sm:$0xff] %v703
      %736 = vst [vmem:[%s221 + $0xc0] sm:$0xff] %v704
      %737 = vst [vmem:[%s221 + $0xc8] sm:$0xff] %v705
      %738 = vst [vmem:[%s221 + $0xd0] sm:$0xff] %v706
      %739 = vst [vmem:[%s221 + $0xd8] sm:$0xff] %v707
      %740 = vst [vmem:[%s221 + $0xe0] sm:$0xff] %v708
      %741 = vst [vmem:[%s221 + $0xe8] sm:$0xff] %v709
      %742 = vst [vmem:[%s221 + $0xf0] sm:$0xff] %v710
      %743 = vst [vmem:[%s221 + $0xf8] sm:$0xff] %v711
      %s744 = smul.u32 32, %s15
      %p745 = scmp.lt.s32.totalorder %s744, 63
      %s746 = scalar_select %p745, %s744, 63
      %s747 = smul.addr %s746, 8
      %s748 = scalar_lea.vmem %s4, %s747
      // Predicated region
      $region37: #{bottleneck_forward.5} parent=35 // pred_check
        %p749 = pneg %p127
      $region38: #{bottleneck_forward.5} parent=35 // pred_check_branch
        %751 = sbr.rel (%p749) target = $region40
      $region39: #{bottleneck_forward.5} parent=35 // pred_region
        %s752 = smul.u32 32, %s15
      $region40: #{bottleneck_forward.5} parent=35 // pred_fallthru
        _
    $region36: #{bottleneck_forward.5} parent=5 // pred_fallthru
      _
    %p753 = scmp.le.s32.totalorder 2, %s10
    // Predicated region
    $region41: #{bottleneck_forward.5} parent=5 // pred_check
      %p754 = pneg %p753
    $region42: #{bottleneck_forward.5} parent=5 // pred_check_branch
      %756 = sbr.rel (%p754) target = $region44
    $region43: #{bottleneck_forward.5} parent=5 // pred_region
      %s757 = ssub.s32 %s10, 2
      // Predicated region
      $region45: #{bottleneck_forward.5} parent=43 // pred_check
        %p758 = pneg %p133
      $region46: #{bottleneck_forward.5} parent=43 // pred_check_branch
        %760 = sbr.rel (%p758) target = $region48
      $region47: #{bottleneck_forward.5} parent=43 // pred_region
        %s761 = smul.u32 32, %s16
        %p762 = scmp.lt.s32.totalorder %s761, 63
        %s763 = scalar_select %p762, %s761, 63
        %s764 = smul.addr %s763, 8
        %s765 = scalar_lea.vmem %s4, %s764
      $region48: #{bottleneck_forward.5} parent=43 // pred_fallthru
        _
    $region44: #{bottleneck_forward.5} parent=5 // pred_fallthru
      _
  $region6: #{bottleneck_forward.5} parent=0 // loop_footer
    %s14 = sadd.s32 1, %s10
  $region7: #{bottleneck_forward.5} parent=0 // loop_footer_branch
    %9 = sbr.rel target = $region3
  $region8: #{bottleneck_forward.5} parent=0 // loop_exit
    _

// kernel: bottleneck_forward.4
$region0: #{bottleneck_forward.4}
  #allocation0 [shape = 'u32[]', space=smem, size = 0x4, offset = 0x4, fixed_abs, tag = 'smem constant byte address 0x4 - core index']
  #allocation1 [shape = 'u32[144,128]{1,0:T(1,128)}', space=vmem, size = 0x12000, scoped, tag = 'internal scratch']
  %s0 = inlined_call_operand.vmem [shape: bf16[2,326,128], index: 0, kind: input, shape index: {}]
  %s1 = inlined_call_operand.vmem [shape: bf16[1152,128], index: 1, kind: input, shape index: {}]
  %s2 = inlined_call_operand.vmem [shape: f32[1,128], index: 2, kind: input, shape index: {}]
  %s3 = inlined_call_operand.vmem [shape: bf16[2,288,128], index: 3, kind: output, shape index: {}]
  %s4 = sld [smem:[#allocation0]]
  $region45: #{bottleneck_forward.4} parent=0
    _
  %s6 = ssub.s32 1, %s4
  %s7 = scalar_select 0, %s6, %s4
  loop: start=0, step=1, limit=4
  $region2: #{bottleneck_forward.4} parent=0 // loop_pre_header
    _
  $region3: #{bottleneck_forward.4} parent=0 // loop_header
    %s9 = sphi 0, %s13
    %p10 = scmp.ge.s32.totalorder %s9, 4
    %s19 = sphi 0, %s21
    %s22 = sphi 0, %s19
    %s23 = sphi 0, %s22
    %s39 = sphi 0, %s23
    %s43 = sphi 0, %s43
    %s45 = sphi 0, %s43
    %s46 = sphi 0, %s45
    %s60 = sphi 0, %s46
    %s64 = sphi 0, %s64
    %s66 = sphi 0, %s64
    %s67 = sphi 0, %s66
    %s81 = sphi 0, %s67
    %s87 = sphi 0, %s89
    %s90 = sphi 0, %s87
    %s91 = sphi 0, %s90
    %s107 = sphi 0, %s91
  $region4: #{bottleneck_forward.4} parent=0 // loop_header_branch
    %12 = sbr.rel (%p10) target = $region8
  $region5: #{bottleneck_forward.4} parent=0 // loop_body
    %s14 = ssub.s32 %s9, 1
    %s15 = ssub.s32 %s9, 2
    %s16 = sadd.s32 %s9, 1
    %s17 = ssub.s32 %s9, %s16
    %p18 = scmp.eq.s32.totalorder %s17, 0
    %s20 = sadd.s32 %s19, 1
    %s21 = scalar_select %p18, %s19, %s20
    %p24 = pneg %p18
    %p25 = scmp.eq.s32.totalorder %s9, 1
    %p26 = por %p24, %p25
    %p27 = scmp.ne.s32.totalorder %s19, %s22
    %p28 = scmp.eq.s32.totalorder %s9, 0
    %p29 = por %p27, %p28
    %p30 = scmp.ne.s32.totalorder %s19, %s22
    %p31 = scmp.eq.s32.totalorder %s14, 1
    %p32 = por %p30, %p31
    %p33 = scmp.ne.s32.totalorder %s22, %s23
    %p34 = scmp.eq.s32.totalorder %s14, 0
    %p35 = por %p33, %p34
    %p36 = scmp.ne.s32.totalorder %s22, %s23
    %p37 = scmp.eq.s32.totalorder %s15, 1
    %p38 = por %p36, %p37
    %p40 = scmp.ne.s32.totalorder %s23, %s39
    %p41 = scmp.eq.s32.totalorder %s15, 0
    %p42 = por %p40, %p41
    %s44 = sadd.s32 %s43, 1
    %p47 = scmp.eq.s32.totalorder %s9, 1
    %p48 = scmp.ne.s32.totalorder %s43, %s45
    %p49 = scmp.eq.s32.totalorder %s9, 0
    %p50 = por %p48, %p49
    %p51 = scmp.ne.s32.totalorder %s43, %s45
    %p52 = scmp.eq.s32.totalorder %s14, 1
    %p53 = por %p51, %p52
    %p54 = scmp.ne.s32.totalorder %s45, %s46
    %p55 = scmp.eq.s32.totalorder %s14, 0
    %p56 = por %p54, %p55
    %p57 = scmp.ne.s32.totalorder %s45, %s46
    %p58 = scmp.eq.s32.totalorder %s15, 1
    %p59 = por %p57, %p58
    %p61 = scmp.ne.s32.totalorder %s46, %s60
    %p62 = scmp.eq.s32.totalorder %s15, 0
    %p63 = por %p61, %p62
    %s65 = sadd.s32 %s64, 1
    %p68 = scmp.eq.s32.totalorder %s9, 1
    %p69 = scmp.ne.s32.totalorder %s64, %s66
    %p70 = scmp.eq.s32.totalorder %s9, 0
    %p71 = por %p69, %p70
    %p72 = scmp.ne.s32.totalorder %s64, %s66
    %p73 = scmp.eq.s32.totalorder %s14, 1
    %p74 = por %p72, %p73
    %p75 = scmp.ne.s32.totalorder %s66, %s67
    %p76 = scmp.eq.s32.totalorder %s14, 0
    %p77 = por %p75, %p76
    %p78 = scmp.ne.s32.totalorder %s66, %s67
    %p79 = scmp.eq.s32.totalorder %s15, 1
    %p80 = por %p78, %p79
    %p82 = scmp.ne.s32.totalorder %s67, %s81
    %p83 = scmp.eq.s32.totalorder %s15, 0
    %p84 = por %p82, %p83
    %s85 = ssub.s32 %s9, %s16
    %p86 = scmp.eq.s32.totalorder %s85, 0
    %s88 = sadd.s32 %s87, 1
    %s89 = scalar_select %p86, %s87, %s88
    %p92 = pneg %p86
    %p93 = scmp.eq.s32.totalorder %s9, 1
    %p94 = por %p92, %p93
    %p95 = scmp.ne.s32.totalorder %s87, %s90
    %p96 = scmp.eq.s32.totalorder %s9, 0
    %p97 = por %p95, %p96
    %p98 = scmp.ne.s32.totalorder %s87, %s90
    %p99 = scmp.eq.s32.totalorder %s14, 1
    %p100 = por %p98, %p99
    %p101 = scmp.ne.s32.totalorder %s90, %s91
    %p102 = scmp.eq.s32.totalorder %s14, 0
    %p103 = por %p101, %p102
    %p104 = scmp.ne.s32.totalorder %s90, %s91
    %p105 = scmp.eq.s32.totalorder %s15, 1
    %p106 = por %p104, %p105
    %p108 = scmp.ne.s32.totalorder %s91, %s107
    %p109 = scmp.eq.s32.totalorder %s15, 0
    %p110 = por %p108, %p109
    %p111 = scmp.le.s32.totalorder 1, %s9
    %p112 = scmp.lt.s32.totalorder %s9, 3
    %p113 = pnand %p111, %p112
    %p114 = pneg %p113
    // Predicated region
    $region9: #{bottleneck_forward.4} parent=5 // pred_check
      _
    $region10: #{bottleneck_forward.4} parent=5 // pred_check_branch
      %116 = sbr.rel (%p113) target = $region12
    $region11: #{bottleneck_forward.4} parent=5 // pred_region
      %s117 = ssub.s32 %s9, 1
      // Predicated region
      $region13: #{bottleneck_forward.4} parent=11 // pred_check
        %p118 = pneg %p56
      $region14: #{bottleneck_forward.4} parent=11 // pred_check_branch
        %120 = sbr.rel (%p118) target = $region16
      $region15: #{bottleneck_forward.4} parent=11 // pred_region
        _
      $region16: #{bottleneck_forward.4} parent=11 // pred_fallthru
        _
      // Predicated region
      $region17: #{bottleneck_forward.4} parent=11 // pred_check
        %p121 = pneg %p77
      $region18: #{bottleneck_forward.4} parent=11 // pred_check_branch
        %123 = sbr.rel (%p121) target = $region20
      $region19: #{bottleneck_forward.4} parent=11 // pred_region
        _
      $region20: #{bottleneck_forward.4} parent=11 // pred_fallthru
        _
    $region12: #{bottleneck_forward.4} parent=5 // pred_fallthru
      _
    %p124 = scmp.lt.s32.totalorder %s9, 2
    // Predicated region
    $region21: #{bottleneck_forward.4} parent=5 // pred_check
      %p125 = pneg %p124
    $region22: #{bottleneck_forward.4} parent=5 // pred_check_branch
      %127 = sbr.rel (%p125) target = $region24
    $region23: #{bottleneck_forward.4} parent=5 // pred_region
      // Predicated region
      $region25: #{bottleneck_forward.4} parent=23 // pred_check
        %p128 = pneg %p29
      $region26: #{bottleneck_forward.4} parent=23 // pred_check_branch
        %130 = sbr.rel (%p128) target = $region28
      $region27: #{bottleneck_forward.4} parent=23 // pred_region
        %p131 = scmp.lt.s32.totalorder %s9, 1
        %s132 = scalar_select %p131, %s9, 1
        %s133 = smul.addr %s132, 41
        %s134 = smul.addr %s133, 4
        %s135 = scalar_lea.vmem %s0, %s134
      $region28: #{bottleneck_forward.4} parent=23 // pred_fallthru
        _
    $region24: #{bottleneck_forward.4} parent=5 // pred_fallthru
      _
    %p136 = scmp.le.s32.totalorder 1, %s9
    %p137 = scmp.lt.s32.totalorder %s9, 3
    %p138 = pnand %p136, %p137
    %p139 = pneg %p138
    // Predicated region
    $region29: #{bottleneck_forward.4} parent=5 // pred_check
      _
    $region30: #{bottleneck_forward.4} parent=5 // pred_check_branch
      %141 = sbr.rel (%p138) target = $region32
    $region31: #{bottleneck_forward.4} parent=5 // pred_region
      %s142 = ssub.s32 %s9, 1
      %p143 = scmp.lt.s32.totalorder %s14, 1
      %s144 = scalar_select %p143, %s14, 1
      %s145 = smul.addr %s144, 41
      %s146 = smul.addr %s145, 4
      %s147 = scalar_lea.vmem %s0, %s146
      %p148 = pneg %p35
      %p149 = pneg %p32
      %p150 = pneg %p56
      %p151 = pneg %p53
      %p152 = pneg %p77
      %p153 = pneg %p74
      %p154 = pneg %p103
      %p155 = pneg %p100
      %p156 = scmp.lt.s32.totalorder %s14, 1
      %s157 = scalar_select %p156, %s14, 1
      %s158 = smul.addr %s157, 36
      %s159 = smul.addr %s158, 4
      %s160 = scalar_lea.vmem %s3, %s159
      %p161 = scmp.lt.s32.totalorder %s14, 1
      %s162 = scalar_select %p161, %s14, 1
      %s163 = smul.addr %s162, 41
      %s164 = smul.addr %s163, 4
      %s165 = scalar_lea.vmem %s0, %s164
      %p166 = scmp.lt.s32.totalorder %s14, 1
      %s167 = scalar_select %p166, %s14, 1
      %s168 = smul.addr %s167, 36
      %s169 = smul.addr %s168, 4
      %s170 = scalar_lea.vmem %s3, %s169
      %v172 = vld [vmem:[%s165] sm:$0xf]
      %v173 = vld [vmem:[%s165 + $0x4] sm:$0xf]
      %v174 = vld [vmem:[%s165 + $0x8] sm:$0xf]
      %v175 = vld [vmem:[%s165 + $0xc] sm:$0xf]
      %v176 = vld [vmem:[%s165 + $0x10] sm:$0xf]
      %v177 = vld [vmem:[%s165 + $0x14] sm:$0xf]
      %v178 = vld [vmem:[%s165 + $0x18] sm:$0xf]
      %v179 = vld [vmem:[%s165 + $0x1c] sm:$0xf]
      %v180 = vld [vmem:[%s165 + $0x20] sm:$0xf]
      %v181 = vld [vmem:[%s165 + $0x24] sm:$0xf]
      %v182 = vld [vmem:[%s165 + $0x28] sm:$0xf]
      %v183 = vld [vmem:[%s165 + $0x2c] sm:$0xf]
      %v184 = vld [vmem:[%s165 + $0x30] sm:$0xf]
      %v185 = vld [vmem:[%s165 + $0x34] sm:$0xf]
      %v186 = vld [vmem:[%s165 + $0x38] sm:$0xf]
      %v187 = vld [vmem:[%s165 + $0x3c] sm:$0xf]
      %v188 = vld [vmem:[%s165 + $0x40] sm:$0xf]
      %v189 = vld [vmem:[%s165 + $0x44] sm:$0xf]
      %v190 = vld [vmem:[%s165 + $0x48] sm:$0xf]
      %v191 = vld [vmem:[%s165 + $0x4c] sm:$0xf]
      %v192 = vld [vmem:[%s165 + $0x50] sm:$0xf]
      %v193 = vld [vmem:[%s165 + $0x54] sm:$0xf]
      %v194 = vld [vmem:[%s165 + $0x58] sm:$0xf]
      %v195 = vld [vmem:[%s165 + $0x5c] sm:$0xf]
      %v196 = vld [vmem:[%s165 + $0x60] sm:$0xf]
      %v197 = vld [vmem:[%s165 + $0x64] sm:$0xf]
      %v198 = vld [vmem:[%s165 + $0x68] sm:$0xf]
      %v199 = vld [vmem:[%s165 + $0x6c] sm:$0xf]
      %v200 = vld [vmem:[%s165 + $0x70] sm:$0xf]
      %v201 = vld [vmem:[%s165 + $0x74] sm:$0xf]
      %v202 = vld [vmem:[%s165 + $0x78] sm:$0xf]
      %v203 = vld [vmem:[%s165 + $0x7c] sm:$0xf]
      %v204 = vld [vmem:[%s165 + $0x80] sm:$0xf]
      %v205 = vld [vmem:[%s165 + $0x84] sm:$0xf]
      %v206 = vld [vmem:[%s165 + $0x88] sm:$0xf]
      %v207 = vld [vmem:[%s165 + $0x8c] sm:$0xf]
      %v208 = vld [vmem:[%s1] sm:$0xf]
      %v209 = vld [vmem:[%s1 + $0x4] sm:$0xf]
      %v210 = vld [vmem:[%s1 + $0x8] sm:$0xf]
      %v211 = vld [vmem:[%s1 + $0xc] sm:$0xf]
      %v212 = vld [vmem:[%s1 + $0x10] sm:$0xf]
      %v213 = vld [vmem:[%s1 + $0x14] sm:$0xf]
      %v214 = vld [vmem:[%s1 + $0x18] sm:$0xf]
      %v215 = vld [vmem:[%s1 + $0x1c] sm:$0xf]
      %v216 = vld [vmem:[%s1 + $0x20] sm:$0xf]
      %v217 = vld [vmem:[%s1 + $0x24] sm:$0xf]
      %v218 = vld [vmem:[%s1 + $0x28] sm:$0xf]
      %v219 = vld [vmem:[%s1 + $0x2c] sm:$0xf]
      %v220 = vld [vmem:[%s1 + $0x30] sm:$0xf]
      %v221 = vld [vmem:[%s1 + $0x34] sm:$0xf]
      %v222 = vld [vmem:[%s1 + $0x38] sm:$0xf]
      %v223 = vld [vmem:[%s1 + $0x3c] sm:$0xf]
      %v224 = vld [vmem:[%s165 + $0x90] sm:$0x1]
      %v225 = vld [vmem:[%s1 + $0x40] sm:$0xf]
      %v226 = vld [vmem:[%s1 + $0x44] sm:$0xf]
      %v227 = vld [vmem:[%s1 + $0x48] sm:$0xf]
      %v228 = vld [vmem:[%s1 + $0x4c] sm:$0xf]
      %v229 = vld [vmem:[%s1 + $0x50] sm:$0xf]
      %v230 = vld [vmem:[%s1 + $0x54] sm:$0xf]
      %v231 = vld [vmem:[%s1 + $0x58] sm:$0xf]
      %v232 = vld [vmem:[%s1 + $0x5c] sm:$0xf]
      %v233 = vld [vmem:[%s1 + $0x60] sm:$0xf]
      %v234 = vld [vmem:[%s1 + $0x64] sm:$0xf]
      %v235 = vld [vmem:[%s1 + $0x68] sm:$0xf]
      %v236 = vld [vmem:[%s1 + $0x6c] sm:$0xf]
      %v237 = vld [vmem:[%s1 + $0x70] sm:$0xf]
      %v238 = vld [vmem:[%s1 + $0x74] sm:$0xf]
      %v239 = vld [vmem:[%s1 + $0x78] sm:$0xf]
      %v240 = vld [vmem:[%s1 + $0x7c] sm:$0xf]
      %v278 = vunpack.c.l.b16 %v172
      %v279 = vunpack.c.l.b16 %v173
      %v280 = vunpack.c.l.b16 %v174
      %v281 = vunpack.c.l.b16 %v175
      %v282 = vunpack.c.l.b16 %v176
      %v283 = vunpack.c.l.b16 %v177
      %v284 = vunpack.c.l.b16 %v178
      %v285 = vunpack.c.l.b16 %v179
      %v286 = vunpack.c.l.b16 %v180
      %v287 = vunpack.c.l.b16 %v181
      %v288 = vunpack.c.l.b16 %v182
      %v289 = vunpack.c.l.b16 %v183
      %v290 = vunpack.c.l.b16 %v184
      %v291 = vunpack.c.l.b16 %v185
      %v292 = vunpack.c.l.b16 %v186
      %v293 = vunpack.c.l.b16 %v187
      %v294 = vunpack.c.l.b16 %v188
      %v295 = vunpack.c.l.b16 %v189
      %v296 = vunpack.c.l.b16 %v190
      %v297 = vunpack.c.l.b16 %v191
      %v298 = vunpack.c.l.b16 %v192
      %v299 = vunpack.c.l.b16 %v193
      %v300 = vunpack.c.l.b16 %v194
      %v301 = vunpack.c.l.b16 %v195
      %v302 = vunpack.c.l.b16 %v196
      %v303 = vunpack.c.l.b16 %v197
      %v304 = vunpack.c.l.b16 %v198
      %v305 = vunpack.c.l.b16 %v199
      %v306 = vunpack.c.l.b16 %v200
      %v307 = vunpack.c.l.b16 %v201
      %v308 = vunpack.c.l.b16 %v202
      %v309 = vunpack.c.l.b16 %v203
      %v310 = vunpack.c.l.b16 %v204
      %v311 = vunpack.c.l.b16 %v205
      %v312 = vunpack.c.l.b16 %v206
      %v313 = vunpack.c.l.b16 %v207
      %v314 = vunpack.c.l.b16 %v224
      %v315 = vpack.c.b16 %v279, %v278
      %v316 = vpack.c.b16 %v281, %v280
      %v317 = vpack.c.b16 %v283, %v282
      %v318 = vpack.c.b16 %v285, %v284
      %v319 = vpack.c.b16 %v287, %v286
      %v320 = vpack.c.b16 %v289, %v288
      %v321 = vpack.c.b16 %v291, %v290
      %v322 = vpack.c.b16 %v293, %v292
      %v323 = vpack.c.b16 %v295, %v294
      %v324 = vpack.c.b16 %v297, %v296
      %v325 = vpack.c.b16 %v299, %v298
      %v326 = vpack.c.b16 %v301, %v300
      %v327 = vpack.c.b16 %v303, %v302
      %v328 = vpack.c.b16 %v305, %v304
      %v329 = vpack.c.b16 %v307, %v306
      %v330 = vpack.c.b16 %v309, %v308
      %v331 = vpack.c.b16 %v311, %v310
      %v332 = vpack.c.b16 %v313, %v312
      %v333 = vpack.c.b16 %v314, %v314
      %vm334 = vsmask.f32 7424
      %v336 = vshrl.u32 %v315, 16
      %v338 = vshll.u32 %v315, 16
      %v340 = vrot.slane %v338, 1
      %v341 = vor.u32 %v336, %v340
      %v343 = vshll.u32 %v316, 16
      %v345 = vrot.slane %v343, 1
      %v346 = vsel %vm334, %v341, %v345
      %v347 = vshrl.u32 %v316, 16
      %v349 = vor.u32 %v347, %v345
      %v351 = vshll.u32 %v317, 16
      %v353 = vrot.slane %v351, 1
      %v354 = vsel %vm334, %v349, %v353
      %v355 = vshrl.u32 %v317, 16
      %v357 = vor.u32 %v355, %v353
      %v359 = vshll.u32 %v318, 16
      %v361 = vrot.slane %v359, 1
      %v362 = vsel %vm334, %v357, %v361
      %v363 = vshrl.u32 %v318, 16
      %v365 = vor.u32 %v363, %v361
      %v367 = vshll.u32 %v319, 16
      %v369 = vrot.slane %v367, 1
      %v370 = vsel %vm334, %v365, %v369
      %v371 = vshrl.u32 %v319, 16
      %v373 = vor.u32 %v371, %v369
      %v375 = vshll.u32 %v320, 16
      %v377 = vrot.slane %v375, 1
      %v378 = vsel %vm334, %v373, %v377
      %v379 = vshrl.u32 %v320, 16
      %v381 = vor.u32 %v379, %v377
      %v383 = vshll.u32 %v321, 16
      %v385 = vrot.slane %v383, 1
      %v386 = vsel %vm334, %v381, %v385
      %v387 = vshrl.u32 %v321, 16
      %v389 = vor.u32 %v387, %v385
      %v391 = vshll.u32 %v322, 16
      %v393 = vrot.slane %v391, 1
      %v394 = vsel %vm334, %v389, %v393
      %v395 = vshrl.u32 %v322, 16
      %v397 = vor.u32 %v395, %v393
      %v399 = vshll.u32 %v323, 16
      %v401 = vrot.slane %v399, 1
      %v402 = vsel %vm334, %v397, %v401
      %v403 = vshrl.u32 %v323, 16
      %v405 = vor.u32 %v403, %v401
      %v407 = vshll.u32 %v324, 16
      %v409 = vrot.slane %v407, 1
      %v410 = vsel %vm334, %v405, %v409
      %v411 = vshrl.u32 %v324, 16
      %v413 = vor.u32 %v411, %v409
      %v415 = vshll.u32 %v325, 16
      %v417 = vrot.slane %v415, 1
      %v418 = vsel %vm334, %v413, %v417
      %v419 = vshrl.u32 %v325, 16
      %v421 = vor.u32 %v419, %v417
      %v423 = vshll.u32 %v326, 16
      %v425 = vrot.slane %v423, 1
      %v426 = vsel %vm334, %v421, %v425
      %v427 = vshrl.u32 %v326, 16
      %v429 = vor.u32 %v427, %v425
      %v431 = vshll.u32 %v327, 16
      %v433 = vrot.slane %v431, 1
      %v434 = vsel %vm334, %v429, %v433
      %v435 = vshrl.u32 %v327, 16
      %v437 = vor.u32 %v435, %v433
      %v439 = vshll.u32 %v328, 16
      %v441 = vrot.slane %v439, 1
      %v442 = vsel %vm334, %v437, %v441
      %v443 = vshrl.u32 %v328, 16
      %v445 = vor.u32 %v443, %v441
      %v447 = vshll.u32 %v329, 16
      %v449 = vrot.slane %v447, 1
      %v450 = vsel %vm334, %v445, %v449
      %v451 = vshrl.u32 %v329, 16
      %v453 = vor.u32 %v451, %v449
      %v455 = vshll.u32 %v330, 16
      %v457 = vrot.slane %v455, 1
      %v458 = vsel %vm334, %v453, %v457
      %v459 = vshrl.u32 %v330, 16
      %v461 = vor.u32 %v459, %v457
      %v463 = vshll.u32 %v331, 16
      %v465 = vrot.slane %v463, 1
      %v466 = vsel %vm334, %v461, %v465
      %v467 = vshrl.u32 %v331, 16
      %v469 = vor.u32 %v467, %v465
      %v471 = vshll.u32 %v332, 16
      %v473 = vrot.slane %v471, 1
      %v474 = vsel %vm334, %v469, %v473
      %v475 = vshrl.u32 %v332, 16
      %v477 = vor.u32 %v475, %v473
      %v479 = vshll.u32 %v333, 16
      %v481 = vrot.slane %v479, 1
      %v482 = vsel %vm334, %v477, %v481
      %v517 = vunpack.c.l.b16 %v225
      %v518 = vunpack.c.l.b16 %v226
      %v519 = vunpack.c.l.b16 %v227
      %v520 = vunpack.c.l.b16 %v228
      %v521 = vunpack.c.l.b16 %v229
      %v522 = vunpack.c.l.b16 %v230
      %v523 = vunpack.c.l.b16 %v231
      %v524 = vunpack.c.l.b16 %v232
      %v525 = vunpack.c.l.b16 %v233
      %v526 = vunpack.c.l.b16 %v234
      %v527 = vunpack.c.l.b16 %v235
      %v528 = vunpack.c.l.b16 %v236
      %v529 = vunpack.c.l.b16 %v237
      %v530 = vunpack.c.l.b16 %v238
      %v531 = vunpack.c.l.b16 %v239
      %v532 = vunpack.c.l.b16 %v240
      %v533 = vpack.c.b16 %v518, %v517
      %v534 = vpack.c.b16 %v520, %v519
      %v535 = vpack.c.b16 %v522, %v521
      %v536 = vpack.c.b16 %v524, %v523
      %v537 = vpack.c.b16 %v526, %v525
      %v538 = vpack.c.b16 %v528, %v527
      %v539 = vpack.c.b16 %v530, %v529
      %v540 = vpack.c.b16 %v532, %v531
      %549 = vmatprep.subr.bf16.mxu0 0
      %550 = vmatpush1.bf16.msra.mxu0 %v533
      %551 = vmatprep.subr.bf16.mxu0 0
      %552 = vmatpush1.bf16.msra.mxu0 %v534
      %553 = vmatprep.subr.bf16.mxu0 0
      %554 = vmatpush1.bf16.msra.mxu0 %v535
      %555 = vmatprep.subr.bf16.mxu0 0
      %556 = vmatpush1.bf16.msra.mxu0 %v536
      %557 = vmatprep.subr.bf16.mxu0 0
      %558 = vmatpush1.bf16.msra.mxu0 %v537
      %559 = vmatprep.subr.bf16.mxu0 0
      %560 = vmatpush1.bf16.msra.mxu0 %v538
      %561 = vmatprep.subr.bf16.mxu0 0
      %562 = vmatpush1.bf16.msra.mxu0 %v539
      %563 = vmatprep.subr.bf16.mxu0 0
      %564 = vmatpush1.bf16.msra.mxu0 %v540
      %565 = vmatprep.subr.bf16.mxu0 0
      %566 = vmatpush1.bf16.msra.mxu0 0
      %567 = vmatprep.subr.bf16.mxu0 0
      %568 = vmatpush1.bf16.msra.mxu0 0
      %569 = vmatprep.subr.bf16.mxu0 0
      %570 = vmatpush1.bf16.msra.mxu0 0
      %571 = vmatprep.subr.bf16.mxu0 0
      %572 = vmatpush1.bf16.msra.mxu0 0
      %573 = vmatprep.subr.bf16.mxu0 0
      %574 = vmatpush1.bf16.msra.mxu0 0
      %575 = vmatprep.subr.bf16.mxu0 0
      %576 = vmatpush1.bf16.msra.mxu0 0
      %577 = vmatprep.subr.bf16.mxu0 0
      %578 = vmatpush1.bf16.msra.mxu0 0
      %579 = vmatprep.subr.bf16.mxu0 0
      %580 = vmatpush1.bf16.msra.mxu0 0
      %581 = vmatprep.mubr.bf16.mxu0 0
      %582 = vmatmul.mubr.bf16.gmra.mrb[0].mxu0 %v346
      %v583 = vpop.f32.mrb[0].mxu0
      %v584 = vadd.f32 0.0, %v583
      %v585 = vpop.f32.mrb[0].mxu0
      %v586 = vpop.f32.mrb[0].mxu0
      %v587 = vadd.f32 0.0, %v586
      %v588 = vpop.f32.mrb[0].mxu0
      %589 = vmatprep.mubr.bf16.mxu0 0
      %590 = vmatmul.mubr.bf16.gmra.mrb[0].mxu0 %v354
      %v591 = vpop.f32.mrb[0].mxu0
      %v592 = vadd.f32 0.0, %v591
      %v593 = vpop.f32.mrb[0].mxu0
      %v594 = vpop.f32.mrb[0].mxu0
      %v595 = vadd.f32 0.0, %v594
      %v596 = vpop.f32.mrb[0].mxu0
      %597 = vmatprep.mubr.bf16.mxu0 0
      %598 = vmatmul.mubr.bf16.gmra.mrb[0].mxu0 %v362
      %v599 = vpop.f32.mrb[0].mxu0
      %v600 = vadd.f32 0.0, %v599
      %v601 = vpop.f32.mrb[0].mxu0
      %v602 = vpop.f32.mrb[0].mxu0
      %v603 = vadd.f32 0.0, %v602
      %v604 = vpop.f32.mrb[0].mxu0
      %605 = vmatprep.mubr.bf16.mxu0 0
      %606 = vmatmul.mubr.bf16.gmra.mrb[0].mxu0 %v370
      %v607 = vpop.f32.mrb[0].mxu0
      %v608 = vadd.f32 0.0, %v607
      %v609 = vpop.f32.mrb[0].mxu0
      %v610 = vpop.f32.mrb[0].mxu0
      %v611 = vadd.f32 0.0, %v610
      %v612 = vpop.f32.mrb[0].mxu0
      %613 = vmatprep.mubr.bf16.mxu0 0
      %614 = vmatmul.mubr.bf16.gmra.mrb[0].mxu0 %v378
      %v615 = vpop.f32.mrb[0].mxu0
      %v616 = vadd.f32 0.0, %v615
      %v617 = vpop.f32.mrb[0].mxu0
      %v618 = vpop.f32.mrb[0].mxu0
      %v619 = vadd.f32 0.0, %v618
      %v620 = vpop.f32.mrb[0].mxu0
      %621 = vmatprep.mubr.bf16.mxu0 0
      %622 = vmatmul.mubr.bf16.gmra.mrb[0].mxu0 %v386
      %v623 = vpop.f32.mrb[0].mxu0
      %v624 = vadd.f32 0.0, %v623
      %v625 = vpop.f32.mrb[0].mxu0
      %v626 = vpop.f32.mrb[0].mxu0
      %v627 = vadd.f32 0.0, %v626
      %v628 = vpop.f32.mrb[0].mxu0
      %629 = vmatprep.mubr.bf16.mxu0 0
      %630 = vmatmul.mubr.bf16.gmra.mrb[0].mxu0 %v394
      %v631 = vpop.f32.mrb[0].mxu0
      %v632 = vadd.f32 0.0, %v631
      %v633 = vpop.f32.mrb[0].mxu0
      %v634 = vpop.f32.mrb[0].mxu0
      %v635 = vadd.f32 0.0, %v634
      %v636 = vpop.f32.mrb[0].mxu0
      %637 = vmatprep.mubr.bf16.mxu0 0
      %638 = vmatmul.mubr.bf16.gmra.mrb[0].mxu0 %v402
      %v639 = vpop.f32.mrb[0].mxu0
      %v640 = vadd.f32 0.0, %v639
      %v641 = vpop.f32.mrb[0].mxu0
      %v642 = vpop.f32.mrb[0].mxu0
      %v643 = vadd.f32 0.0, %v642
      %v644 = vpop.f32.mrb[0].mxu0
      %645 = vmatprep.mubr.bf16.mxu0 0
      %646 = vmatmul.mubr.bf16.gmra.mrb[0].mxu0 %v410
      %v647 = vpop.f32.mrb[0].mxu0
      %v648 = vadd.f32 0.0, %v647
      %v649 = vpop.f32.mrb[0].mxu0
      %v650 = vpop.f32.mrb[0].mxu0
      %v651 = vadd.f32 0.0, %v650
      %v652 = vpop.f32.mrb[0].mxu0
      %653 = vmatprep.mubr.bf16.mxu0 0
      %654 = vmatmul.mubr.bf16.gmra.mrb[0].mxu0 %v418
      %v655 = vpop.f32.mrb[0].mxu0
      %v656 = vadd.f32 0.0, %v655
      %v657 = vpop.f32.mrb[0].mxu0
      %v658 = vpop.f32.mrb[0].mxu0
      %v659 = vadd.f32 0.0, %v658
      %v660 = vpop.f32.mrb[0].mxu0
      %661 = vmatprep.mubr.bf16.mxu0 0
      %662 = vmatmul.mubr.bf16.gmra.mrb[0].mxu0 %v426
      %v663 = vpop.f32.mrb[0].mxu0
      %v664 = vadd.f32 0.0, %v663
      %v665 = vpop.f32.mrb[0].mxu0
      %v666 = vpop.f32.mrb[0].mxu0
      %v667 = vadd.f32 0.0, %v666
      %v668 = vpop.f32.mrb[0].mxu0
      %669 = vmatprep.mubr.bf16.mxu0 0
      %670 = vmatmul.mubr.bf16.gmra.mrb[0].mxu0 %v434
      %v671 = vpop.f32.mrb[0].mxu0
      %v672 = vadd.f32 0.0, %v671
      %v673 = vpop.f32.mrb[0].mxu0
      %v674 = vpop.f32.mrb[0].mxu0
      %v675 = vadd.f32 0.0, %v674
      %v676 = vpop.f32.mrb[0].mxu0
      %677 = vmatprep.mubr.bf16.mxu0 0
      %678 = vmatmul.mubr.bf16.gmra.mrb[0].mxu0 %v442
      %v679 = vpop.f32.mrb[0].mxu0
      %v680 = vadd.f32 0.0, %v679
      %v681 = vpop.f32.mrb[0].mxu0
      %v682 = vpop.f32.mrb[0].mxu0
      %v683 = vadd.f32 0.0, %v682
      %v684 = vpop.f32.mrb[0].mxu0
      %685 = vmatprep.mubr.bf16.mxu0 0
      %686 = vmatmul.mubr.bf16.gmra.mrb[0].mxu0 %v450
      %v687 = vpop.f32.mrb[0].mxu0
      %v688 = vadd.f32 0.0, %v687
      %v689 = vpop.f32.mrb[0].mxu0
      %v690 = vpop.f32.mrb[0].mxu0
      %v691 = vadd.f32 0.0, %v690
      %v692 = vpop.f32.mrb[0].mxu0
      %693 = vmatprep.mubr.bf16.mxu0 0
      %694 = vmatmul.mubr.bf16.gmra.mrb[0].mxu0 %v458
      %v695 = vpop.f32.mrb[0].mxu0
      %v696 = vadd.f32 0.0, %v695
      %v697 = vpop.f32.mrb[0].mxu0
      %v698 = vpop.f32.mrb[0].mxu0
      %v699 = vadd.f32 0.0, %v698
      %v700 = vpop.f32.mrb[0].mxu0
      %701 = vmatprep.mubr.bf16.mxu0 0
      %702 = vmatmul.mubr.bf16.gmra.mrb[0].mxu0 %v466
      %v703 = vpop.f32.mrb[0].mxu0
      %v704 = vadd.f32 0.0, %v703
      %v705 = vpop.f32.mrb[0].mxu0
      %v706 = vpop.f32.mrb[0].mxu0
      %v707 = vadd.f32 0.0, %v706
      %v708 = vpop.f32.mrb[0].mxu0
      %709 = vmatprep.mubr.bf16.mxu0 0
      %710 = vmatmul.mubr.bf16.gmra.mrb[0].mxu0 %v474
      %v711 = vpop.f32.mrb[0].mxu0
      %v712 = vadd.f32 0.0, %v711
      %v713 = vpop.f32.mrb[0].mxu0
      %v714 = vpop.f32.mrb[0].mxu0
      %v715 = vadd.f32 0.0, %v714
      %v716 = vpop.f32.mrb[0].mxu0
      %717 = vmatprep.mubr.bf16.mxu0 0
      %718 = vmatmul.mubr.bf16.gmra.mrb[0].mxu0 %v482
      %v719 = vpop.f32.mrb[0].mxu0
      %v720 = vadd.f32 0.0, %v719
      %v721 = vpop.f32.mrb[0].mxu0
      %v722 = vpop.f32.mrb[0].mxu0
      %v723 = vadd.f32 0.0, %v722
      %v724 = vpop.f32.mrb[0].mxu0
      %725 = vdwg.mxu0
      %v760 = vunpack.c.l.b16 %v208
      %v761 = vunpack.c.l.b16 %v209
      %v762 = vunpack.c.l.b16 %v210
      %v763 = vunpack.c.l.b16 %v211
      %v764 = vunpack.c.l.b16 %v212
      %v765 = vunpack.c.l.b16 %v213
      %v766 = vunpack.c.l.b16 %v214
      %v767 = vunpack.c.l.b16 %v215
      %v768 = vunpack.c.l.b16 %v216
      %v769 = vunpack.c.l.b16 %v217
      %v770 = vunpack.c.l.b16 %v218
      %v771 = vunpack.c.l.b16 %v219
      %v772 = vunpack.c.l.b16 %v220
      %v773 = vunpack.c.l.b16 %v221
      %v774 = vunpack.c.l.b16 %v222
      %v775 = vunpack.c.l.b16 %v223
      %v776 = vpack.c.b16 %v761, %v760
      %v777 = vpack.c.b16 %v763, %v762
      %v778 = vpack.c.b16 %v765, %v764
      %v779 = vpack.c.b16 %v767, %v766
      %v780 = vpack.c.b16 %v769, %v768
      %v781 = vpack.c.b16 %v771, %v770
      %v782 = vpack.c.b16 %v773, %v772
      %v783 = vpack.c.b16 %v775, %v774
      %792 = vmatprep.subr.bf16.mxu0 0
      %793 = vmatpush1.bf16.msra.mxu0 %v776
      %794 = vmatprep.subr.bf16.mxu0 0
      %795 = vmatpush1.bf16.msra.mxu0 %v777
      %796 = vmatprep.subr.bf16.mxu0 0
      %797 = vmatpush1.bf16.msra.mxu0 %v778
      %798 = vmatprep.subr.bf16.mxu0 0
      %799 = vmatpush1.bf16.msra.mxu0 %v779
      %800 = vmatprep.subr.bf16.mxu0 0
      %801 = vmatpush1.bf16.msra.mxu0 %v780
      %802 = vmatprep.subr.bf16.mxu0 0
      %803 = vmatpush1.bf16.msra.mxu0 %v781
      %804 = vmatprep.subr.bf16.mxu0 0
      %805 = vmatpush1.bf16.msra.mxu0 %v782
      %806 = vmatprep.subr.bf16.mxu0 0
      %807 = vmatpush1.bf16.msra.mxu0 %v783
      %808 = vmatprep.subr.bf16.mxu0 0
      %809 = vmatpush1.bf16.msra.mxu0 0
      %810 = vmatprep.subr.bf16.mxu0 0
      %811 = vmatpush1.bf16.msra.mxu0 0
      %812 = vmatprep.subr.bf16.mxu0 0
      %813 = vmatpush1.bf16.msra.mxu0 0
      %814 = vmatprep.subr.bf16.mxu0 0
      %815 = vmatpush1.bf16.msra.mxu0 0
      %816 = vmatprep.subr.bf16.mxu0 0
      %817 = vmatpush1.bf16.msra.mxu0 0
      %818 = vmatprep.subr.bf16.mxu0 0
      %819 = vmatpush1.bf16.msra.mxu0 0
      %820 = vmatprep.subr.bf16.mxu0 0
      %821 = vmatpush1.bf16.msra.mxu0 0
      %822 = vmatprep.subr.bf16.mxu0 0
      %823 = vmatpush1.bf16.msra.mxu0 0
      %824 = vmatprep.mubr.bf16.mxu0 0
      %825 = vmatmul.mubr.bf16.gmra.mrb[0].mxu0 %v315
      %v826 = vpop.f32.mrb[0].mxu0
      %v827 = vadd.f32 %v584, %v826
      %v828 = vpop.f32.mrb[0].mxu0
      %v829 = vpop.f32.mrb[0].mxu0
      %v830 = vadd.f32 %v587, %v829
      %v831 = vpop.f32.mrb[0].mxu0
      %832 = vmatprep.mubr.bf16.mxu0 0
      %833 = vmatmul.mubr.bf16.gmra.mrb[0].mxu0 %v316
      %v834 = vpop.f32.mrb[0].mxu0
      %v835 = vadd.f32 %v592, %v834
      %v836 = vpop.f32.mrb[0].mxu0
      %v837 = vpop.f32.mrb[0].mxu0
      %v838 = vadd.f32 %v595, %v837
      %v839 = vpop.f32.mrb[0].mxu0
      %840 = vmatprep.mubr.bf16.mxu0 0
      %841 = vmatmul.mubr.bf16.gmra.mrb[0].mxu0 %v317
      %v842 = vpop.f32.mrb[0].mxu0
      %v843 = vadd.f32 %v600, %v842
      %v844 = vpop.f32.mrb[0].mxu0
      %v845 = vpop.f32.mrb[0].mxu0
      %v846 = vadd.f32 %v603, %v845
      %v847 = vpop.f32.mrb[0].mxu0
      %848 = vmatprep.mubr.bf16.mxu0 0
      %849 = vmatmul.mubr.bf16.gmra.mrb[0].mxu0 %v318
      %v850 = vpop.f32.mrb[0].mxu0
      %v851 = vadd.f32 %v608, %v850
      %v852 = vpop.f32.mrb[0].mxu0
      %v853 = vpop.f32.mrb[0].mxu0
      %v854 = vadd.f32 %v611, %v853
      %v855 = vpop.f32.mrb[0].mxu0
      %856 = vmatprep.mubr.bf16.mxu0 0
      %857 = vmatmul.mubr.bf16.gmra.mrb[0].mxu0 %v319
      %v858 = vpop.f32.mrb[0].mxu0
      %v859 = vadd.f32 %v616, %v858
      %v860 = vpop.f32.mrb[0].mxu0
      %v861 = vpop.f32.mrb[0].mxu0
      %v862 = vadd.f32 %v619, %v861
      %v863 = vpop.f32.mrb[0].mxu0
      %864 = vmatprep.mubr.bf16.mxu0 0
      %865 = vmatmul.mubr.bf16.gmra.mrb[0].mxu0 %v320
      %v866 = vpop.f32.mrb[0].mxu0
      %v867 = vadd.f32 %v624, %v866
      %v868 = vpop.f32.mrb[0].mxu0
      %v869 = vpop.f32.mrb[0].mxu0
      %v870 = vadd.f32 %v627, %v869
      %v871 = vpop.f32.mrb[0].mxu0
      %872 = vmatprep.mubr.bf16.mxu0 0
      %873 = vmatmul.mubr.bf16.gmra.mrb[0].mxu0 %v321
      %v874 = vpop.f32.mrb[0].mxu0
      %v875 = vadd.f32 %v632, %v874
      %v876 = vpop.f32.mrb[0].mxu0
      %v877 = vpop.f32.mrb[0].mxu0
      %v878 = vadd.f32 %v635, %v877
      %v879 = vpop.f32.mrb[0].mxu0
      %880 = vmatprep.mubr.bf16.mxu0 0
      %881 = vmatmul.mubr.bf16.gmra.mrb[0].mxu0 %v322
      %v882 = vpop.f32.mrb[0].mxu0
      %v883 = vadd.f32 %v640, %v882
      %v884 = vpop.f32.mrb[0].mxu0
      %v885 = vpop.f32.mrb[0].mxu0
      %v886 = vadd.f32 %v643, %v885
      %v887 = vpop.f32.mrb[0].mxu0
      %888 = vmatprep.mubr.bf16.mxu0 0
      %889 = vmatmul.mubr.bf16.gmra.mrb[0].mxu0 %v323
      %v890 = vpop.f32.mrb[0].mxu0
      %v891 = vadd.f32 %v648, %v890
      %v892 = vpop.f32.mrb[0].mxu0
      %v893 = vpop.f32.mrb[0].mxu0
      %v894 = vadd.f32 %v651, %v893
      %v895 = vpop.f32.mrb[0].mxu0
      %896 = vmatprep.mubr.bf16.mxu0 0
      %897 = vmatmul.mubr.bf16.gmra.mrb[0].mxu0 %v324
      %v898 = vpop.f32.mrb[0].mxu0
      %v899 = vadd.f32 %v656, %v898
      %v900 = vpop.f32.mrb[0].mxu0
      %v901 = vpop.f32.mrb[0].mxu0
      %v902 = vadd.f32 %v659, %v901
      %v903 = vpop.f32.mrb[0].mxu0
      %904 = vmatprep.mubr.bf16.mxu0 0
      %905 = vmatmul.mubr.bf16.gmra.mrb[0].mxu0 %v325
      %v906 = vpop.f32.mrb[0].mxu0
      %v907 = vadd.f32 %v664, %v906
      %v908 = vpop.f32.mrb[0].mxu0
      %v909 = vpop.f32.mrb[0].mxu0
      %v910 = vadd.f32 %v667, %v909
      %v911 = vpop.f32.mrb[0].mxu0
      %912 = vmatprep.mubr.bf16.mxu0 0
      %913 = vmatmul.mubr.bf16.gmra.mrb[0].mxu0 %v326
      %v914 = vpop.f32.mrb[0].mxu0
      %v915 = vadd.f32 %v672, %v914
      %v916 = vpop.f32.mrb[0].mxu0
      %v917 = vpop.f32.mrb[0].mxu0
      %v918 = vadd.f32 %v675, %v917
      %v919 = vpop.f32.mrb[0].mxu0
      %920 = vmatprep.mubr.bf16.mxu0 0
      %921 = vmatmul.mubr.bf16.gmra.mrb[0].mxu0 %v327
      %v922 = vpop.f32.mrb[0].mxu0
      %v923 = vadd.f32 %v680, %v922
      %v924 = vpop.f32.mrb[0].mxu0
      %v925 = vpop.f32.mrb[0].mxu0
      %v926 = vadd.f32 %v683, %v925
      %v927 = vpop.f32.mrb[0].mxu0
      %928 = vmatprep.mubr.bf16.mxu0 0
      %929 = vmatmul.mubr.bf16.gmra.mrb[0].mxu0 %v328
      %v930 = vpop.f32.mrb[0].mxu0
      %v931 = vadd.f32 %v688, %v930
      %v932 = vpop.f32.mrb[0].mxu0
      %v933 = vpop.f32.mrb[0].mxu0
      %v934 = vadd.f32 %v691, %v933
      %v935 = vpop.f32.mrb[0].mxu0
      %936 = vmatprep.mubr.bf16.mxu0 0
      %937 = vmatmul.mubr.bf16.gmra.mrb[0].mxu0 %v329
      %v938 = vpop.f32.mrb[0].mxu0
      %v939 = vadd.f32 %v696, %v938
      %v940 = vpop.f32.mrb[0].mxu0
      %v941 = vpop.f32.mrb[0].mxu0
      %v942 = vadd.f32 %v699, %v941
      %v943 = vpop.f32.mrb[0].mxu0
      %944 = vmatprep.mubr.bf16.mxu0 0
      %945 = vmatmul.mubr.bf16.gmra.mrb[0].mxu0 %v330
      %v946 = vpop.f32.mrb[0].mxu0
      %v947 = vadd.f32 %v704, %v946
      %v948 = vpop.f32.mrb[0].mxu0
      %v949 = vpop.f32.mrb[0].mxu0
      %v950 = vadd.f32 %v707, %v949
      %v951 = vpop.f32.mrb[0].mxu0
      %952 = vmatprep.mubr.bf16.mxu0 0
      %953 = vmatmul.mubr.bf16.gmra.mrb[0].mxu0 %v331
      %v954 = vpop.f32.mrb[0].mxu0
      %v955 = vadd.f32 %v712, %v954
      %v956 = vpop.f32.mrb[0].mxu0
      %v957 = vpop.f32.mrb[0].mxu0
      %v958 = vadd.f32 %v715, %v957
      %v959 = vpop.f32.mrb[0].mxu0
      %960 = vmatprep.mubr.bf16.mxu0 0
      %961 = vmatmul.mubr.bf16.gmra.mrb[0].mxu0 %v332
      %v962 = vpop.f32.mrb[0].mxu0
      %v963 = vadd.f32 %v720, %v962
      %v964 = vpop.f32.mrb[0].mxu0
      %v965 = vpop.f32.mrb[0].mxu0
      %v966 = vadd.f32 %v723, %v965
      %v967 = vpop.f32.mrb[0].mxu0
      %968 = vdwg.mxu0
      %v969 = vld [vmem:[%s165] sm:$0xe]
      %v970 = vld [vmem:[%s1 + $0x80] sm:$0xf]
      %v971 = vld [vmem:[%s1 + $0x84] sm:$0xf]
      %v972 = vld [vmem:[%s1 + $0x88] sm:$0xf]
      %v973 = vld [vmem:[%s1 + $0x8c] sm:$0xf]
      %v974 = vld [vmem:[%s1 + $0x90] sm:$0xf]
      %v975 = vld [vmem:[%s1 + $0x94] sm:$0xf]
      %v976 = vld [vmem:[%s1 + $0x98] sm:$0xf]
      %v977 = vld [vmem:[%s1 + $0x9c] sm:$0xf]
      %v978 = vld [vmem:[%s1 + $0xa0] sm:$0xf]
      %v979 = vld [vmem:[%s1 + $0xa4] sm:$0xf]
      %v980 = vld [vmem:[%s1 + $0xa8] sm:$0xf]
      %v981 = vld [vmem:[%s1 + $0xac] sm:$0xf]
      %v982 = vld [vmem:[%s1 + $0xb0] sm:$0xf]
      %v983 = vld [vmem:[%s1 + $0xb4] sm:$0xf]
      %v984 = vld [vmem:[%s1 + $0xb8] sm:$0xf]
      %v985 = vld [vmem:[%s1 + $0xbc] sm:$0xf]
      %v987 = vunpack.c.l.b16 %v969
      %v988 = vpack.c.b16 %v279, %v987
      %vm989 = vcmask 1046528
      %v990 = vrot.slane %v988, 1
      %v991 = vrot.slane %v316, 1
      %v992 = vsel %vm989, %v990, %v991
      %v993 = vrot.slane %v317, 1
      %v994 = vsel %vm989, %v991, %v993
      %v995 = vrot.slane %v318, 1
      %v996 = vsel %vm989, %v993, %v995
      %v997 = vrot.slane %v319, 1
      %v998 = vsel %vm989, %v995, %v997
      %v999 = vrot.slane %v320, 1
      %v1000 = vsel %vm989, %v997, %v999
      %v1001 = vrot.slane %v321, 1
      %v1002 = vsel %vm989, %v999, %v1001
      %v1003 = vrot.slane %v322, 1
      %v1004 = vsel %vm989, %v1001, %v1003
      %v1005 = vrot.slane %v323, 1
      %v1006 = vsel %vm989, %v1003, %v1005
      %v1007 = vrot.slane %v324, 1
      %v1008 = vsel %vm989, %v1005, %v1007
      %v1009 = vrot.slane %v325, 1
      %v1010 = vsel %vm989, %v1007, %v1009
      %v1011 = vrot.slane %v326, 1
      %v1012 = vsel %vm989, %v1009, %v1011
      %v1013 = vrot.slane %v327, 1
      %v1014 = vsel %vm989, %v1011, %v1013
      %v1015 = vrot.slane %v328, 1
      %v1016 = vsel %vm989, %v1013, %v1015
      %v1017 = vrot.slane %v329, 1
      %v1018 = vsel %vm989, %v1015, %v1017
      %v1019 = vrot.slane %v330, 1
      %v1020 = vsel %vm989, %v1017, %v1019
      %v1021 = vrot.slane %v331, 1
      %v1022 = vsel %vm989, %v1019, %v1021
      %v1023 = vrot.slane %v332, 1
      %v1024 = vsel %vm989, %v1021, %v1023
      %v1025 = vrot.slane %v333, 1
      %v1026 = vsel %vm989, %v1023, %v1025
      %v1061 = vunpack.c.l.b16 %v970
      %v1062 = vunpack.c.l.b16 %v971
      %v1063 = vunpack.c.l.b16 %v972
      %v1064 = vunpack.c.l.b16 %v973
      %v1065 = vunpack.c.l.b16 %v974
      %v1066 = vunpack.c.l.b16 %v975
      %v1067 = vunpack.c.l.b16 %v976
      %v1068 = vunpack.c.l.b16 %v977
      %v1069 = vunpack.c.l.b16 %v978
      %v1070 = vunpack.c.l.b16 %v979
      %v1071 = vunpack.c.l.b16 %v980
      %v1072 = vunpack.c.l.b16 %v981
      %v1073 = vunpack.c.l.b16 %v982
      %v1074 = vunpack.c.l.b16 %v983
      %v1075 = vunpack.c.l.b16 %v984
      %v1076 = vunpack.c.l.b16 %v985
      %v1077 = vpack.c.b16 %v1062, %v1061
      %v1078 = vpack.c.b16 %v1064, %v1063
      %v1079 = vpack.c.b16 %v1066, %v1065
      %v1080 = vpack.c.b16 %v1068, %v1067
      %v1081 = vpack.c.b16 %v1070, %v1069
      %v1082 = vpack.c.b16 %v1072, %v1071
      %v1083 = vpack.c.b16 %v1074, %v1073
      %v1084 = vpack.c.b16 %v1076, %v1075
      %1093 = vmatprep.subr.bf16.mxu0 0
      %1094 = vmatpush1.bf16.msra.mxu0 %v1077
      %1095 = vmatprep.subr.bf16.mxu0 0
      %1096 = vmatpush1.bf16.msra.mxu0 %v1078
      %1097 = vmatprep.subr.bf16.mxu0 0
      %1098 = vmatpush1.bf16.msra.mxu0 %v1079
      %1099 = vmatprep.subr.bf16.mxu0 0
      %1100 = vmatpush1.bf16.msra.mxu0 %v1080
      %1101 = vmatprep.subr.bf16.mxu0 0
      %1102 = vmatpush1.bf16.msra.mxu0 %v1081
      %1103 = vmatprep.subr.bf16.mxu0 0
      %1104 = vmatpush1.bf16.msra.mxu0 %v1082
      %1105 = vmatprep.subr.bf16.mxu0 0
      %1106 = vmatpush1.bf16.msra.mxu0 %v1083
      %1107 = vmatprep.subr.bf16.mxu0 0
      %1108 = vmatpush1.bf16.msra.mxu0 %v1084
      %1109 = vmatprep.subr.bf16.mxu0 0
      %1110 = vmatpush1.bf16.msra.mxu0 0
      %1111 = vmatprep.subr.bf16.mxu0 0
      %1112 = vmatpush1.bf16.msra.mxu0 0
      %1113 = vmatprep.subr.bf16.mxu0 0
      %1114 = vmatpush1.bf16.msra.mxu0 0
      %1115 = vmatprep.subr.bf16.mxu0 0
      %1116 = vmatpush1.bf16.msra.mxu0 0
      %1117 = vmatprep.subr.bf16.mxu0 0
      %1118 = vmatpush1.bf16.msra.mxu0 0
      %1119 = vmatprep.subr.bf16.mxu0 0
      %1120 = vmatpush1.bf16.msra.mxu0 0
      %1121 = vmatprep.subr.bf16.mxu0 0
      %1122 = vmatpush1.bf16.msra.mxu0 0
      %1123 = vmatprep.subr.bf16.mxu0 0
      %1124 = vmatpush1.bf16.msra.mxu0 0
      %1125 = vmatprep.mubr.bf16.mxu0 0
      %1126 = vmatmul.mubr.bf16.gmra.mrb[0].mxu0 %v992
      %v1127 = vpop.f32.mrb[0].mxu0
      %v1128 = vadd.f32 0.0, %v1127
      %v1129 = vpop.f32.mrb[0].mxu0
      %v1130 = vpop.f32.mrb[0].mxu0
      %v1131 = vadd.f32 0.0, %v1130
      %v1132 = vpop.f32.mrb[0].mxu0
      %1133 = vmatprep.mubr.bf16.mxu0 0
      %1134 = vmatmul.mubr.bf16.gmra.mrb[0].mxu0 %v994
      %v1135 = vpop.f32.mrb[0].mxu0
      %v1136 = vadd.f32 0.0, %v1135
      %v1137 = vpop.f32.mrb[0].mxu0
      %v1138 = vpop.f32.mrb[0].mxu0
      %v1139 = vadd.f32 0.0, %v1138
      %v1140 = vpop.f32.mrb[0].mxu0
      %1141 = vmatprep.mubr.bf16.mxu0 0
      %1142 = vmatmul.mubr.bf16.gmra.mrb[0].mxu0 %v996
      %v1143 = vpop.f32.mrb[0].mxu0
      %v1144 = vadd.f32 0.0, %v1143
      %v1145 = vpop.f32.mrb[0].mxu0
      %v1146 = vpop.f32.mrb[0].mxu0
      %v1147 = vadd.f32 0.0, %v1146
      %v1148 = vpop.f32.mrb[0].mxu0
      %1149 = vmatprep.mubr.bf16.mxu0 0
      %1150 = vmatmul.mubr.bf16.gmra.mrb[0].mxu0 %v998
      %v1151 = vpop.f32.mrb[0].mxu0
      %v1152 = vadd.f32 0.0, %v1151
      %v1153 = vpop.f32.mrb[0].mxu0
      %v1154 = vpop.f32.mrb[0].mxu0
      %v1155 = vadd.f32 0.0, %v1154
      %v1156 = vpop.f32.mrb[0].mxu0
      %1157 = vmatprep.mubr.bf16.mxu0 0
      %1158 = vmatmul.mubr.bf16.gmra.mrb[0].mxu0 %v1000
      %v1159 = vpop.f32.mrb[0].mxu0
      %v1160 = vadd.f32 0.0, %v1159
      %v1161 = vpop.f32.mrb[0].mxu0
      %v1162 = vpop.f32.mrb[0].mxu0
      %v1163 = vadd.f32 0.0, %v1162
      %v1164 = vpop.f32.mrb[0].mxu0
      %1165 = vmatprep.mubr.bf16.mxu0 0
      %1166 = vmatmul.mubr.bf16.gmra.mrb[0].mxu0 %v1002
      %v1167 = vpop.f32.mrb[0].mxu0
      %v1168 = vadd.f32 0.0, %v1167
      %v1169 = vpop.f32.mrb[0].mxu0
      %v1170 = vpop.f32.mrb[0].mxu0
      %v1171 = vadd.f32 0.0, %v1170
      %v1172 = vpop.f32.mrb[0].mxu0
      %1173 = vmatprep.mubr.bf16.mxu0 0
      %1174 = vmatmul.mubr.bf16.gmra.mrb[0].mxu0 %v1004
      %v1175 = vpop.f32.mrb[0].mxu0
      %v1176 = vadd.f32 0.0, %v1175
      %v1177 = vpop.f32.mrb[0].mxu0
      %v1178 = vpop.f32.mrb[0].mxu0
      %v1179 = vadd.f32 0.0, %v1178
      %v1180 = vpop.f32.mrb[0].mxu0
      %1181 = vmatprep.mubr.bf16.mxu0 0
      %1182 = vmatmul.mubr.bf16.gmra.mrb[0].mxu0 %v1006
      %v1183 = vpop.f32.mrb[0].mxu0
      %v1184 = vadd.f32 0.0, %v1183
      %v1185 = vpop.f32.mrb[0].mxu0
      %v1186 = vpop.f32.mrb[0].mxu0
      %v1187 = vadd.f32 0.0, %v1186
      %v1188 = vpop.f32.mrb[0].mxu0
      %1189 = vmatprep.mubr.bf16.mxu0 0
      %1190 = vmatmul.mubr.bf16.gmra.mrb[0].mxu0 %v1008
      %v1191 = vpop.f32.mrb[0].mxu0
      %v1192 = vadd.f32 0.0, %v1191
      %v1193 = vpop.f32.mrb[0].mxu0
      %v1194 = vpop.f32.mrb[0].mxu0
      %v1195 = vadd.f32 0.0, %v1194
      %v1196 = vpop.f32.mrb[0].mxu0
      %1197 = vmatprep.mubr.bf16.mxu0 0
      %1198 = vmatmul.mubr.bf16.gmra.mrb[0].mxu0 %v1010
      %v1199 = vpop.f32.mrb[0].mxu0
      %v1200 = vadd.f32 0.0, %v1199
      %v1201 = vpop.f32.mrb[0].mxu0
      %v1202 = vpop.f32.mrb[0].mxu0
      %v1203 = vadd.f32 0.0, %v1202
      %v1204 = vpop.f32.mrb[0].mxu0
      %1205 = vmatprep.mubr.bf16.mxu0 0
      %1206 = vmatmul.mubr.bf16.gmra.mrb[0].mxu0 %v1012
      %v1207 = vpop.f32.mrb[0].mxu0
      %v1208 = vadd.f32 0.0, %v1207
      %v1209 = vpop.f32.mrb[0].mxu0
      %v1210 = vpop.f32.mrb[0].mxu0
      %v1211 = vadd.f32 0.0, %v1210
      %v1212 = vpop.f32.mrb[0].mxu0
      %1213 = vmatprep.mubr.bf16.mxu0 0
      %1214 = vmatmul.mubr.bf16.gmra.mrb[0].mxu0 %v1014
      %v1215 = vpop.f32.mrb[0].mxu0
      %v1216 = vadd.f32 0.0, %v1215
      %v1217 = vpop.f32.mrb[0].mxu0
      %v1218 = vpop.f32.mrb[0].mxu0
      %v1219 = vadd.f32 0.0, %v1218
      %v1220 = vpop.f32.mrb[0].mxu0
      %1221 = vmatprep.mubr.bf16.mxu0 0
      %1222 = vmatmul.mubr.bf16.gmra.mrb[0].mxu0 %v1016
      %v1223 = vpop.f32.mrb[0].mxu0
      %v1224 = vadd.f32 0.0, %v1223
      %v1225 = vpop.f32.mrb[0].mxu0
      %v1226 = vpop.f32.mrb[0].mxu0
      %v1227 = vadd.f32 0.0, %v1226
      %v1228 = vpop.f32.mrb[0].mxu0
      %1229 = vmatprep.mubr.bf16.mxu0 0
      %1230 = vmatmul.mubr.bf16.gmra.mrb[0].mxu0 %v1018
      %v1231 = vpop.f32.mrb[0].mxu0
      %v1232 = vadd.f32 0.0, %v1231
      %v1233 = vpop.f32.mrb[0].mxu0
      %v1234 = vpop.f32.mrb[0].mxu0
      %v1235 = vadd.f32 0.0, %v1234
      %v1236 = vpop.f32.mrb[0].mxu0
      %1237 = vmatprep.mubr.bf16.mxu0 0
      %1238 = vmatmul.mubr.bf16.gmra.mrb[0].mxu0 %v1020
      %v1239 = vpop.f32.mrb[0].mxu0
      %v1240 = vadd.f32 0.0, %v1239
      %v1241 = vpop.f32.mrb[0].mxu0
      %v1242 = vpop.f32.mrb[0].mxu0
      %v1243 = vadd.f32 0.0, %v1242
      %v1244 = vpop.f32.mrb[0].mxu0
      %1245 = vmatprep.mubr.bf16.mxu0 0
      %1246 = vmatmul.mubr.bf16.gmra.mrb[0].mxu0 %v1022
      %v1247 = vpop.f32.mrb[0].mxu0
      %v1248 = vadd.f32 0.0, %v1247
      %v1249 = vpop.f32.mrb[0].mxu0
      %v1250 = vpop.f32.mrb[0].mxu0
      %v1251 = vadd.f32 0.0, %v1250
      %v1252 = vpop.f32.mrb[0].mxu0
      %1253 = vmatprep.mubr.bf16.mxu0 0
      %1254 = vmatmul.mubr.bf16.gmra.mrb[0].mxu0 %v1024
      %v1255 = vpop.f32.mrb[0].mxu0
      %v1256 = vadd.f32 0.0, %v1255
      %v1257 = vpop.f32.mrb[0].mxu0
      %v1258 = vpop.f32.mrb[0].mxu0
      %v1259 = vadd.f32 0.0, %v1258
      %v1260 = vpop.f32.mrb[0].mxu0
      %1261 = vmatprep.mubr.bf16.mxu0 0
      %1262 = vmatmul.mubr.bf16.gmra.mrb[0].mxu0 %v1026
      %v1263 = vpop.f32.mrb[0].mxu0
      %v1264 = vadd.f32 0.0, %v1263
      %v1265 = vpop.f32.mrb[0].mxu0
      %v1266 = vpop.f32.mrb[0].mxu0
      %v1267 = vadd.f32 0.0, %v1266
      %v1268 = vpop.f32.mrb[0].mxu0
      %1269 = vdwg.mxu0
      %v1270 = vadd.f32 %v827, %v1128
      %v1271 = vadd.f32 %v830, %v1131
      %v1272 = vadd.f32 %v835, %v1136
      %v1273 = vadd.f32 %v838, %v1139
      %v1274 = vadd.f32 %v843, %v1144
      %v1275 = vadd.f32 %v846, %v1147
      %v1276 = vadd.f32 %v851, %v1152
      %v1277 = vadd.f32 %v854, %v1155
      %v1278 = vadd.f32 %v859, %v1160
      %v1279 = vadd.f32 %v862, %v1163
      %v1280 = vadd.f32 %v867, %v1168
      %v1281 = vadd.f32 %v870, %v1171
      %v1282 = vadd.f32 %v875, %v1176
      %v1283 = vadd.f32 %v878, %v1179
      %v1284 = vadd.f32 %v883, %v1184
      %v1285 = vadd.f32 %v886, %v1187
      %v1286 = vadd.f32 %v891, %v1192
      %v1287 = vadd.f32 %v894, %v1195
      %v1288 = vadd.f32 %v899, %v1200
      %v1289 = vadd.f32 %v902, %v1203
      %v1290 = vadd.f32 %v907, %v1208
      %v1291 = vadd.f32 %v910, %v1211
      %v1292 = vadd.f32 %v915, %v1216
      %v1293 = vadd.f32 %v918, %v1219
      %v1294 = vadd.f32 %v923, %v1224
      %v1295 = vadd.f32 %v926, %v1227
      %v1296 = vadd.f32 %v931, %v1232
      %v1297 = vadd.f32 %v934, %v1235
      %v1298 = vadd.f32 %v939, %v1240
      %v1299 = vadd.f32 %v942, %v1243
      %v1300 = vadd.f32 %v947, %v1248
      %v1301 = vadd.f32 %v950, %v1251
      %v1302 = vadd.f32 %v955, %v1256
      %v1303 = vadd.f32 %v958, %v1259
      %v1304 = vadd.f32 %v963, %v1264
      %v1305 = vadd.f32 %v966, %v1267
      %v1306 = vld [vmem:[%s165 + $0x8] sm:$0xe]
      %v1307 = vld [vmem:[%s165 + $0xc] sm:$0xf]
      %v1308 = vld [vmem:[%s165 + $0x10] sm:$0xf]
      %v1309 = vld [vmem:[%s165 + $0x14] sm:$0xf]
      %v1310 = vld [vmem:[%s165 + $0x18] sm:$0xf]
      %v1311 = vld [vmem:[%s165 + $0x1c] sm:$0xf]
      %v1312 = vld [vmem:[%s165 + $0x20] sm:$0xf]
      %v1313 = vld [vmem:[%s165 + $0x24] sm:$0xf]
      %v1314 = vld [vmem:[%s165 + $0x28] sm:$0xf]
      %v1315 = vld [vmem:[%s165 + $0x2c] sm:$0xf]
      %v1316 = vld [vmem:[%s165 + $0x30] sm:$0xf]
      %v1317 = vld [vmem:[%s165 + $0x34] sm:$0xf]
      %v1318 = vld [vmem:[%s165 + $0x38] sm:$0xf]
      %v1319 = vld [vmem:[%s165 + $0x3c] sm:$0xf]
      %v1320 = vld [vmem:[%s165 + $0x40] sm:$0xf]
      %v1321 = vld [vmem:[%s165 + $0x44] sm:$0xf]
      %v1322 = vld [vmem:[%s165 + $0x48] sm:$0xf]
      %v1323 = vld [vmem:[%s165 + $0x4c] sm:$0xf]
      %v1324 = vld [vmem:[%s165 + $0x50] sm:$0xf]
      %v1325 = vld [vmem:[%s165 + $0x54] sm:$0xf]
      %v1326 = vld [vmem:[%s165 + $0x58] sm:$0xf]
      %v1327 = vld [vmem:[%s165 + $0x5c] sm:$0xf]
      %v1328 = vld [vmem:[%s165 + $0x60] sm:$0xf]
      %v1329 = vld [vmem:[%s165 + $0x64] sm:$0xf]
      %v1330 = vld [vmem:[%s165 + $0x68] sm:$0xf]
      %v1331 = vld [vmem:[%s165 + $0x6c] sm:$0xf]
      %v1332 = vld [vmem:[%s165 + $0x70] sm:$0xf]
      %v1333 = vld [vmem:[%s165 + $0x74] sm:$0xf]
      %v1334 = vld [vmem:[%s165 + $0x78] sm:$0xf]
      %v1335 = vld [vmem:[%s165 + $0x7c] sm:$0xf]
      %v1336 = vld [vmem:[%s165 + $0x80] sm:$0xf]
      %v1337 = vld [vmem:[%s165 + $0x84] sm:$0xf]
      %v1338 = vld [vmem:[%s165 + $0x88] sm:$0xf]
      %v1339 = vld [vmem:[%s165 + $0x8c] sm:$0xf]
      %v1340 = vld [vmem:[%s165 + $0x90] sm:$0xf]
      %v1341 = vld [vmem:[%s165 + $0x94] sm:$0xf]
      %v1342 = vld [vmem:[%s165 + $0x98] sm:$0x1]
      %v1343 = vld [vmem:[%s1 + $0xc0] sm:$0xf]
      %v1344 = vld [vmem:[%s1 + $0xc4] sm:$0xf]
      %v1345 = vld [vmem:[%s1 + $0xc8] sm:$0xf]
      %v1346 = vld [vmem:[%s1 + $0xcc] sm:$0xf]
      %v1347 = vld [vmem:[%s1 + $0xd0] sm:$0xf]
      %v1348 = vld [vmem:[%s1 + $0xd4] sm:$0xf]
      %v1349 = vld [vmem:[%s1 + $0xd8] sm:$0xf]
      %v1350 = vld [vmem:[%s1 + $0xdc] sm:$0xf]
      %v1351 = vld [vmem:[%s1 + $0xe0] sm:$0xf]
      %v1352 = vld [vmem:[%s1 + $0xe4] sm:$0xf]
      %v1353 = vld [vmem:[%s1 + $0xe8] sm:$0xf]
      %v1354 = vld [vmem:[%s1 + $0xec] sm:$0xf]
      %v1355 = vld [vmem:[%s1 + $0xf0] sm:$0xf]
      %v1356 = vld [vmem:[%s1 + $0xf4] sm:$0xf]
      %v1357 = vld [vmem:[%s1 + $0xf8] sm:$0xf]
      %v1358 = vld [vmem:[%s1 + $0xfc] sm:$0xf]
      %v1396 = vunpack.c.l.b16 %v1306
      %v1397 = vunpack.c.l.b16 %v1307
      %v1398 = vunpack.c.l.b16 %v1308
      %v1399 = vunpack.c.l.b16 %v1309
      %v1400 = vunpack.c.l.b16 %v1310
      %v1401 = vunpack.c.l.b16 %v1311
      %v1402 = vunpack.c.l.b16 %v1312
      %v1403 = vunpack.c.l.b16 %v1313
      %v1404 = vunpack.c.l.b16 %v1314
      %v1405 = vunpack.c.l.b16 %v1315
      %v1406 = vunpack.c.l.b16 %v1316
      %v1407 = vunpack.c.l.b16 %v1317
      %v1408 = vunpack.c.l.b16 %v1318
      %v1409 = vunpack.c.l.b16 %v1319
      %v1410 = vunpack.c.l.b16 %v1320
      %v1411 = vunpack.c.l.b16 %v1321
      %v1412 = vunpack.c.l.b16 %v1322
      %v1413 = vunpack.c.l.b16 %v1323
      %v1414 = vunpack.c.l.b16 %v1324
      %v1415 = vunpack.c.l.b16 %v1325
      %v1416 = vunpack.c.l.b16 %v1326
      %v1417 = vunpack.c.l.b16 %v1327
      %v1418 = vunpack.c.l.b16 %v1328
      %v1419 = vunpack.c.l.b16 %v1329
      %v1420 = vunpack.c.l.b16 %v1330
      %v1421 = vunpack.c.l.b16 %v1331
      %v1422 = vunpack.c.l.b16 %v1332
      %v1423 = vunpack.c.l.b16 %v1333
      %v1424 = vunpack.c.l.b16 %v1334
      %v1425 = vunpack.c.l.b16 %v1335
      %v1426 = vunpack.c.l.b16 %v1336
      %v1427 = vunpack.c.l.b16 %v1337
      %v1428 = vunpack.c.l.b16 %v1338
      %v1429 = vunpack.c.l.b16 %v1339
      %v1430 = vunpack.c.l.b16 %v1340
      %v1431 = vunpack.c.l.b16 %v1341
      %v1432 = vunpack.c.l.b16 %v1342
      %v1433 = vpack.c.b16 %v1397, %v1396
      %v1434 = vpack.c.b16 %v1399, %v1398
      %v1435 = vpack.c.b16 %v1401, %v1400
      %v1436 = vpack.c.b16 %v1403, %v1402
      %v1437 = vpack.c.b16 %v1405, %v1404
      %v1438 = vpack.c.b16 %v1407, %v1406
      %v1439 = vpack.c.b16 %v1409, %v1408
      %v1440 = vpack.c.b16 %v1411, %v1410
      %v1441 = vpack.c.b16 %v1413, %v1412
      %v1442 = vpack.c.b16 %v1415, %v1414
      %v1443 = vpack.c.b16 %v1417, %v1416
      %v1444 = vpack.c.b16 %v1419, %v1418
      %v1445 = vpack.c.b16 %v1421, %v1420
      %v1446 = vpack.c.b16 %v1423, %v1422
      %v1447 = vpack.c.b16 %v1425, %v1424
      %v1448 = vpack.c.b16 %v1427, %v1426
      %v1449 = vpack.c.b16 %v1429, %v1428
      %v1450 = vpack.c.b16 %v1431, %v1430
      %v1451 = vpack.c.b16 %v1432, %v1432
      %v1452 = vrot.slane %v1433, 1
      %v1453 = vrot.slane %v1434, 1
      %v1454 = vsel %vm989, %v1452, %v1453
      %v1455 = vrot.slane %v1435, 1
      %v1456 = vsel %vm989, %v1453, %v1455
      %v1457 = vrot.slane %v1436, 1
      %v1458 = vsel %vm989, %v1455, %v1457
      %v1459 = vrot.slane %v1437, 1
      %v1460 = vsel %vm989, %v1457, %v1459
      %v1461 = vrot.slane %v1438, 1
      %v1462 = vsel %vm989, %v1459, %v1461
      %v1463 = vrot.slane %v1439, 1
      %v1464 = vsel %vm989, %v1461, %v1463
      %v1465 = vrot.slane %v1440, 1
      %v1466 = vsel %vm989, %v1463, %v1465
      %v1467 = vrot.slane %v1441, 1
      %v1468 = vsel %vm989, %v1465, %v1467
      %v1469 = vrot.slane %v1442, 1
      %v1470 = vsel %vm989, %v1467, %v1469
      %v1471 = vrot.slane %v1443, 1
      %v1472 = vsel %vm989, %v1469, %v1471
      %v1473 = vrot.slane %v1444, 1
      %v1474 = vsel %vm989, %v1471, %v1473
      %v1475 = vrot.slane %v1445, 1
      %v1476 = vsel %vm989, %v1473, %v1475
      %v1477 = vrot.slane %v1446, 1
      %v1478 = vsel %vm989, %v1475, %v1477
      %v1479 = vrot.slane %v1447, 1
      %v1480 = vsel %vm989, %v1477, %v1479
      %v1481 = vrot.slane %v1448, 1
      %v1482 = vsel %vm989, %v1479, %v1481
      %v1483 = vrot.slane %v1449, 1
      %v1484 = vsel %vm989, %v1481, %v1483
      %v1485 = vrot.slane %v1450, 1
      %v1486 = vsel %vm989, %v1483, %v1485
      %v1487 = vrot.slane %v1451, 1
      %v1488 = vsel %vm989, %v1485, %v1487
      %v1523 = vunpack.c.l.b16 %v1343
      %v1524 = vunpack.c.l.b16 %v1344
      %v1525 = vunpack.c.l.b16 %v1345
      %v1526 = vunpack.c.l.b16 %v1346
      %v1527 = vunpack.c.l.b16 %v1347
      %v1528 = vunpack.c.l.b16 %v1348
      %v1529 = vunpack.c.l.b16 %v1349
      %v1530 = vunpack.c.l.b16 %v1350
      %v1531 = vunpack.c.l.b16 %v1351
      %v1532 = vunpack.c.l.b16 %v1352
      %v1533 = vunpack.c.l.b16 %v1353
      %v1534 = vunpack.c.l.b16 %v1354
      %v1535 = vunpack.c.l.b16 %v1355
      %v1536 = vunpack.c.l.b16 %v1356
      %v1537 = vunpack.c.l.b16 %v1357
      %v1538 = vunpack.c.l.b16 %v1358
      %v1539 = vpack.c.b16 %v1524, %v1523
      %v1540 = vpack.c.b16 %v1526, %v1525
      %v1541 = vpack.c.b16 %v1528, %v1527
      %v1542 = vpack.c.b16 %v1530, %v1529
      %v1543 = vpack.c.b16 %v1532, %v1531
      %v1544 = vpack.c.b16 %v1534, %v1533
      %v1545 = vpack.c.b16 %v1536, %v1535
      %v1546 = vpack.c.b16 %v1538, %v1537
      %1555 = vmatprep.subr.bf16.mxu0 0
      %1556 = vmatpush1.bf16.msra.mxu0 %v1539
      %1557 = vmatprep.subr.bf16.mxu0 0
      %1558 = vmatpush1.bf16.msra.mxu0 %v1540
      %1559 = vmatprep.subr.bf16.mxu0 0
      %1560 = vmatpush1.bf16.msra.mxu0 %v1541
      %1561 = vmatprep.subr.bf16.mxu0 0
      %1562 = vmatpush1.bf16.msra.mxu0 %v1542
      %1563 = vmatprep.subr.bf16.mxu0 0
      %1564 = vmatpush1.bf16.msra.mxu0 %v1543
      %1565 = vmatprep.subr.bf16.mxu0 0
      %1566 = vmatpush1.bf16.msra.mxu0 %v1544
      %1567 = vmatprep.subr.bf16.mxu0 0
      %1568 = vmatpush1.bf16.msra.mxu0 %v1545
      %1569 = vmatprep.subr.bf16.mxu0 0
      %1570 = vmatpush1.bf16.msra.mxu0 %v1546
      %1571 = vmatprep.subr.bf16.mxu0 0
      %1572 = vmatpush1.bf16.msra.mxu0 0
      %1573 = vmatprep.subr.bf16.mxu0 0
      %1574 = vmatpush1.bf16.msra.mxu0 0
      %1575 = vmatprep.subr.bf16.mxu0 0
      %1576 = vmatpush1.bf16.msra.mxu0 0
      %1577 = vmatprep.subr.bf16.mxu0 0
      %1578 = vmatpush1.bf16.msra.mxu0 0
      %1579 = vmatprep.subr.bf16.mxu0 0
      %1580 = vmatpush1.bf16.msra.mxu0 0
      %1581 = vmatprep.subr.bf16.mxu0 0
      %1582 = vmatpush1.bf16.msra.mxu0 0
      %1583 = vmatprep.subr.bf16.mxu0 0
      %1584 = vmatpush1.bf16.msra.mxu0 0
      %1585 = vmatprep.subr.bf16.mxu0 0
      %1586 = vmatpush1.bf16.msra.mxu0 0
      %1587 = vmatprep.mubr.bf16.mxu0 0
      %1588 = vmatmul.mubr.bf16.gmra.mrb[0].mxu0 %v1454
      %v1589 = vpop.f32.mrb[0].mxu0
      %v1590 = vadd.f32 0.0, %v1589
      %v1591 = vpop.f32.mrb[0].mxu0
      %v1592 = vpop.f32.mrb[0].mxu0
      %v1593 = vadd.f32 0.0, %v1592
      %v1594 = vpop.f32.mrb[0].mxu0
      %1595 = vmatprep.mubr.bf16.mxu0 0
      %1596 = vmatmul.mubr.bf16.gmra.mrb[0].mxu0 %v1456
      %v1597 = vpop.f32.mrb[0].mxu0
      %v1598 = vadd.f32 0.0, %v1597
      %v1599 = vpop.f32.mrb[0].mxu0
      %v1600 = vpop.f32.mrb[0].mxu0
      %v1601 = vadd.f32 0.0, %v1600
      %v1602 = vpop.f32.mrb[0].mxu0
      %1603 = vmatprep.mubr.bf16.mxu0 0
      %1604 = vmatmul.mubr.bf16.gmra.mrb[0].mxu0 %v1458
      %v1605 = vpop.f32.mrb[0].mxu0
      %v1606 = vadd.f32 0.0, %v1605
      %v1607 = vpop.f32.mrb[0].mxu0
      %v1608 = vpop.f32.mrb[0].mxu0
      %v1609 = vadd.f32 0.0, %v1608
      %v1610 = vpop.f32.mrb[0].mxu0
      %1611 = vmatprep.mubr.bf16.mxu0 0
      %1612 = vmatmul.mubr.bf16.gmra.mrb[0].mxu0 %v1460
      %v1613 = vpop.f32.mrb[0].mxu0
      %v1614 = vadd.f32 0.0, %v1613
      %v1615 = vpop.f32.mrb[0].mxu0
      %v1616 = vpop.f32.mrb[0].mxu0
      %v1617 = vadd.f32 0.0, %v1616
      %v1618 = vpop.f32.mrb[0].mxu0
      %1619 = vmatprep.mubr.bf16.mxu0 0
      %1620 = vmatmul.mubr.bf16.gmra.mrb[0].mxu0 %v1462
      %v1621 = vpop.f32.mrb[0].mxu0
      %v1622 = vadd.f32 0.0, %v1621
      %v1623 = vpop.f32.mrb[0].mxu0
      %v1624 = vpop.f32.mrb[0].mxu0
      %v1625 = vadd.f32 0.0, %v1624
      %v1626 = vpop.f32.mrb[0].mxu0
      %1627 = vmatprep.mubr.bf16.mxu0 0
      %1628 = vmatmul.mubr.bf16.gmra.mrb[0].mxu0 %v1464
      %v1629 = vpop.f32.mrb[0].mxu0
      %v1630 = vadd.f32 0.0, %v1629
      %v1631 = vpop.f32.mrb[0].mxu0
      %v1632 = vpop.f32.mrb[0].mxu0
      %v1633 = vadd.f32 0.0, %v1632
      %v1634 = vpop.f32.mrb[0].mxu0
      %1635 = vmatprep.mubr.bf16.mxu0 0
      %1636 = vmatmul.mubr.bf16.gmra.mrb[0].mxu0 %v1466
      %v1637 = vpop.f32.mrb[0].mxu0
      %v1638 = vadd.f32 0.0, %v1637
      %v1639 = vpop.f32.mrb[0].mxu0
      %v1640 = vpop.f32.mrb[0].mxu0
      %v1641 = vadd.f32 0.0, %v1640
      %v1642 = vpop.f32.mrb[0].mxu0
      %1643 = vmatprep.mubr.bf16.mxu0 0
      %1644 = vmatmul.mubr.bf16.gmra.mrb[0].mxu0 %v1468
      %v1645 = vpop.f32.mrb[0].mxu0
      %v1646 = vadd.f32 0.0, %v1645
      %v1647 = vpop.f32.mrb[0].mxu0
      %v1648 = vpop.f32.mrb[0].mxu0
      %v1649 = vadd.f32 0.0, %v1648
      %v1650 = vpop.f32.mrb[0].mxu0
      %1651 = vmatprep.mubr.bf16.mxu0 0
      %1652 = vmatmul.mubr.bf16.gmra.mrb[0].mxu0 %v1470
      %v1653 = vpop.f32.mrb[0].mxu0
      %v1654 = vadd.f32 0.0, %v1653
      %v1655 = vpop.f32.mrb[0].mxu0
      %v1656 = vpop.f32.mrb[0].mxu0
      %v1657 = vadd.f32 0.0, %v1656
      %v1658 = vpop.f32.mrb[0].mxu0
      %1659 = vmatprep.mubr.bf16.mxu0 0
      %1660 = vmatmul.mubr.bf16.gmra.mrb[0].mxu0 %v1472
      %v1661 = vpop.f32.mrb[0].mxu0
      %v1662 = vadd.f32 0.0, %v1661
      %v1663 = vpop.f32.mrb[0].mxu0
      %v1664 = vpop.f32.mrb[0].mxu0
      %v1665 = vadd.f32 0.0, %v1664
      %v1666 = vpop.f32.mrb[0].mxu0
      %1667 = vmatprep.mubr.bf16.mxu0 0
      %1668 = vmatmul.mubr.bf16.gmra.mrb[0].mxu0 %v1474
      %v1669 = vpop.f32.mrb[0].mxu0
      %v1670 = vadd.f32 0.0, %v1669
      %v1671 = vpop.f32.mrb[0].mxu0
      %v1672 = vpop.f32.mrb[0].mxu0
      %v1673 = vadd.f32 0.0, %v1672
      %v1674 = vpop.f32.mrb[0].mxu0
      %1675 = vmatprep.mubr.bf16.mxu0 0
      %1676 = vmatmul.mubr.bf16.gmra.mrb[0].mxu0 %v1476
      %v1677 = vpop.f32.mrb[0].mxu0
      %v1678 = vadd.f32 0.0, %v1677
      %v1679 = vpop.f32.mrb[0].mxu0
      %v1680 = vpop.f32.mrb[0].mxu0
      %v1681 = vadd.f32 0.0, %v1680
      %v1682 = vpop.f32.mrb[0].mxu0
      %1683 = vmatprep.mubr.bf16.mxu0 0
      %1684 = vmatmul.mubr.bf16.gmra.mrb[0].mxu0 %v1478
      %v1685 = vpop.f32.mrb[0].mxu0
      %v1686 = vadd.f32 0.0, %v1685
      %v1687 = vpop.f32.mrb[0].mxu0
      %v1688 = vpop.f32.mrb[0].mxu0
      %v1689 = vadd.f32 0.0, %v1688
      %v1690 = vpop.f32.mrb[0].mxu0
      %1691 = vmatprep.mubr.bf16.mxu0 0
      %1692 = vmatmul.mubr.bf16.gmra.mrb[0].mxu0 %v1480
      %v1693 = vpop.f32.mrb[0].mxu0
      %v1694 = vadd.f32 0.0, %v1693
      %v1695 = vpop.f32.mrb[0].mxu0
      %v1696 = vpop.f32.mrb[0].mxu0
      %v1697 = vadd.f32 0.0, %v1696
      %v1698 = vpop.f32.mrb[0].mxu0
      %1699 = vmatprep.mubr.bf16.mxu0 0
      %1700 = vmatmul.mubr.bf16.gmra.mrb[0].mxu0 %v1482
      %v1701 = vpop.f32.mrb[0].mxu0
      %v1702 = vadd.f32 0.0, %v1701
      %v1703 = vpop.f32.mrb[0].mxu0
      %v1704 = vpop.f32.mrb[0].mxu0
      %v1705 = vadd.f32 0.0, %v1704
      %v1706 = vpop.f32.mrb[0].mxu0
      %1707 = vmatprep.mubr.bf16.mxu0 0
      %1708 = vmatmul.mubr.bf16.gmra.mrb[0].mxu0 %v1484
      %v1709 = vpop.f32.mrb[0].mxu0
      %v1710 = vadd.f32 0.0, %v1709
      %v1711 = vpop.f32.mrb[0].mxu0
      %v1712 = vpop.f32.mrb[0].mxu0
      %v1713 = vadd.f32 0.0, %v1712
      %v1714 = vpop.f32.mrb[0].mxu0
      %1715 = vmatprep.mubr.bf16.mxu0 0
      %1716 = vmatmul.mubr.bf16.gmra.mrb[0].mxu0 %v1486
      %v1717 = vpop.f32.mrb[0].mxu0
      %v1718 = vadd.f32 0.0, %v1717
      %v1719 = vpop.f32.mrb[0].mxu0
      %v1720 = vpop.f32.mrb[0].mxu0
      %v1721 = vadd.f32 0.0, %v1720
      %v1722 = vpop.f32.mrb[0].mxu0
      %1723 = vmatprep.mubr.bf16.mxu0 0
      %1724 = vmatmul.mubr.bf16.gmra.mrb[0].mxu0 %v1488
      %v1725 = vpop.f32.mrb[0].mxu0
      %v1726 = vadd.f32 0.0, %v1725
      %v1727 = vpop.f32.mrb[0].mxu0
      %v1728 = vpop.f32.mrb[0].mxu0
      %v1729 = vadd.f32 0.0, %v1728
      %v1730 = vpop.f32.mrb[0].mxu0
      %1731 = vdwg.mxu0
      %v1732 = vadd.f32 %v1270, %v1590
      %v1733 = vadd.f32 %v1271, %v1593
      %v1734 = vadd.f32 %v1272, %v1598
      %v1735 = vadd.f32 %v1273, %v1601
      %v1736 = vadd.f32 %v1274, %v1606
      %v1737 = vadd.f32 %v1275, %v1609
      %v1738 = vadd.f32 %v1276, %v1614
      %v1739 = vadd.f32 %v1277, %v1617
      %v1740 = vadd.f32 %v1278, %v1622
      %v1741 = vadd.f32 %v1279, %v1625
      %v1742 = vadd.f32 %v1280, %v1630
      %v1743 = vadd.f32 %v1281, %v1633
      %v1744 = vadd.f32 %v1282, %v1638
      %v1745 = vadd.f32 %v1283, %v1641
      %v1746 = vadd.f32 %v1284, %v1646
      %v1747 = vadd.f32 %v1285, %v1649
      %v1748 = vadd.f32 %v1286, %v1654
      %v1749 = vadd.f32 %v1287, %v1657
      %v1750 = vadd.f32 %v1288, %v1662
      %v1751 = vadd.f32 %v1289, %v1665
      %v1752 = vadd.f32 %v1290, %v1670
      %v1753 = vadd.f32 %v1291, %v1673
      %v1754 = vadd.f32 %v1292, %v1678
      %v1755 = vadd.f32 %v1293, %v1681
      %v1756 = vadd.f32 %v1294, %v1686
      %v1757 = vadd.f32 %v1295, %v1689
      %v1758 = vadd.f32 %v1296, %v1694
      %v1759 = vadd.f32 %v1297, %v1697
      %v1760 = vadd.f32 %v1298, %v1702
      %v1761 = vadd.f32 %v1299, %v1705
      %v1762 = vadd.f32 %v1300, %v1710
      %v1763 = vadd.f32 %v1301, %v1713
      %v1764 = vadd.f32 %v1302, %v1718
      %v1765 = vadd.f32 %v1303, %v1721
      %v1766 = vadd.f32 %v1304, %v1726
      %v1767 = vadd.f32 %v1305, %v1729
      %v1768 = vld [vmem:[%s165 + $0x98] sm:$0x3]
      %v1769 = vld [vmem:[%s1 + $0x100] sm:$0xf]
      %v1770 = vld [vmem:[%s1 + $0x104] sm:$0xf]
      %v1771 = vld [vmem:[%s1 + $0x108] sm:$0xf]
      %v1772 = vld [vmem:[%s1 + $0x10c] sm:$0xf]
      %v1773 = vld [vmem:[%s1 + $0x110] sm:$0xf]
      %v1774 = vld [vmem:[%s1 + $0x114] sm:$0xf]
      %v1775 = vld [vmem:[%s1 + $0x118] sm:$0xf]
      %v1776 = vld [vmem:[%s1 + $0x11c] sm:$0xf]
      %v1777 = vld [vmem:[%s1 + $0x120] sm:$0xf]
      %v1778 = vld [vmem:[%s1 + $0x124] sm:$0xf]
      %v1779 = vld [vmem:[%s1 + $0x128] sm:$0xf]
      %v1780 = vld [vmem:[%s1 + $0x12c] sm:$0xf]
      %v1781 = vld [vmem:[%s1 + $0x130] sm:$0xf]
      %v1782 = vld [vmem:[%s1 + $0x134] sm:$0xf]
      %v1783 = vld [vmem:[%s1 + $0x138] sm:$0xf]
      %v1784 = vld [vmem:[%s1 + $0x13c] sm:$0xf]
      %v1786 = vunpack.c.l.b16 %v1768
      %v1787 = vpack.c.b16 %v1786, %v1786
      %vm1788 = vsmask.f32 6400
      %v1790 = vshrl.u32 %v1433, 16
      %v1792 = vrot.slane %v1790, 1
      %v1793 = vshll.u32 %v1433, 16
      %v1795 = vrot.slane %v1793, 2
      %v1796 = vor.u32 %v1792, %v1795
      %v1798 = vshrl.u32 %v1434, 16
      %v1800 = vrot.slane %v1798, 1
      %v1801 = vshll.u32 %v1434, 16
      %v1803 = vrot.slane %v1801, 2
      %v1804 = vor.u32 %v1800, %v1803
      %v1805 = vsel %vm1788, %v1796, %v1804
      %v1807 = vshrl.u32 %v1435, 16
      %v1809 = vrot.slane %v1807, 1
      %v1810 = vshll.u32 %v1435, 16
      %v1812 = vrot.slane %v1810, 2
      %v1813 = vor.u32 %v1809, %v1812
      %v1814 = vsel %vm1788, %v1804, %v1813
      %v1816 = vshrl.u32 %v1436, 16
      %v1818 = vrot.slane %v1816, 1
      %v1819 = vshll.u32 %v1436, 16
      %v1821 = vrot.slane %v1819, 2
      %v1822 = vor.u32 %v1818, %v1821
      %v1823 = vsel %vm1788, %v1813, %v1822
      %v1825 = vshrl.u32 %v1437, 16
      %v1827 = vrot.slane %v1825, 1
      %v1828 = vshll.u32 %v1437, 16
      %v1830 = vrot.slane %v1828, 2
      %v1831 = vor.u32 %v1827, %v1830
      %v1832 = vsel %vm1788, %v1822, %v1831
      %v1834 = vshrl.u32 %v1438, 16
      %v1836 = vrot.slane %v1834, 1
      %v1837 = vshll.u32 %v1438, 16
      %v1839 = vrot.slane %v1837, 2
      %v1840 = vor.u32 %v1836, %v1839
      %v1841 = vsel %vm1788, %v1831, %v1840
      %v1843 = vshrl.u32 %v1439, 16
      %v1845 = vrot.slane %v1843, 1
      %v1846 = vshll.u32 %v1439, 16
      %v1848 = vrot.slane %v1846, 2
      %v1849 = vor.u32 %v1845, %v1848
      %v1850 = vsel %vm1788, %v1840, %v1849
      %v1852 = vshrl.u32 %v1440, 16
      %v1854 = vrot.slane %v1852, 1
      %v1855 = vshll.u32 %v1440, 16
      %v1857 = vrot.slane %v1855, 2
      %v1858 = vor.u32 %v1854, %v1857
      %v1859 = vsel %vm1788, %v1849, %v1858
      %v1861 = vshrl.u32 %v1441, 16
      %v1863 = vrot.slane %v1861, 1
      %v1864 = vshll.u32 %v1441, 16
      %v1866 = vrot.slane %v1864, 2
      %v1867 = vor.u32 %v1863, %v1866
      %v1868 = vsel %vm1788, %v1858, %v1867
      %v1870 = vshrl.u32 %v1442, 16
      %v1872 = vrot.slane %v1870, 1
      %v1873 = vshll.u32 %v1442, 16
      %v1875 = vrot.slane %v1873, 2
      %v1876 = vor.u32 %v1872, %v1875
      %v1877 = vsel %vm1788, %v1867, %v1876
      %v1879 = vshrl.u32 %v1443, 16
      %v1881 = vrot.slane %v1879, 1
      %v1882 = vshll.u32 %v1443, 16
      %v1884 = vrot.slane %v1882, 2
      %v1885 = vor.u32 %v1881, %v1884
      %v1886 = vsel %vm1788, %v1876, %v1885
      %v1888 = vshrl.u32 %v1444, 16
      %v1890 = vrot.slane %v1888, 1
      %v1891 = vshll.u32 %v1444, 16
      %v1893 = vrot.slane %v1891, 2
      %v1894 = vor.u32 %v1890, %v1893
      %v1895 = vsel %vm1788, %v1885, %v1894
      %v1897 = vshrl.u32 %v1445, 16
      %v1899 = vrot.slane %v1897, 1
      %v1900 = vshll.u32 %v1445, 16
      %v1902 = vrot.slane %v1900, 2
      %v1903 = vor.u32 %v1899, %v1902
      %v1904 = vsel %vm1788, %v1894, %v1903
      %v1906 = vshrl.u32 %v1446, 16
      %v1908 = vrot.slane %v1906, 1
      %v1909 = vshll.u32 %v1446, 16
      %v1911 = vrot.slane %v1909, 2
      %v1912 = vor.u32 %v1908, %v1911
      %v1913 = vsel %vm1788, %v1903, %v1912
      %v1915 = vshrl.u32 %v1447, 16
      %v1917 = vrot.slane %v1915, 1
      %v1918 = vshll.u32 %v1447, 16
      %v1920 = vrot.slane %v1918, 2
      %v1921 = vor.u32 %v1917, %v1920
      %v1922 = vsel %vm1788, %v1912, %v1921
      %v1924 = vshrl.u32 %v1448, 16
      %v1926 = vrot.slane %v1924, 1
      %v1927 = vshll.u32 %v1448, 16
      %v1929 = vrot.slane %v1927, 2
      %v1930 = vor.u32 %v1926, %v1929
      %v1931 = vsel %vm1788, %v1921, %v1930
      %v1933 = vshrl.u32 %v1449, 16
      %v1935 = vrot.slane %v1933, 1
      %v1936 = vshll.u32 %v1449, 16
      %v1938 = vrot.slane %v1936, 2
      %v1939 = vor.u32 %v1935, %v1938
      %v1940 = vsel %vm1788, %v1930, %v1939
      %v1942 = vshrl.u32 %v1450, 16
      %v1944 = vrot.slane %v1942, 1
      %v1945 = vshll.u32 %v1450, 16
      %v1947 = vrot.slane %v1945, 2
      %v1948 = vor.u32 %v1944, %v1947
      %v1949 = vsel %vm1788, %v1939, %v1948
      %v1951 = vshrl.u32 %v1787, 16
      %v1953 = vrot.slane %v1951, 1
      %v1954 = vshll.u32 %v1787, 16
      %v1956 = vrot.slane %v1954, 2
      %v1957 = vor.u32 %v1953, %v1956
      %v1958 = vsel %vm1788, %v1948, %v1957
      %v1993 = vunpack.c.l.b16 %v1769
      %v1994 = vunpack.c.l.b16 %v1770
      %v1995 = vunpack.c.l.b16 %v1771
      %v1996 = vunpack.c.l.b16 %v1772
      %v1997 = vunpack.c.l.b16 %v1773
      %v1998 = vunpack.c.l.b16 %v1774
      %v1999 = vunpack.c.l.b16 %v1775
      %v2000 = vunpack.c.l.b16 %v1776
      %v2001 = vunpack.c.l.b16 %v1777
      %v2002 = vunpack.c.l.b16 %v1778
      %v2003 = vunpack.c.l.b16 %v1779
      %v2004 = vunpack.c.l.b16 %v1780
      %v2005 = vunpack.c.l.b16 %v1781
      %v2006 = vunpack.c.l.b16 %v1782
      %v2007 = vunpack.c.l.b16 %v1783
      %v2008 = vunpack.c.l.b16 %v1784
      %v2009 = vpack.c.b16 %v1994, %v1993
      %v2010 = vpack.c.b16 %v1996, %v1995
      %v2011 = vpack.c.b16 %v1998, %v1997
      %v2012 = vpack.c.b16 %v2000, %v1999
      %v2013 = vpack.c.b16 %v2002, %v2001
      %v2014 = vpack.c.b16 %v2004, %v2003
      %v2015 = vpack.c.b16 %v2006, %v2005
      %v2016 = vpack.c.b16 %v2008, %v2007
      %2025 = vmatprep.subr.bf16.mxu0 0
      %2026 = vmatpush1.bf16.msra.mxu0 %v2009
      %2027 = vmatprep.subr.bf16.mxu0 0
      %2028 = vmatpush1.bf16.msra.mxu0 %v2010
      %2029 = vmatprep.subr.bf16.mxu0 0
      %2030 = vmatpush1.bf16.msra.mxu0 %v2011
      %2031 = vmatprep.subr.bf16.mxu0 0
      %2032 = vmatpush1.bf16.msra.mxu0 %v2012
      %2033 = vmatprep.subr.bf16.mxu0 0
      %2034 = vmatpush1.bf16.msra.mxu0 %v2013
      %2035 = vmatprep.subr.bf16.mxu0 0
      %2036 = vmatpush1.bf16.msra.mxu0 %v2014
      %2037 = vmatprep.subr.bf16.mxu0 0
      %2038 = vmatpush1.bf16.msra.mxu0 %v2015
      %2039 = vmatprep.subr.bf16.mxu0 0
      %2040 = vmatpush1.bf16.msra.mxu0 %v2016
      %2041 = vmatprep.subr.bf16.mxu0 0
      %2042 = vmatpush1.bf16.msra.mxu0 0
      %2043 = vmatprep.subr.bf16.mxu0 0
      %2044 = vmatpush1.bf16.msra.mxu0 0
      %2045 = vmatprep.subr.bf16.mxu0 0
      %2046 = vmatpush1.bf16.msra.mxu0 0
      %2047 = vmatprep.subr.bf16.mxu0 0
      %2048 = vmatpush1.bf16.msra.mxu0 0
      %2049 = vmatprep.subr.bf16.mxu0 0
      %2050 = vmatpush1.bf16.msra.mxu0 0
      %2051 = vmatprep.subr.bf16.mxu0 0
      %2052 = vmatpush1.bf16.msra.mxu0 0
      %2053 = vmatprep.subr.bf16.mxu0 0
      %2054 = vmatpush1.bf16.msra.mxu0 0
      %2055 = vmatprep.subr.bf16.mxu0 0
      %2056 = vmatpush1.bf16.msra.mxu0 0
      %2057 = vmatprep.mubr.bf16.mxu0 0
      %2058 = vmatmul.mubr.bf16.gmra.mrb[0].mxu0 %v1805
      %v2059 = vpop.f32.mrb[0].mxu0
      %v2060 = vadd.f32 0.0, %v2059
      %v2061 = vpop.f32.mrb[0].mxu0
      %v2062 = vpop.f32.mrb[0].mxu0
      %v2063 = vadd.f32 0.0, %v2062
      %v2064 = vpop.f32.mrb[0].mxu0
      %2065 = vmatprep.mubr.bf16.mxu0 0
      %2066 = vmatmul.mubr.bf16.gmra.mrb[0].mxu0 %v1814
      %v2067 = vpop.f32.mrb[0].mxu0
      %v2068 = vadd.f32 0.0, %v2067
      %v2069 = vpop.f32.mrb[0].mxu0
      %v2070 = vpop.f32.mrb[0].mxu0
      %v2071 = vadd.f32 0.0, %v2070
      %v2072 = vpop.f32.mrb[0].mxu0
      %2073 = vmatprep.mubr.bf16.mxu0 0
      %2074 = vmatmul.mubr.bf16.gmra.mrb[0].mxu0 %v1823
      %v2075 = vpop.f32.mrb[0].mxu0
      %v2076 = vadd.f32 0.0, %v2075
      %v2077 = vpop.f32.mrb[0].mxu0
      %v2078 = vpop.f32.mrb[0].mxu0
      %v2079 = vadd.f32 0.0, %v2078
      %v2080 = vpop.f32.mrb[0].mxu0
      %2081 = vmatprep.mubr.bf16.mxu0 0
      %2082 = vmatmul.mubr.bf16.gmra.mrb[0].mxu0 %v1832
      %v2083 = vpop.f32.mrb[0].mxu0
      %v2084 = vadd.f32 0.0, %v2083
      %v2085 = vpop.f32.mrb[0].mxu0
      %v2086 = vpop.f32.mrb[0].mxu0
      %v2087 = vadd.f32 0.0, %v2086
      %v2088 = vpop.f32.mrb[0].mxu0
      %2089 = vmatprep.mubr.bf16.mxu0 0
      %2090 = vmatmul.mubr.bf16.gmra.mrb[0].mxu0 %v1841
      %v2091 = vpop.f32.mrb[0].mxu0
      %v2092 = vadd.f32 0.0, %v2091
      %v2093 = vpop.f32.mrb[0].mxu0
      %v2094 = vpop.f32.mrb[0].mxu0
      %v2095 = vadd.f32 0.0, %v2094
      %v2096 = vpop.f32.mrb[0].mxu0
      %2097 = vmatprep.mubr.bf16.mxu0 0
      %2098 = vmatmul.mubr.bf16.gmra.mrb[0].mxu0 %v1850
      %v2099 = vpop.f32.mrb[0].mxu0
      %v2100 = vadd.f32 0.0, %v2099
      %v2101 = vpop.f32.mrb[0].mxu0
      %v2102 = vpop.f32.mrb[0].mxu0
      %v2103 = vadd.f32 0.0, %v2102
      %v2104 = vpop.f32.mrb[0].mxu0
      %2105 = vmatprep.mubr.bf16.mxu0 0
      %2106 = vmatmul.mubr.bf16.gmra.mrb[0].mxu0 %v1859
      %v2107 = vpop.f32.mrb[0].mxu0
      %v2108 = vadd.f32 0.0, %v2107
      %v2109 = vpop.f32.mrb[0].mxu0
      %v2110 = vpop.f32.mrb[0].mxu0
      %v2111 = vadd.f32 0.0, %v2110
      %v2112 = vpop.f32.mrb[0].mxu0
      %2113 = vmatprep.mubr.bf16.mxu0 0
      %2114 = vmatmul.mubr.bf16.gmra.mrb[0].mxu0 %v1868
      %v2115 = vpop.f32.mrb[0].mxu0
      %v2116 = vadd.f32 0.0, %v2115
      %v2117 = vpop.f32.mrb[0].mxu0
      %v2118 = vpop.f32.mrb[0].mxu0
      %v2119 = vadd.f32 0.0, %v2118
      %v2120 = vpop.f32.mrb[0].mxu0
      %2121 = vmatprep.mubr.bf16.mxu0 0
      %2122 = vmatmul.mubr.bf16.gmra.mrb[0].mxu0 %v1877
      %v2123 = vpop.f32.mrb[0].mxu0
      %v2124 = vadd.f32 0.0, %v2123
      %v2125 = vpop.f32.mrb[0].mxu0
      %v2126 = vpop.f32.mrb[0].mxu0
      %v2127 = vadd.f32 0.0, %v2126
      %v2128 = vpop.f32.mrb[0].mxu0
      %2129 = vmatprep.mubr.bf16.mxu0 0
      %2130 = vmatmul.mubr.bf16.gmra.mrb[0].mxu0 %v1886
      %v2131 = vpop.f32.mrb[0].mxu0
      %v2132 = vadd.f32 0.0, %v2131
      %v2133 = vpop.f32.mrb[0].mxu0
      %v2134 = vpop.f32.mrb[0].mxu0
      %v2135 = vadd.f32 0.0, %v2134
      %v2136 = vpop.f32.mrb[0].mxu0
      %2137 = vmatprep.mubr.bf16.mxu0 0
      %2138 = vmatmul.mubr.bf16.gmra.mrb[0].mxu0 %v1895
      %v2139 = vpop.f32.mrb[0].mxu0
      %v2140 = vadd.f32 0.0, %v2139
      %v2141 = vpop.f32.mrb[0].mxu0
      %v2142 = vpop.f32.mrb[0].mxu0
      %v2143 = vadd.f32 0.0, %v2142
      %v2144 = vpop.f32.mrb[0].mxu0
      %2145 = vmatprep.mubr.bf16.mxu0 0
      %2146 = vmatmul.mubr.bf16.gmra.mrb[0].mxu0 %v1904
      %v2147 = vpop.f32.mrb[0].mxu0
      %v2148 = vadd.f32 0.0, %v2147
      %v2149 = vpop.f32.mrb[0].mxu0
      %v2150 = vpop.f32.mrb[0].mxu0
      %v2151 = vadd.f32 0.0, %v2150
      %v2152 = vpop.f32.mrb[0].mxu0
      %2153 = vmatprep.mubr.bf16.mxu0 0
      %2154 = vmatmul.mubr.bf16.gmra.mrb[0].mxu0 %v1913
      %v2155 = vpop.f32.mrb[0].mxu0
      %v2156 = vadd.f32 0.0, %v2155
      %v2157 = vpop.f32.mrb[0].mxu0
      %v2158 = vpop.f32.mrb[0].mxu0
      %v2159 = vadd.f32 0.0, %v2158
      %v2160 = vpop.f32.mrb[0].mxu0
      %2161 = vmatprep.mubr.bf16.mxu0 0
      %2162 = vmatmul.mubr.bf16.gmra.mrb[0].mxu0 %v1922
      %v2163 = vpop.f32.mrb[0].mxu0
      %v2164 = vadd.f32 0.0, %v2163
      %v2165 = vpop.f32.mrb[0].mxu0
      %v2166 = vpop.f32.mrb[0].mxu0
      %v2167 = vadd.f32 0.0, %v2166
      %v2168 = vpop.f32.mrb[0].mxu0
      %2169 = vmatprep.mubr.bf16.mxu0 0
      %2170 = vmatmul.mubr.bf16.gmra.mrb[0].mxu0 %v1931
      %v2171 = vpop.f32.mrb[0].mxu0
      %v2172 = vadd.f32 0.0, %v2171
      %v2173 = vpop.f32.mrb[0].mxu0
      %v2174 = vpop.f32.mrb[0].mxu0
      %v2175 = vadd.f32 0.0, %v2174
      %v2176 = vpop.f32.mrb[0].mxu0
      %2177 = vmatprep.mubr.bf16.mxu0 0
      %2178 = vmatmul.mubr.bf16.gmra.mrb[0].mxu0 %v1940
      %v2179 = vpop.f32.mrb[0].mxu0
      %v2180 = vadd.f32 0.0, %v2179
      %v2181 = vpop.f32.mrb[0].mxu0
      %v2182 = vpop.f32.mrb[0].mxu0
      %v2183 = vadd.f32 0.0, %v2182
      %v2184 = vpop.f32.mrb[0].mxu0
      %2185 = vmatprep.mubr.bf16.mxu0 0
      %2186 = vmatmul.mubr.bf16.gmra.mrb[0].mxu0 %v1949
      %v2187 = vpop.f32.mrb[0].mxu0
      %v2188 = vadd.f32 0.0, %v2187
      %v2189 = vpop.f32.mrb[0].mxu0
      %v2190 = vpop.f32.mrb[0].mxu0
      %v2191 = vadd.f32 0.0, %v2190
      %v2192 = vpop.f32.mrb[0].mxu0
      %2193 = vmatprep.mubr.bf16.mxu0 0
      %2194 = vmatmul.mubr.bf16.gmra.mrb[0].mxu0 %v1958
      %v2195 = vpop.f32.mrb[0].mxu0
      %v2196 = vadd.f32 0.0, %v2195
      %v2197 = vpop.f32.mrb[0].mxu0
      %v2198 = vpop.f32.mrb[0].mxu0
      %v2199 = vadd.f32 0.0, %v2198
      %v2200 = vpop.f32.mrb[0].mxu0
      %2201 = vdwg.mxu0
      %v2202 = vadd.f32 %v1732, %v2060
      %v2203 = vadd.f32 %v1733, %v2063
      %v2204 = vadd.f32 %v1734, %v2068
      %v2205 = vadd.f32 %v1735, %v2071
      %v2206 = vadd.f32 %v1736, %v2076
      %v2207 = vadd.f32 %v1737, %v2079
      %v2208 = vadd.f32 %v1738, %v2084
      %v2209 = vadd.f32 %v1739, %v2087
      %v2210 = vadd.f32 %v1740, %v2092
      %v2211 = vadd.f32 %v1741, %v2095
      %v2212 = vadd.f32 %v1742, %v2100
      %v2213 = vadd.f32 %v1743, %v2103
      %v2214 = vadd.f32 %v1744, %v2108
      %v2215 = vadd.f32 %v1745, %v2111
      %v2216 = vadd.f32 %v1746, %v2116
      %v2217 = vadd.f32 %v1747, %v2119
      %v2218 = vadd.f32 %v1748, %v2124
      %v2219 = vadd.f32 %v1749, %v2127
      %v2220 = vadd.f32 %v1750, %v2132
      %v2221 = vadd.f32 %v1751, %v2135
      %v2222 = vadd.f32 %v1752, %v2140
      %v2223 = vadd.f32 %v1753, %v2143
      %v2224 = vadd.f32 %v1754, %v2148
      %v2225 = vadd.f32 %v1755, %v2151
      %v2226 = vadd.f32 %v1756, %v2156
      %v2227 = vadd.f32 %v1757, %v2159
      %v2228 = vadd.f32 %v1758, %v2164
      %v2229 = vadd.f32 %v1759, %v2167
      %v2230 = vadd.f32 %v1760, %v2172
      %v2231 = vadd.f32 %v1761, %v2175
      %v2232 = vadd.f32 %v1762, %v2180
      %v2233 = vadd.f32 %v1763, %v2183
      %v2234 = vadd.f32 %v1764, %v2188
      %v2235 = vadd.f32 %v1765, %v2191
      %v2236 = vadd.f32 %v1766, %v2196
      %v2237 = vadd.f32 %v1767, %v2199
      %v2238 = vld [vmem:[%s165 + $0x8] sm:$0xc]
      %v2239 = vld [vmem:[%s1 + $0x140] sm:$0xf]
      %v2240 = vld [vmem:[%s1 + $0x144] sm:$0xf]
      %v2241 = vld [vmem:[%s1 + $0x148] sm:$0xf]
      %v2242 = vld [vmem:[%s1 + $0x14c] sm:$0xf]
      %v2243 = vld [vmem:[%s1 + $0x150] sm:$0xf]
      %v2244 = vld [vmem:[%s1 + $0x154] sm:$0xf]
      %v2245 = vld [vmem:[%s1 + $0x158] sm:$0xf]
      %v2246 = vld [vmem:[%s1 + $0x15c] sm:$0xf]
      %v2247 = vld [vmem:[%s1 + $0x160] sm:$0xf]
      %v2248 = vld [vmem:[%s1 + $0x164] sm:$0xf]
      %v2249 = vld [vmem:[%s1 + $0x168] sm:$0xf]
      %v2250 = vld [vmem:[%s1 + $0x16c] sm:$0xf]
      %v2251 = vld [vmem:[%s1 + $0x170] sm:$0xf]
      %v2252 = vld [vmem:[%s1 + $0x174] sm:$0xf]
      %v2253 = vld [vmem:[%s1 + $0x178] sm:$0xf]
      %v2254 = vld [vmem:[%s1 + $0x17c] sm:$0xf]
      %v2256 = vunpack.c.l.b16 %v2238
      %v2257 = vpack.c.b16 %v1397, %v2256
      %vm2258 = vcmask 1045504
      %v2259 = vrot.slane %v2257, 2
      %v2260 = vrot.slane %v1434, 2
      %v2261 = vsel %vm2258, %v2259, %v2260
      %v2262 = vrot.slane %v1435, 2
      %v2263 = vsel %vm2258, %v2260, %v2262
      %v2264 = vrot.slane %v1436, 2
      %v2265 = vsel %vm2258, %v2262, %v2264
      %v2266 = vrot.slane %v1437, 2
      %v2267 = vsel %vm2258, %v2264, %v2266
      %v2268 = vrot.slane %v1438, 2
      %v2269 = vsel %vm2258, %v2266, %v2268
      %v2270 = vrot.slane %v1439, 2
      %v2271 = vsel %vm2258, %v2268, %v2270
      %v2272 = vrot.slane %v1440, 2
      %v2273 = vsel %vm2258, %v2270, %v2272
      %v2274 = vrot.slane %v1441, 2
      %v2275 = vsel %vm2258, %v2272, %v2274
      %v2276 = vrot.slane %v1442, 2
      %v2277 = vsel %vm2258, %v2274, %v2276
      %v2278 = vrot.slane %v1443, 2
      %v2279 = vsel %vm2258, %v2276, %v2278
      %v2280 = vrot.slane %v1444, 2
      %v2281 = vsel %vm2258, %v2278, %v2280
      %v2282 = vrot.slane %v1445, 2
      %v2283 = vsel %vm2258, %v2280, %v2282
      %v2284 = vrot.slane %v1446, 2
      %v2285 = vsel %vm2258, %v2282, %v2284
      %v2286 = vrot.slane %v1447, 2
      %v2287 = vsel %vm2258, %v2284, %v2286
      %v2288 = vrot.slane %v1448, 2
      %v2289 = vsel %vm2258, %v2286, %v2288
      %v2290 = vrot.slane %v1449, 2
      %v2291 = vsel %vm2258, %v2288, %v2290
      %v2292 = vrot.slane %v1450, 2
      %v2293 = vsel %vm2258, %v2290, %v2292
      %v2294 = vrot.slane %v1787, 2
      %v2295 = vsel %vm2258, %v2292, %v2294
      %v2330 = vunpack.c.l.b16 %v2239
      %v2331 = vunpack.c.l.b16 %v2240
      %v2332 = vunpack.c.l.b16 %v2241
      %v2333 = vunpack.c.l.b16 %v2242
      %v2334 = vunpack.c.l.b16 %v2243
      %v2335 = vunpack.c.l.b16 %v2244
      %v2336 = vunpack.c.l.b16 %v2245
      %v2337 = vunpack.c.l.b16 %v2246
      %v2338 = vunpack.c.l.b16 %v2247
      %v2339 = vunpack.c.l.b16 %v2248
      %v2340 = vunpack.c.l.b16 %v2249
      %v2341 = vunpack.c.l.b16 %v2250
      %v2342 = vunpack.c.l.b16 %v2251
      %v2343 = vunpack.c.l.b16 %v2252
      %v2344 = vunpack.c.l.b16 %v2253
      %v2345 = vunpack.c.l.b16 %v2254
      %v2346 = vpack.c.b16 %v2331, %v2330
      %v2347 = vpack.c.b16 %v2333, %v2332
      %v2348 = vpack.c.b16 %v2335, %v2334
      %v2349 = vpack.c.b16 %v2337, %v2336
      %v2350 = vpack.c.b16 %v2339, %v2338
      %v2351 = vpack.c.b16 %v2341, %v2340
      %v2352 = vpack.c.b16 %v2343, %v2342
      %v2353 = vpack.c.b16 %v2345, %v2344
      %2362 = vmatprep.subr.bf16.mxu0 0
      %2363 = vmatpush1.bf16.msra.mxu0 %v2346
      %2364 = vmatprep.subr.bf16.mxu0 0
      %2365 = vmatpush1.bf16.msra.mxu0 %v2347
      %2366 = vmatprep.subr.bf16.mxu0 0
      %2367 = vmatpush1.bf16.msra.mxu0 %v2348
      %2368 = vmatprep.subr.bf16.mxu0 0
      %2369 = vmatpush1.bf16.msra.mxu0 %v2349
      %2370 = vmatprep.subr.bf16.mxu0 0
      %2371 = vmatpush1.bf16.msra.mxu0 %v2350
      %2372 = vmatprep.subr.bf16.mxu0 0
      %2373 = vmatpush1.bf16.msra.mxu0 %v2351
      %2374 = vmatprep.subr.bf16.mxu0 0
      %2375 = vmatpush1.bf16.msra.mxu0 %v2352
      %2376 = vmatprep.subr.bf16.mxu0 0
      %2377 = vmatpush1.bf16.msra.mxu0 %v2353
      %2378 = vmatprep.subr.bf16.mxu0 0
      %2379 = vmatpush1.bf16.msra.mxu0 0
      %2380 = vmatprep.subr.bf16.mxu0 0
      %2381 = vmatpush1.bf16.msra.mxu0 0
      %2382 = vmatprep.subr.bf16.mxu0 0
      %2383 = vmatpush1.bf16.msra.mxu0 0
      %2384 = vmatprep.subr.bf16.mxu0 0
      %2385 = vmatpush1.bf16.msra.mxu0 0
      %2386 = vmatprep.subr.bf16.mxu0 0
      %2387 = vmatpush1.bf16.msra.mxu0 0
      %2388 = vmatprep.subr.bf16.mxu0 0
      %2389 = vmatpush1.bf16.msra.mxu0 0
      %2390 = vmatprep.subr.bf16.mxu0 0
      %2391 = vmatpush1.bf16.msra.mxu0 0
      %2392 = vmatprep.subr.bf16.mxu0 0
      %2393 = vmatpush1.bf16.msra.mxu0 0
      %2394 = vmatprep.mubr.bf16.mxu0 0
      %2395 = vmatmul.mubr.bf16.gmra.mrb[0].mxu0 %v2261
      %v2396 = vpop.f32.mrb[0].mxu0
      %v2397 = vadd.f32 0.0, %v2396
      %v2398 = vpop.f32.mrb[0].mxu0
      %v2399 = vpop.f32.mrb[0].mxu0
      %v2400 = vadd.f32 0.0, %v2399
      %v2401 = vpop.f32.mrb[0].mxu0
      %2402 = vmatprep.mubr.bf16.mxu0 0
      %2403 = vmatmul.mubr.bf16.gmra.mrb[0].mxu0 %v2263
      %v2404 = vpop.f32.mrb[0].mxu0
      %v2405 = vadd.f32 0.0, %v2404
      %v2406 = vpop.f32.mrb[0].mxu0
      %v2407 = vpop.f32.mrb[0].mxu0
      %v2408 = vadd.f32 0.0, %v2407
      %v2409 = vpop.f32.mrb[0].mxu0
      %2410 = vmatprep.mubr.bf16.mxu0 0
      %2411 = vmatmul.mubr.bf16.gmra.mrb[0].mxu0 %v2265
      %v2412 = vpop.f32.mrb[0].mxu0
      %v2413 = vadd.f32 0.0, %v2412
      %v2414 = vpop.f32.mrb[0].mxu0
      %v2415 = vpop.f32.mrb[0].mxu0
      %v2416 = vadd.f32 0.0, %v2415
      %v2417 = vpop.f32.mrb[0].mxu0
      %2418 = vmatprep.mubr.bf16.mxu0 0
      %2419 = vmatmul.mubr.bf16.gmra.mrb[0].mxu0 %v2267
      %v2420 = vpop.f32.mrb[0].mxu0
      %v2421 = vadd.f32 0.0, %v2420
      %v2422 = vpop.f32.mrb[0].mxu0
      %v2423 = vpop.f32.mrb[0].mxu0
      %v2424 = vadd.f32 0.0, %v2423
      %v2425 = vpop.f32.mrb[0].mxu0
      %2426 = vmatprep.mubr.bf16.mxu0 0
      %2427 = vmatmul.mubr.bf16.gmra.mrb[0].mxu0 %v2269
      %v2428 = vpop.f32.mrb[0].mxu0
      %v2429 = vadd.f32 0.0, %v2428
      %v2430 = vpop.f32.mrb[0].mxu0
      %v2431 = vpop.f32.mrb[0].mxu0
      %v2432 = vadd.f32 0.0, %v2431
      %v2433 = vpop.f32.mrb[0].mxu0
      %2434 = vmatprep.mubr.bf16.mxu0 0
      %2435 = vmatmul.mubr.bf16.gmra.mrb[0].mxu0 %v2271
      %v2436 = vpop.f32.mrb[0].mxu0
      %v2437 = vadd.f32 0.0, %v2436
      %v2438 = vpop.f32.mrb[0].mxu0
      %v2439 = vpop.f32.mrb[0].mxu0
      %v2440 = vadd.f32 0.0, %v2439
      %v2441 = vpop.f32.mrb[0].mxu0
      %2442 = vmatprep.mubr.bf16.mxu0 0
      %2443 = vmatmul.mubr.bf16.gmra.mrb[0].mxu0 %v2273
      %v2444 = vpop.f32.mrb[0].mxu0
      %v2445 = vadd.f32 0.0, %v2444
      %v2446 = vpop.f32.mrb[0].mxu0
      %v2447 = vpop.f32.mrb[0].mxu0
      %v2448 = vadd.f32 0.0, %v2447
      %v2449 = vpop.f32.mrb[0].mxu0
      %2450 = vmatprep.mubr.bf16.mxu0 0
      %2451 = vmatmul.mubr.bf16.gmra.mrb[0].mxu0 %v2275
      %v2452 = vpop.f32.mrb[0].mxu0
      %v2453 = vadd.f32 0.0, %v2452
      %v2454 = vpop.f32.mrb[0].mxu0
      %v2455 = vpop.f32.mrb[0].mxu0
      %v2456 = vadd.f32 0.0, %v2455
      %v2457 = vpop.f32.mrb[0].mxu0
      %2458 = vmatprep.mubr.bf16.mxu0 0
      %2459 = vmatmul.mubr.bf16.gmra.mrb[0].mxu0 %v2277
      %v2460 = vpop.f32.mrb[0].mxu0
      %v2461 = vadd.f32 0.0, %v2460
      %v2462 = vpop.f32.mrb[0].mxu0
      %v2463 = vpop.f32.mrb[0].mxu0
      %v2464 = vadd.f32 0.0, %v2463
      %v2465 = vpop.f32.mrb[0].mxu0
      %2466 = vmatprep.mubr.bf16.mxu0 0
      %2467 = vmatmul.mubr.bf16.gmra.mrb[0].mxu0 %v2279
      %v2468 = vpop.f32.mrb[0].mxu0
      %v2469 = vadd.f32 0.0, %v2468
      %v2470 = vpop.f32.mrb[0].mxu0
      %v2471 = vpop.f32.mrb[0].mxu0
      %v2472 = vadd.f32 0.0, %v2471
      %v2473 = vpop.f32.mrb[0].mxu0
      %2474 = vmatprep.mubr.bf16.mxu0 0
      %2475 = vmatmul.mubr.bf16.gmra.mrb[0].mxu0 %v2281
      %v2476 = vpop.f32.mrb[0].mxu0
      %v2477 = vadd.f32 0.0, %v2476
      %v2478 = vpop.f32.mrb[0].mxu0
      %v2479 = vpop.f32.mrb[0].mxu0
      %v2480 = vadd.f32 0.0, %v2479
      %v2481 = vpop.f32.mrb[0].mxu0
      %2482 = vmatprep.mubr.bf16.mxu0 0
      %2483 = vmatmul.mubr.bf16.gmra.mrb[0].mxu0 %v2283
      %v2484 = vpop.f32.mrb[0].mxu0
      %v2485 = vadd.f32 0.0, %v2484
      %v2486 = vpop.f32.mrb[0].mxu0
      %v2487 = vpop.f32.mrb[0].mxu0
      %v2488 = vadd.f32 0.0, %v2487
      %v2489 = vpop.f32.mrb[0].mxu0
      %2490 = vmatprep.mubr.bf16.mxu0 0
      %2491 = vmatmul.mubr.bf16.gmra.mrb[0].mxu0 %v2285
      %v2492 = vpop.f32.mrb[0].mxu0
      %v2493 = vadd.f32 0.0, %v2492
      %v2494 = vpop.f32.mrb[0].mxu0
      %v2495 = vpop.f32.mrb[0].mxu0
      %v2496 = vadd.f32 0.0, %v2495
      %v2497 = vpop.f32.mrb[0].mxu0
      %2498 = vmatprep.mubr.bf16.mxu0 0
      %2499 = vmatmul.mubr.bf16.gmra.mrb[0].mxu0 %v2287
      %v2500 = vpop.f32.mrb[0].mxu0
      %v2501 = vadd.f32 0.0, %v2500
      %v2502 = vpop.f32.mrb[0].mxu0
      %v2503 = vpop.f32.mrb[0].mxu0
      %v2504 = vadd.f32 0.0, %v2503
      %v2505 = vpop.f32.mrb[0].mxu0
      %2506 = vmatprep.mubr.bf16.mxu0 0
      %2507 = vmatmul.mubr.bf16.gmra.mrb[0].mxu0 %v2289
      %v2508 = vpop.f32.mrb[0].mxu0
      %v2509 = vadd.f32 0.0, %v2508
      %v2510 = vpop.f32.mrb[0].mxu0
      %v2511 = vpop.f32.mrb[0].mxu0
      %v2512 = vadd.f32 0.0, %v2511
      %v2513 = vpop.f32.mrb[0].mxu0
      %2514 = vmatprep.mubr.bf16.mxu0 0
      %2515 = vmatmul.mubr.bf16.gmra.mrb[0].mxu0 %v2291
      %v2516 = vpop.f32.mrb[0].mxu0
      %v2517 = vadd.f32 0.0, %v2516
      %v2518 = vpop.f32.mrb[0].mxu0
      %v2519 = vpop.f32.mrb[0].mxu0
      %v2520 = vadd.f32 0.0, %v2519
      %v2521 = vpop.f32.mrb[0].mxu0
      %2522 = vmatprep.mubr.bf16.mxu0 0
      %2523 = vmatmul.mubr.bf16.gmra.mrb[0].mxu0 %v2293
      %v2524 = vpop.f32.mrb[0].mxu0
      %v2525 = vadd.f32 0.0, %v2524
      %v2526 = vpop.f32.mrb[0].mxu0
      %v2527 = vpop.f32.mrb[0].mxu0
      %v2528 = vadd.f32 0.0, %v2527
      %v2529 = vpop.f32.mrb[0].mxu0
      %2530 = vmatprep.mubr.bf16.mxu0 0
      %2531 = vmatmul.mubr.bf16.gmra.mrb[0].mxu0 %v2295
      %v2532 = vpop.f32.mrb[0].mxu0
      %v2533 = vadd.f32 0.0, %v2532
      %v2534 = vpop.f32.mrb[0].mxu0
      %v2535 = vpop.f32.mrb[0].mxu0
      %v2536 = vadd.f32 0.0, %v2535
      %v2537 = vpop.f32.mrb[0].mxu0
      %2538 = vdwg.mxu0
      %v2539 = vadd.f32 %v2202, %v2397
      %v2540 = vadd.f32 %v2203, %v2400
      %v2541 = vadd.f32 %v2204, %v2405
      %v2542 = vadd.f32 %v2205, %v2408
      %v2543 = vadd.f32 %v2206, %v2413
      %v2544 = vadd.f32 %v2207, %v2416
      %v2545 = vadd.f32 %v2208, %v2421
      %v2546 = vadd.f32 %v2209, %v2424
      %v2547 = vadd.f32 %v2210, %v2429
      %v2548 = vadd.f32 %v2211, %v2432
      %v2549 = vadd.f32 %v2212, %v2437
      %v2550 = vadd.f32 %v2213, %v2440
      %v2551 = vadd.f32 %v2214, %v2445
      %v2552 = vadd.f32 %v2215, %v2448
      %v2553 = vadd.f32 %v2216, %v2453
      %v2554 = vadd.f32 %v2217, %v2456
      %v2555 = vadd.f32 %v2218, %v2461
      %v2556 = vadd.f32 %v2219, %v2464
      %v2557 = vadd.f32 %v2220, %v2469
      %v2558 = vadd.f32 %v2221, %v2472
      %v2559 = vadd.f32 %v2222, %v2477
      %v2560 = vadd.f32 %v2223, %v2480
      %v2561 = vadd.f32 %v2224, %v2485
      %v2562 = vadd.f32 %v2225, %v2488
      %v2563 = vadd.f32 %v2226, %v2493
      %v2564 = vadd.f32 %v2227, %v2496
      %v2565 = vadd.f32 %v2228, %v2501
      %v2566 = vadd.f32 %v2229, %v2504
      %v2567 = vadd.f32 %v2230, %v2509
      %v2568 = vadd.f32 %v2231, %v2512
      %v2569 = vadd.f32 %v2232, %v2517
      %v2570 = vadd.f32 %v2233, %v2520
      %v2571 = vadd.f32 %v2234, %v2525
      %v2572 = vadd.f32 %v2235, %v2528
      %v2573 = vadd.f32 %v2236, %v2533
      %v2574 = vadd.f32 %v2237, %v2536
      %v2575 = vld [vmem:[%s165 + $0x10] sm:$0xc]
      %v2576 = vld [vmem:[%s165 + $0x14] sm:$0xf]
      %v2577 = vld [vmem:[%s165 + $0x18] sm:$0xf]
      %v2578 = vld [vmem:[%s165 + $0x1c] sm:$0xf]
      %v2579 = vld [vmem:[%s165 + $0x20] sm:$0xf]
      %v2580 = vld [vmem:[%s165 + $0x24] sm:$0xf]
      %v2581 = vld [vmem:[%s165 + $0x28] sm:$0xf]
      %v2582 = vld [vmem:[%s165 + $0x2c] sm:$0xf]
      %v2583 = vld [vmem:[%s165 + $0x30] sm:$0xf]
      %v2584 = vld [vmem:[%s165 + $0x34] sm:$0xf]
      %v2585 = vld [vmem:[%s165 + $0x38] sm:$0xf]
      %v2586 = vld [vmem:[%s165 + $0x3c] sm:$0xf]
      %v2587 = vld [vmem:[%s165 + $0x40] sm:$0xf]
      %v2588 = vld [vmem:[%s165 + $0x44] sm:$0xf]
      %v2589 = vld [vmem:[%s165 + $0x48] sm:$0xf]
      %v2590 = vld [vmem:[%s165 + $0x4c] sm:$0xf]
      %v2591 = vld [vmem:[%s165 + $0x50] sm:$0xf]
      %v2592 = vld [vmem:[%s165 + $0x54] sm:$0xf]
      %v2593 = vld [vmem:[%s165 + $0x58] sm:$0xf]
      %v2594 = vld [vmem:[%s165 + $0x5c] sm:$0xf]
      %v2595 = vld [vmem:[%s165 + $0x60] sm:$0xf]
      %v2596 = vld [vmem:[%s165 + $0x64] sm:$0xf]
      %v2597 = vld [vmem:[%s165 + $0x68] sm:$0xf]
      %v2598 = vld [vmem:[%s165 + $0x6c] sm:$0xf]
      %v2599 = vld [vmem:[%s165 + $0x70] sm:$0xf]
      %v2600 = vld [vmem:[%s165 + $0x74] sm:$0xf]
      %v2601 = vld [vmem:[%s165 + $0x78] sm:$0xf]
      %v2602 = vld [vmem:[%s165 + $0x7c] sm:$0xf]
      %v2603 = vld [vmem:[%s165 + $0x80] sm:$0xf]
      %v2604 = vld [vmem:[%s165 + $0x84] sm:$0xf]
      %v2605 = vld [vmem:[%s165 + $0x88] sm:$0xf]
      %v2606 = vld [vmem:[%s165 + $0x8c] sm:$0xf]
      %v2607 = vld [vmem:[%s165 + $0x90] sm:$0xf]
      %v2608 = vld [vmem:[%s165 + $0x94] sm:$0xf]
      %v2609 = vld [vmem:[%s165 + $0x98] sm:$0xf]
      %v2610 = vld [vmem:[%s165 + $0x9c] sm:$0xf]
      %v2611 = vld [vmem:[%s165 + $0xa0] sm:$0x3]
      %v2612 = vld [vmem:[%s1 + $0x180] sm:$0xf]
      %v2613 = vld [vmem:[%s1 + $0x184] sm:$0xf]
      %v2614 = vld [vmem:[%s1 + $0x188] sm:$0xf]
      %v2615 = vld [vmem:[%s1 + $0x18c] sm:$0xf]
      %v2616 = vld [vmem:[%s1 + $0x190] sm:$0xf]
      %v2617 = vld [vmem:[%s1 + $0x194] sm:$0xf]
      %v2618 = vld [vmem:[%s1 + $0x198] sm:$0xf]
      %v2619 = vld [vmem:[%s1 + $0x19c] sm:$0xf]
      %v2620 = vld [vmem:[%s1 + $0x1a0] sm:$0xf]
      %v2621 = vld [vmem:[%s1 + $0x1a4] sm:$0xf]
      %v2622 = vld [vmem:[%s1 + $0x1a8] sm:$0xf]
      %v2623 = vld [vmem:[%s1 + $0x1ac] sm:$0xf]
      %v2624 = vld [vmem:[%s1 + $0x1b0] sm:$0xf]
      %v2625 = vld [vmem:[%s1 + $0x1b4] sm:$0xf]
      %v2626 = vld [vmem:[%s1 + $0x1b8] sm:$0xf]
      %v2627 = vld [vmem:[%s1 + $0x1bc] sm:$0xf]
      %v2665 = vunpack.c.l.b16 %v2575
      %v2666 = vunpack.c.l.b16 %v2576
      %v2667 = vunpack.c.l.b16 %v2577
      %v2668 = vunpack.c.l.b16 %v2578
      %v2669 = vunpack.c.l.b16 %v2579
      %v2670 = vunpack.c.l.b16 %v2580
      %v2671 = vunpack.c.l.b16 %v2581
      %v2672 = vunpack.c.l.b16 %v2582
      %v2673 = vunpack.c.l.b16 %v2583
      %v2674 = vunpack.c.l.b16 %v2584
      %v2675 = vunpack.c.l.b16 %v2585
      %v2676 = vunpack.c.l.b16 %v2586
      %v2677 = vunpack.c.l.b16 %v2587
      %v2678 = vunpack.c.l.b16 %v2588
      %v2679 = vunpack.c.l.b16 %v2589
      %v2680 = vunpack.c.l.b16 %v2590
      %v2681 = vunpack.c.l.b16 %v2591
      %v2682 = vunpack.c.l.b16 %v2592
      %v2683 = vunpack.c.l.b16 %v2593
      %v2684 = vunpack.c.l.b16 %v2594
      %v2685 = vunpack.c.l.b16 %v2595
      %v2686 = vunpack.c.l.b16 %v2596
      %v2687 = vunpack.c.l.b16 %v2597
      %v2688 = vunpack.c.l.b16 %v2598
      %v2689 = vunpack.c.l.b16 %v2599
      %v2690 = vunpack.c.l.b16 %v2600
      %v2691 = vunpack.c.l.b16 %v2601
      %v2692 = vunpack.c.l.b16 %v2602
      %v2693 = vunpack.c.l.b16 %v2603
      %v2694 = vunpack.c.l.b16 %v2604
      %v2695 = vunpack.c.l.b16 %v2605
      %v2696 = vunpack.c.l.b16 %v2606
      %v2697 = vunpack.c.l.b16 %v2607
      %v2698 = vunpack.c.l.b16 %v2608
      %v2699 = vunpack.c.l.b16 %v2609
      %v2700 = vunpack.c.l.b16 %v2610
      %v2701 = vunpack.c.l.b16 %v2611
      %v2702 = vpack.c.b16 %v2666, %v2665
      %v2703 = vpack.c.b16 %v2668, %v2667
      %v2704 = vpack.c.b16 %v2670, %v2669
      %v2705 = vpack.c.b16 %v2672, %v2671
      %v2706 = vpack.c.b16 %v2674, %v2673
      %v2707 = vpack.c.b16 %v2676, %v2675
      %v2708 = vpack.c.b16 %v2678, %v2677
      %v2709 = vpack.c.b16 %v2680, %v2679
      %v2710 = vpack.c.b16 %v2682, %v2681
      %v2711 = vpack.c.b16 %v2684, %v2683
      %v2712 = vpack.c.b16 %v2686, %v2685
      %v2713 = vpack.c.b16 %v2688, %v2687
      %v2714 = vpack.c.b16 %v2690, %v2689
      %v2715 = vpack.c.b16 %v2692, %v2691
      %v2716 = vpack.c.b16 %v2694, %v2693
      %v2717 = vpack.c.b16 %v2696, %v2695
      %v2718 = vpack.c.b16 %v2698, %v2697
      %v2719 = vpack.c.b16 %v2700, %v2699
      %v2720 = vpack.c.b16 %v2701, %v2701
      %v2721 = vrot.slane %v2702, 2
      %v2722 = vrot.slane %v2703, 2
      %v2723 = vsel %vm2258, %v2721, %v2722
      %v2724 = vrot.slane %v2704, 2
      %v2725 = vsel %vm2258, %v2722, %v2724
      %v2726 = vrot.slane %v2705, 2
      %v2727 = vsel %vm2258, %v2724, %v2726
      %v2728 = vrot.slane %v2706, 2
      %v2729 = vsel %vm2258, %v2726, %v2728
      %v2730 = vrot.slane %v2707, 2
      %v2731 = vsel %vm2258, %v2728, %v2730
      %v2732 = vrot.slane %v2708, 2
      %v2733 = vsel %vm2258, %v2730, %v2732
      %v2734 = vrot.slane %v2709, 2
      %v2735 = vsel %vm2258, %v2732, %v2734
      %v2736 = vrot.slane %v2710, 2
      %v2737 = vsel %vm2258, %v2734, %v2736
      %v2738 = vrot.slane %v2711, 2
      %v2739 = vsel %vm2258, %v2736, %v2738
      %v2740 = vrot.slane %v2712, 2
      %v2741 = vsel %vm2258, %v2738, %v2740
      %v2742 = vrot.slane %v2713, 2
      %v2743 = vsel %vm2258, %v2740, %v2742
      %v2744 = vrot.slane %v2714, 2
      %v2745 = vsel %vm2258, %v2742, %v2744
      %v2746 = vrot.slane %v2715, 2
      %v2747 = vsel %vm2258, %v2744, %v2746
      %v2748 = vrot.slane %v2716, 2
      %v2749 = vsel %vm2258, %v2746, %v2748
      %v2750 = vrot.slane %v2717, 2
      %v2751 = vsel %vm2258, %v2748, %v2750
      %v2752 = vrot.slane %v2718, 2
      %v2753 = vsel %vm2258, %v2750, %v2752
      %v2754 = vrot.slane %v2719, 2
      %v2755 = vsel %vm2258, %v2752, %v2754
      %v2756 = vrot.slane %v2720, 2
      %v2757 = vsel %vm2258, %v2754, %v2756
      %v2792 = vunpack.c.l.b16 %v2612
      %v2793 = vunpack.c.l.b16 %v2613
      %v2794 = vunpack.c.l.b16 %v2614
      %v2795 = vunpack.c.l.b16 %v2615
      %v2796 = vunpack.c.l.b16 %v2616
      %v2797 = vunpack.c.l.b16 %v2617
      %v2798 = vunpack.c.l.b16 %v2618
      %v2799 = vunpack.c.l.b16 %v2619
      %v2800 = vunpack.c.l.b16 %v2620
      %v2801 = vunpack.c.l.b16 %v2621
      %v2802 = vunpack.c.l.b16 %v2622
      %v2803 = vunpack.c.l.b16 %v2623
      %v2804 = vunpack.c.l.b16 %v2624
      %v2805 = vunpack.c.l.b16 %v2625
      %v2806 = vunpack.c.l.b16 %v2626
      %v2807 = vunpack.c.l.b16 %v2627
      %v2808 = vpack.c.b16 %v2793, %v2792
      %v2809 = vpack.c.b16 %v2795, %v2794
      %v2810 = vpack.c.b16 %v2797, %v2796
      %v2811 = vpack.c.b16 %v2799, %v2798
      %v2812 = vpack.c.b16 %v2801, %v2800
      %v2813 = vpack.c.b16 %v2803, %v2802
      %v2814 = vpack.c.b16 %v2805, %v2804
      %v2815 = vpack.c.b16 %v2807, %v2806
      %2824 = vmatprep.subr.bf16.mxu0 0
      %2825 = vmatpush1.bf16.msra.mxu0 %v2808
      %2826 = vmatprep.subr.bf16.mxu0 0
      %2827 = vmatpush1.bf16.msra.mxu0 %v2809
      %2828 = vmatprep.subr.bf16.mxu0 0
      %2829 = vmatpush1.bf16.msra.mxu0 %v2810
      %2830 = vmatprep.subr.bf16.mxu0 0
      %2831 = vmatpush1.bf16.msra.mxu0 %v2811
      %2832 = vmatprep.subr.bf16.mxu0 0
      %2833 = vmatpush1.bf16.msra.mxu0 %v2812
      %2834 = vmatprep.subr.bf16.mxu0 0
      %2835 = vmatpush1.bf16.msra.mxu0 %v2813
      %2836 = vmatprep.subr.bf16.mxu0 0
      %2837 = vmatpush1.bf16.msra.mxu0 %v2814
      %2838 = vmatprep.subr.bf16.mxu0 0
      %2839 = vmatpush1.bf16.msra.mxu0 %v2815
      %2840 = vmatprep.subr.bf16.mxu0 0
      %2841 = vmatpush1.bf16.msra.mxu0 0
      %2842 = vmatprep.subr.bf16.mxu0 0
      %2843 = vmatpush1.bf16.msra.mxu0 0
      %2844 = vmatprep.subr.bf16.mxu0 0
      %2845 = vmatpush1.bf16.msra.mxu0 0
      %2846 = vmatprep.subr.bf16.mxu0 0
      %2847 = vmatpush1.bf16.msra.mxu0 0
      %2848 = vmatprep.subr.bf16.mxu0 0
      %2849 = vmatpush1.bf16.msra.mxu0 0
      %2850 = vmatprep.subr.bf16.mxu0 0
      %2851 = vmatpush1.bf16.msra.mxu0 0
      %2852 = vmatprep.subr.bf16.mxu0 0
      %2853 = vmatpush1.bf16.msra.mxu0 0
      %2854 = vmatprep.subr.bf16.mxu0 0
      %2855 = vmatpush1.bf16.msra.mxu0 0
      %2856 = vmatprep.mubr.bf16.mxu0 0
      %2857 = vmatmul.mubr.bf16.gmra.mrb[0].mxu0 %v2723
      %v2858 = vpop.f32.mrb[0].mxu0
      %v2859 = vadd.f32 0.0, %v2858
      %v2860 = vpop.f32.mrb[0].mxu0
      %v2861 = vpop.f32.mrb[0].mxu0
      %v2862 = vadd.f32 0.0, %v2861
      %v2863 = vpop.f32.mrb[0].mxu0
      %2864 = vmatprep.mubr.bf16.mxu0 0
      %2865 = vmatmul.mubr.bf16.gmra.mrb[0].mxu0 %v2725
      %v2866 = vpop.f32.mrb[0].mxu0
      %v2867 = vadd.f32 0.0, %v2866
      %v2868 = vpop.f32.mrb[0].mxu0
      %v2869 = vpop.f32.mrb[0].mxu0
      %v2870 = vadd.f32 0.0, %v2869
      %v2871 = vpop.f32.mrb[0].mxu0
      %2872 = vmatprep.mubr.bf16.mxu0 0
      %2873 = vmatmul.mubr.bf16.gmra.mrb[0].mxu0 %v2727
      %v2874 = vpop.f32.mrb[0].mxu0
      %v2875 = vadd.f32 0.0, %v2874
      %v2876 = vpop.f32.mrb[0].mxu0
      %v2877 = vpop.f32.mrb[0].mxu0
      %v2878 = vadd.f32 0.0, %v2877
      %v2879 = vpop.f32.mrb[0].mxu0
      %2880 = vmatprep.mubr.bf16.mxu0 0
      %2881 = vmatmul.mubr.bf16.gmra.mrb[0].mxu0 %v2729
      %v2882 = vpop.f32.mrb[0].mxu0
      %v2883 = vadd.f32 0.0, %v2882
      %v2884 = vpop.f32.mrb[0].mxu0
      %v2885 = vpop.f32.mrb[0].mxu0
      %v2886 = vadd.f32 0.0, %v2885
      %v2887 = vpop.f32.mrb[0].mxu0
      %2888 = vmatprep.mubr.bf16.mxu0 0
      %2889 = vmatmul.mubr.bf16.gmra.mrb[0].mxu0 %v2731
      %v2890 = vpop.f32.mrb[0].mxu0
      %v2891 = vadd.f32 0.0, %v2890
      %v2892 = vpop.f32.mrb[0].mxu0
      %v2893 = vpop.f32.mrb[0].mxu0
      %v2894 = vadd.f32 0.0, %v2893
      %v2895 = vpop.f32.mrb[0].mxu0
      %2896 = vmatprep.mubr.bf16.mxu0 0
      %2897 = vmatmul.mubr.bf16.gmra.mrb[0].mxu0 %v2733
      %v2898 = vpop.f32.mrb[0].mxu0
      %v2899 = vadd.f32 0.0, %v2898
      %v2900 = vpop.f32.mrb[0].mxu0
      %v2901 = vpop.f32.mrb[0].mxu0
      %v2902 = vadd.f32 0.0, %v2901
      %v2903 = vpop.f32.mrb[0].mxu0
      %2904 = vmatprep.mubr.bf16.mxu0 0
      %2905 = vmatmul.mubr.bf16.gmra.mrb[0].mxu0 %v2735
      %v2906 = vpop.f32.mrb[0].mxu0
      %v2907 = vadd.f32 0.0, %v2906
      %v2908 = vpop.f32.mrb[0].mxu0
      %v2909 = vpop.f32.mrb[0].mxu0
      %v2910 = vadd.f32 0.0, %v2909
      %v2911 = vpop.f32.mrb[0].mxu0
      %2912 = vmatprep.mubr.bf16.mxu0 0
      %2913 = vmatmul.mubr.bf16.gmra.mrb[0].mxu0 %v2737
      %v2914 = vpop.f32.mrb[0].mxu0
      %v2915 = vadd.f32 0.0, %v2914
      %v2916 = vpop.f32.mrb[0].mxu0
      %v2917 = vpop.f32.mrb[0].mxu0
      %v2918 = vadd.f32 0.0, %v2917
      %v2919 = vpop.f32.mrb[0].mxu0
      %2920 = vmatprep.mubr.bf16.mxu0 0
      %2921 = vmatmul.mubr.bf16.gmra.mrb[0].mxu0 %v2739
      %v2922 = vpop.f32.mrb[0].mxu0
      %v2923 = vadd.f32 0.0, %v2922
      %v2924 = vpop.f32.mrb[0].mxu0
      %v2925 = vpop.f32.mrb[0].mxu0
      %v2926 = vadd.f32 0.0, %v2925
      %v2927 = vpop.f32.mrb[0].mxu0
      %2928 = vmatprep.mubr.bf16.mxu0 0
      %2929 = vmatmul.mubr.bf16.gmra.mrb[0].mxu0 %v2741
      %v2930 = vpop.f32.mrb[0].mxu0
      %v2931 = vadd.f32 0.0, %v2930
      %v2932 = vpop.f32.mrb[0].mxu0
      %v2933 = vpop.f32.mrb[0].mxu0
      %v2934 = vadd.f32 0.0, %v2933
      %v2935 = vpop.f32.mrb[0].mxu0
      %2936 = vmatprep.mubr.bf16.mxu0 0
      %2937 = vmatmul.mubr.bf16.gmra.mrb[0].mxu0 %v2743
      %v2938 = vpop.f32.mrb[0].mxu0
      %v2939 = vadd.f32 0.0, %v2938
      %v2940 = vpop.f32.mrb[0].mxu0
      %v2941 = vpop.f32.mrb[0].mxu0
      %v2942 = vadd.f32 0.0, %v2941
      %v2943 = vpop.f32.mrb[0].mxu0
      %2944 = vmatprep.mubr.bf16.mxu0 0
      %2945 = vmatmul.mubr.bf16.gmra.mrb[0].mxu0 %v2745
      %v2946 = vpop.f32.mrb[0].mxu0
      %v2947 = vadd.f32 0.0, %v2946
      %v2948 = vpop.f32.mrb[0].mxu0
      %v2949 = vpop.f32.mrb[0].mxu0
      %v2950 = vadd.f32 0.0, %v2949
      %v2951 = vpop.f32.mrb[0].mxu0
      %2952 = vmatprep.mubr.bf16.mxu0 0
      %2953 = vmatmul.mubr.bf16.gmra.mrb[0].mxu0 %v2747
      %v2954 = vpop.f32.mrb[0].mxu0
      %v2955 = vadd.f32 0.0, %v2954
      %v2956 = vpop.f32.mrb[0].mxu0
      %v2957 = vpop.f32.mrb[0].mxu0
      %v2958 = vadd.f32 0.0, %v2957
      %v2959 = vpop.f32.mrb[0].mxu0
      %2960 = vmatprep.mubr.bf16.mxu0 0
      %2961 = vmatmul.mubr.bf16.gmra.mrb[0].mxu0 %v2749
      %v2962 = vpop.f32.mrb[0].mxu0
      %v2963 = vadd.f32 0.0, %v2962
      %v2964 = vpop.f32.mrb[0].mxu0
      %v2965 = vpop.f32.mrb[0].mxu0
      %v2966 = vadd.f32 0.0, %v2965
      %v2967 = vpop.f32.mrb[0].mxu0
      %2968 = vmatprep.mubr.bf16.mxu0 0
      %2969 = vmatmul.mubr.bf16.gmra.mrb[0].mxu0 %v2751
      %v2970 = vpop.f32.mrb[0].mxu0
      %v2971 = vadd.f32 0.0, %v2970
      %v2972 = vpop.f32.mrb[0].mxu0
      %v2973 = vpop.f32.mrb[0].mxu0
      %v2974 = vadd.f32 0.0, %v2973
      %v2975 = vpop.f32.mrb[0].mxu0
      %2976 = vmatprep.mubr.bf16.mxu0 0
      %2977 = vmatmul.mubr.bf16.gmra.mrb[0].mxu0 %v2753
      %v2978 = vpop.f32.mrb[0].mxu0
      %v2979 = vadd.f32 0.0, %v2978
      %v2980 = vpop.f32.mrb[0].mxu0
      %v2981 = vpop.f32.mrb[0].mxu0
      %v2982 = vadd.f32 0.0, %v2981
      %v2983 = vpop.f32.mrb[0].mxu0
      %2984 = vmatprep.mubr.bf16.mxu0 0
      %2985 = vmatmul.mubr.bf16.gmra.mrb[0].mxu0 %v2755
      %v2986 = vpop.f32.mrb[0].mxu0
      %v2987 = vadd.f32 0.0, %v2986
      %v2988 = vpop.f32.mrb[0].mxu0
      %v2989 = vpop.f32.mrb[0].mxu0
      %v2990 = vadd.f32 0.0, %v2989
      %v2991 = vpop.f32.mrb[0].mxu0
      %2992 = vmatprep.mubr.bf16.mxu0 0
      %2993 = vmatmul.mubr.bf16.gmra.mrb[0].mxu0 %v2757
      %v2994 = vpop.f32.mrb[0].mxu0
      %v2995 = vadd.f32 0.0, %v2994
      %v2996 = vpop.f32.mrb[0].mxu0
      %v2997 = vpop.f32.mrb[0].mxu0
      %v2998 = vadd.f32 0.0, %v2997
      %v2999 = vpop.f32.mrb[0].mxu0
      %3000 = vdwg.mxu0
      %v3001 = vadd.f32 %v2539, %v2859
      %v3002 = vadd.f32 %v2540, %v2862
      %v3003 = vadd.f32 %v2541, %v2867
      %v3004 = vadd.f32 %v2542, %v2870
      %v3005 = vadd.f32 %v2543, %v2875
      %v3006 = vadd.f32 %v2544, %v2878
      %v3007 = vadd.f32 %v2545, %v2883
      %v3008 = vadd.f32 %v2546, %v2886
      %v3009 = vadd.f32 %v2547, %v2891
      %v3010 = vadd.f32 %v2548, %v2894
      %v3011 = vadd.f32 %v2549, %v2899
      %v3012 = vadd.f32 %v2550, %v2902
      %v3013 = vadd.f32 %v2551, %v2907
      %v3014 = vadd.f32 %v2552, %v2910
      %v3015 = vadd.f32 %v2553, %v2915
      %v3016 = vadd.f32 %v2554, %v2918
      %v3017 = vadd.f32 %v2555, %v2923
      %v3018 = vadd.f32 %v2556, %v2926
      %v3019 = vadd.f32 %v2557, %v2931
      %v3020 = vadd.f32 %v2558, %v2934
      %v3021 = vadd.f32 %v2559, %v2939
      %v3022 = vadd.f32 %v2560, %v2942
      %v3023 = vadd.f32 %v2561, %v2947
      %v3024 = vadd.f32 %v2562, %v2950
      %v3025 = vadd.f32 %v2563, %v2955
      %v3026 = vadd.f32 %v2564, %v2958
      %v3027 = vadd.f32 %v2565, %v2963
      %v3028 = vadd.f32 %v2566, %v2966
      %v3029 = vadd.f32 %v2567, %v2971
      %v3030 = vadd.f32 %v2568, %v2974
      %v3031 = vadd.f32 %v2569, %v2979
      %v3032 = vadd.f32 %v2570, %v2982
      %v3033 = vadd.f32 %v2571, %v2987
      %v3034 = vadd.f32 %v2572, %v2990
      %v3035 = vadd.f32 %v2573, %v2995
      %v3036 = vadd.f32 %v2574, %v2998
      %v3037 = vld [vmem:[%s165 + $0xa0] sm:$0x7]
      %v3038 = vld [vmem:[%s1 + $0x1c0] sm:$0xf]
      %v3039 = vld [vmem:[%s1 + $0x1c4] sm:$0xf]
      %v3040 = vld [vmem:[%s1 + $0x1c8] sm:$0xf]
      %v3041 = vld [vmem:[%s1 + $0x1cc] sm:$0xf]
      %v3042 = vld [vmem:[%s1 + $0x1d0] sm:$0xf]
      %v3043 = vld [vmem:[%s1 + $0x1d4] sm:$0xf]
      %v3044 = vld [vmem:[%s1 + $0x1d8] sm:$0xf]
      %v3045 = vld [vmem:[%s1 + $0x1dc] sm:$0xf]
      %v3046 = vld [vmem:[%s1 + $0x1e0] sm:$0xf]
      %v3047 = vld [vmem:[%s1 + $0x1e4] sm:$0xf]
      %v3048 = vld [vmem:[%s1 + $0x1e8] sm:$0xf]
      %v3049 = vld [vmem:[%s1 + $0x1ec] sm:$0xf]
      %v3050 = vld [vmem:[%s1 + $0x1f0] sm:$0xf]
      %v3051 = vld [vmem:[%s1 + $0x1f4] sm:$0xf]
      %v3052 = vld [vmem:[%s1 + $0x1f8] sm:$0xf]
      %v3053 = vld [vmem:[%s1 + $0x1fc] sm:$0xf]
      %v3055 = vunpack.c.l.b16 %v3037
      %v3056 = vpack.c.b16 %v3055, %v3055
      %vm3057 = vsmask.f32 5376
      %v3059 = vshrl.u32 %v2702, 16
      %v3061 = vrot.slane %v3059, 2
      %v3062 = vshll.u32 %v2702, 16
      %v3064 = vrot.slane %v3062, 3
      %v3065 = vor.u32 %v3061, %v3064
      %v3067 = vshrl.u32 %v2703, 16
      %v3069 = vrot.slane %v3067, 2
      %v3070 = vshll.u32 %v2703, 16
      %v3072 = vrot.slane %v3070, 3
      %v3073 = vor.u32 %v3069, %v3072
      %v3074 = vsel %vm3057, %v3065, %v3073
      %v3076 = vshrl.u32 %v2704, 16
      %v3078 = vrot.slane %v3076, 2
      %v3079 = vshll.u32 %v2704, 16
      %v3081 = vrot.slane %v3079, 3
      %v3082 = vor.u32 %v3078, %v3081
      %v3083 = vsel %vm3057, %v3073, %v3082
      %v3085 = vshrl.u32 %v2705, 16
      %v3087 = vrot.slane %v3085, 2
      %v3088 = vshll.u32 %v2705, 16
      %v3090 = vrot.slane %v3088, 3
      %v3091 = vor.u32 %v3087, %v3090
      %v3092 = vsel %vm3057, %v3082, %v3091
      %v3094 = vshrl.u32 %v2706, 16
      %v3096 = vrot.slane %v3094, 2
      %v3097 = vshll.u32 %v2706, 16
      %v3099 = vrot.slane %v3097, 3
      %v3100 = vor.u32 %v3096, %v3099
      %v3101 = vsel %vm3057, %v3091, %v3100
      %v3103 = vshrl.u32 %v2707, 16
      %v3105 = vrot.slane %v3103, 2
      %v3106 = vshll.u32 %v2707, 16
      %v3108 = vrot.slane %v3106, 3
      %v3109 = vor.u32 %v3105, %v3108
      %v3110 = vsel %vm3057, %v3100, %v3109
      %v3112 = vshrl.u32 %v2708, 16
      %v3114 = vrot.slane %v3112, 2
      %v3115 = vshll.u32 %v2708, 16
      %v3117 = vrot.slane %v3115, 3
      %v3118 = vor.u32 %v3114, %v3117
      %v3119 = vsel %vm3057, %v3109, %v3118
      %v3121 = vshrl.u32 %v2709, 16
      %v3123 = vrot.slane %v3121, 2
      %v3124 = vshll.u32 %v2709, 16
      %v3126 = vrot.slane %v3124, 3
      %v3127 = vor.u32 %v3123, %v3126
      %v3128 = vsel %vm3057, %v3118, %v3127
      %v3130 = vshrl.u32 %v2710, 16
      %v3132 = vrot.slane %v3130, 2
      %v3133 = vshll.u32 %v2710, 16
      %v3135 = vrot.slane %v3133, 3
      %v3136 = vor.u32 %v3132, %v3135
      %v3137 = vsel %vm3057, %v3127, %v3136
      %v3139 = vshrl.u32 %v2711, 16
      %v3141 = vrot.slane %v3139, 2
      %v3142 = vshll.u32 %v2711, 16
      %v3144 = vrot.slane %v3142, 3
      %v3145 = vor.u32 %v3141, %v3144
      %v3146 = vsel %vm3057, %v3136, %v3145
      %v3148 = vshrl.u32 %v2712, 16
      %v3150 = vrot.slane %v3148, 2
      %v3151 = vshll.u32 %v2712, 16
      %v3153 = vrot.slane %v3151, 3
      %v3154 = vor.u32 %v3150, %v3153
      %v3155 = vsel %vm3057, %v3145, %v3154
      %v3157 = vshrl.u32 %v2713, 16
      %v3159 = vrot.slane %v3157, 2
      %v3160 = vshll.u32 %v2713, 16
      %v3162 = vrot.slane %v3160, 3
      %v3163 = vor.u32 %v3159, %v3162
      %v3164 = vsel %vm3057, %v3154, %v3163
      %v3166 = vshrl.u32 %v2714, 16
      %v3168 = vrot.slane %v3166, 2
      %v3169 = vshll.u32 %v2714, 16
      %v3171 = vrot.slane %v3169, 3
      %v3172 = vor.u32 %v3168, %v3171
      %v3173 = vsel %vm3057, %v3163, %v3172
      %v3175 = vshrl.u32 %v2715, 16
      %v3177 = vrot.slane %v3175, 2
      %v3178 = vshll.u32 %v2715, 16
      %v3180 = vrot.slane %v3178, 3
      %v3181 = vor.u32 %v3177, %v3180
      %v3182 = vsel %vm3057, %v3172, %v3181
      %v3184 = vshrl.u32 %v2716, 16
      %v3186 = vrot.slane %v3184, 2
      %v3187 = vshll.u32 %v2716, 16
      %v3189 = vrot.slane %v3187, 3
      %v3190 = vor.u32 %v3186, %v3189
      %v3191 = vsel %vm3057, %v3181, %v3190
      %v3193 = vshrl.u32 %v2717, 16
      %v3195 = vrot.slane %v3193, 2
      %v3196 = vshll.u32 %v2717, 16
      %v3198 = vrot.slane %v3196, 3
      %v3199 = vor.u32 %v3195, %v3198
      %v3200 = vsel %vm3057, %v3190, %v3199
      %v3202 = vshrl.u32 %v2718, 16
      %v3204 = vrot.slane %v3202, 2
      %v3205 = vshll.u32 %v2718, 16
      %v3207 = vrot.slane %v3205, 3
      %v3208 = vor.u32 %v3204, %v3207
      %v3209 = vsel %vm3057, %v3199, %v3208
      %v3211 = vshrl.u32 %v2719, 16
      %v3213 = vrot.slane %v3211, 2
      %v3214 = vshll.u32 %v2719, 16
      %v3216 = vrot.slane %v3214, 3
      %v3217 = vor.u32 %v3213, %v3216
      %v3218 = vsel %vm3057, %v3208, %v3217
      %v3220 = vshrl.u32 %v3056, 16
      %v3222 = vrot.slane %v3220, 2
      %v3223 = vshll.u32 %v3056, 16
      %v3225 = vrot.slane %v3223, 3
      %v3226 = vor.u32 %v3222, %v3225
      %v3227 = vsel %vm3057, %v3217, %v3226
      %v3262 = vunpack.c.l.b16 %v3038
      %v3263 = vunpack.c.l.b16 %v3039
      %v3264 = vunpack.c.l.b16 %v3040
      %v3265 = vunpack.c.l.b16 %v3041
      %v3266 = vunpack.c.l.b16 %v3042
      %v3267 = vunpack.c.l.b16 %v3043
      %v3268 = vunpack.c.l.b16 %v3044
      %v3269 = vunpack.c.l.b16 %v3045
      %v3270 = vunpack.c.l.b16 %v3046
      %v3271 = vunpack.c.l.b16 %v3047
      %v3272 = vunpack.c.l.b16 %v3048
      %v3273 = vunpack.c.l.b16 %v3049
      %v3274 = vunpack.c.l.b16 %v3050
      %v3275 = vunpack.c.l.b16 %v3051
      %v3276 = vunpack.c.l.b16 %v3052
      %v3277 = vunpack.c.l.b16 %v3053
      %v3278 = vpack.c.b16 %v3263, %v3262
      %v3279 = vpack.c.b16 %v3265, %v3264
      %v3280 = vpack.c.b16 %v3267, %v3266
      %v3281 = vpack.c.b16 %v3269, %v3268
      %v3282 = vpack.c.b16 %v3271, %v3270
      %v3283 = vpack.c.b16 %v3273, %v3272
      %v3284 = vpack.c.b16 %v3275, %v3274
      %v3285 = vpack.c.b16 %v3277, %v3276
      %3294 = vmatprep.subr.bf16.mxu0 0
      %3295 = vmatpush1.bf16.msra.mxu0 %v3278
      %3296 = vmatprep.subr.bf16.mxu0 0
      %3297 = vmatpush1.bf16.msra.mxu0 %v3279
      %3298 = vmatprep.subr.bf16.mxu0 0
      %3299 = vmatpush1.bf16.msra.mxu0 %v3280
      %3300 = vmatprep.subr.bf16.mxu0 0
      %3301 = vmatpush1.bf16.msra.mxu0 %v3281
      %3302 = vmatprep.subr.bf16.mxu0 0
      %3303 = vmatpush1.bf16.msra.mxu0 %v3282
      %3304 = vmatprep.subr.bf16.mxu0 0
      %3305 = vmatpush1.bf16.msra.mxu0 %v3283
      %3306 = vmatprep.subr.bf16.mxu0 0
      %3307 = vmatpush1.bf16.msra.mxu0 %v3284
      %3308 = vmatprep.subr.bf16.mxu0 0
      %3309 = vmatpush1.bf16.msra.mxu0 %v3285
      %3310 = vmatprep.subr.bf16.mxu0 0
      %3311 = vmatpush1.bf16.msra.mxu0 0
      %3312 = vmatprep.subr.bf16.mxu0 0
      %3313 = vmatpush1.bf16.msra.mxu0 0
      %3314 = vmatprep.subr.bf16.mxu0 0
      %3315 = vmatpush1.bf16.msra.mxu0 0
      %3316 = vmatprep.subr.bf16.mxu0 0
      %3317 = vmatpush1.bf16.msra.mxu0 0
      %3318 = vmatprep.subr.bf16.mxu0 0
      %3319 = vmatpush1.bf16.msra.mxu0 0
      %3320 = vmatprep.subr.bf16.mxu0 0
      %3321 = vmatpush1.bf16.msra.mxu0 0
      %3322 = vmatprep.subr.bf16.mxu0 0
      %3323 = vmatpush1.bf16.msra.mxu0 0
      %3324 = vmatprep.subr.bf16.mxu0 0
      %3325 = vmatpush1.bf16.msra.mxu0 0
      %3326 = vmatprep.mubr.bf16.mxu0 0
      %3327 = vmatmul.mubr.bf16.gmra.mrb[0].mxu0 %v3074
      %v3328 = vpop.f32.mrb[0].mxu0
      %v3329 = vadd.f32 0.0, %v3328
      %v3330 = vpop.f32.mrb[0].mxu0
      %v3331 = vpop.f32.mrb[0].mxu0
      %v3332 = vadd.f32 0.0, %v3331
      %v3333 = vpop.f32.mrb[0].mxu0
      %3334 = vmatprep.mubr.bf16.mxu0 0
      %3335 = vmatmul.mubr.bf16.gmra.mrb[0].mxu0 %v3083
      %v3336 = vpop.f32.mrb[0].mxu0
      %v3337 = vadd.f32 0.0, %v3336
      %v3338 = vpop.f32.mrb[0].mxu0
      %v3339 = vpop.f32.mrb[0].mxu0
      %v3340 = vadd.f32 0.0, %v3339
      %v3341 = vpop.f32.mrb[0].mxu0
      %3342 = vmatprep.mubr.bf16.mxu0 0
      %3343 = vmatmul.mubr.bf16.gmra.mrb[0].mxu0 %v3092
      %v3344 = vpop.f32.mrb[0].mxu0
      %v3345 = vadd.f32 0.0, %v3344
      %v3346 = vpop.f32.mrb[0].mxu0
      %v3347 = vpop.f32.mrb[0].mxu0
      %v3348 = vadd.f32 0.0, %v3347
      %v3349 = vpop.f32.mrb[0].mxu0
      %3350 = vmatprep.mubr.bf16.mxu0 0
      %3351 = vmatmul.mubr.bf16.gmra.mrb[0].mxu0 %v3101
      %v3352 = vpop.f32.mrb[0].mxu0
      %v3353 = vadd.f32 0.0, %v3352
      %v3354 = vpop.f32.mrb[0].mxu0
      %v3355 = vpop.f32.mrb[0].mxu0
      %v3356 = vadd.f32 0.0, %v3355
      %v3357 = vpop.f32.mrb[0].mxu0
      %3358 = vmatprep.mubr.bf16.mxu0 0
      %3359 = vmatmul.mubr.bf16.gmra.mrb[0].mxu0 %v3110
      %v3360 = vpop.f32.mrb[0].mxu0
      %v3361 = vadd.f32 0.0, %v3360
      %v3362 = vpop.f32.mrb[0].mxu0
      %v3363 = vpop.f32.mrb[0].mxu0
      %v3364 = vadd.f32 0.0, %v3363
      %v3365 = vpop.f32.mrb[0].mxu0
      %3366 = vmatprep.mubr.bf16.mxu0 0
      %3367 = vmatmul.mubr.bf16.gmra.mrb[0].mxu0 %v3119
      %v3368 = vpop.f32.mrb[0].mxu0
      %v3369 = vadd.f32 0.0, %v3368
      %v3370 = vpop.f32.mrb[0].mxu0
      %v3371 = vpop.f32.mrb[0].mxu0
      %v3372 = vadd.f32 0.0, %v3371
      %v3373 = vpop.f32.mrb[0].mxu0
      %3374 = vmatprep.mubr.bf16.mxu0 0
      %3375 = vmatmul.mubr.bf16.gmra.mrb[0].mxu0 %v3128
      %v3376 = vpop.f32.mrb[0].mxu0
      %v3377 = vadd.f32 0.0, %v3376
      %v3378 = vpop.f32.mrb[0].mxu0
      %v3379 = vpop.f32.mrb[0].mxu0
      %v3380 = vadd.f32 0.0, %v3379
      %v3381 = vpop.f32.mrb[0].mxu0
      %3382 = vmatprep.mubr.bf16.mxu0 0
      %3383 = vmatmul.mubr.bf16.gmra.mrb[0].mxu0 %v3137
      %v3384 = vpop.f32.mrb[0].mxu0
      %v3385 = vadd.f32 0.0, %v3384
      %v3386 = vpop.f32.mrb[0].mxu0
      %v3387 = vpop.f32.mrb[0].mxu0
      %v3388 = vadd.f32 0.0, %v3387
      %v3389 = vpop.f32.mrb[0].mxu0
      %3390 = vmatprep.mubr.bf16.mxu0 0
      %3391 = vmatmul.mubr.bf16.gmra.mrb[0].mxu0 %v3146
      %v3392 = vpop.f32.mrb[0].mxu0
      %v3393 = vadd.f32 0.0, %v3392
      %v3394 = vpop.f32.mrb[0].mxu0
      %v3395 = vpop.f32.mrb[0].mxu0
      %v3396 = vadd.f32 0.0, %v3395
      %v3397 = vpop.f32.mrb[0].mxu0
      %3398 = vmatprep.mubr.bf16.mxu0 0
      %3399 = vmatmul.mubr.bf16.gmra.mrb[0].mxu0 %v3155
      %v3400 = vpop.f32.mrb[0].mxu0
      %v3401 = vadd.f32 0.0, %v3400
      %v3402 = vpop.f32.mrb[0].mxu0
      %v3403 = vpop.f32.mrb[0].mxu0
      %v3404 = vadd.f32 0.0, %v3403
      %v3405 = vpop.f32.mrb[0].mxu0
      %3406 = vmatprep.mubr.bf16.mxu0 0
      %3407 = vmatmul.mubr.bf16.gmra.mrb[0].mxu0 %v3164
      %v3408 = vpop.f32.mrb[0].mxu0
      %v3409 = vadd.f32 0.0, %v3408
      %v3410 = vpop.f32.mrb[0].mxu0
      %v3411 = vpop.f32.mrb[0].mxu0
      %v3412 = vadd.f32 0.0, %v3411
      %v3413 = vpop.f32.mrb[0].mxu0
      %3414 = vmatprep.mubr.bf16.mxu0 0
      %3415 = vmatmul.mubr.bf16.gmra.mrb[0].mxu0 %v3173
      %v3416 = vpop.f32.mrb[0].mxu0
      %v3417 = vadd.f32 0.0, %v3416
      %v3418 = vpop.f32.mrb[0].mxu0
      %v3419 = vpop.f32.mrb[0].mxu0
      %v3420 = vadd.f32 0.0, %v3419
      %v3421 = vpop.f32.mrb[0].mxu0
      %3422 = vmatprep.mubr.bf16.mxu0 0
      %3423 = vmatmul.mubr.bf16.gmra.mrb[0].mxu0 %v3182
      %v3424 = vpop.f32.mrb[0].mxu0
      %v3425 = vadd.f32 0.0, %v3424
      %v3426 = vpop.f32.mrb[0].mxu0
      %v3427 = vpop.f32.mrb[0].mxu0
      %v3428 = vadd.f32 0.0, %v3427
      %v3429 = vpop.f32.mrb[0].mxu0
      %3430 = vmatprep.mubr.bf16.mxu0 0
      %3431 = vmatmul.mubr.bf16.gmra.mrb[0].mxu0 %v3191
      %v3432 = vpop.f32.mrb[0].mxu0
      %v3433 = vadd.f32 0.0, %v3432
      %v3434 = vpop.f32.mrb[0].mxu0
      %v3435 = vpop.f32.mrb[0].mxu0
      %v3436 = vadd.f32 0.0, %v3435
      %v3437 = vpop.f32.mrb[0].mxu0
      %3438 = vmatprep.mubr.bf16.mxu0 0
      %3439 = vmatmul.mubr.bf16.gmra.mrb[0].mxu0 %v3200
      %v3440 = vpop.f32.mrb[0].mxu0
      %v3441 = vadd.f32 0.0, %v3440
      %v3442 = vpop.f32.mrb[0].mxu0
      %v3443 = vpop.f32.mrb[0].mxu0
      %v3444 = vadd.f32 0.0, %v3443
      %v3445 = vpop.f32.mrb[0].mxu0
      %3446 = vmatprep.mubr.bf16.mxu0 0
      %3447 = vmatmul.mubr.bf16.gmra.mrb[0].mxu0 %v3209
      %v3448 = vpop.f32.mrb[0].mxu0
      %v3449 = vadd.f32 0.0, %v3448
      %v3450 = vpop.f32.mrb[0].mxu0
      %v3451 = vpop.f32.mrb[0].mxu0
      %v3452 = vadd.f32 0.0, %v3451
      %v3453 = vpop.f32.mrb[0].mxu0
      %3454 = vmatprep.mubr.bf16.mxu0 0
      %3455 = vmatmul.mubr.bf16.gmra.mrb[0].mxu0 %v3218
      %v3456 = vpop.f32.mrb[0].mxu0
      %v3457 = vadd.f32 0.0, %v3456
      %v3458 = vpop.f32.mrb[0].mxu0
      %v3459 = vpop.f32.mrb[0].mxu0
      %v3460 = vadd.f32 0.0, %v3459
      %v3461 = vpop.f32.mrb[0].mxu0
      %3462 = vmatprep.mubr.bf16.mxu0 0
      %3463 = vmatmul.mubr.bf16.gmra.mrb[0].mxu0 %v3227
      %v3464 = vpop.f32.mrb[0].mxu0
      %v3465 = vadd.f32 0.0, %v3464
      %v3466 = vpop.f32.mrb[0].mxu0
      %v3467 = vpop.f32.mrb[0].mxu0
      %v3468 = vadd.f32 0.0, %v3467
      %v3469 = vpop.f32.mrb[0].mxu0
      %3470 = vdwg.mxu0
      %v3471 = vadd.f32 %v3001, %v3329
      %v3472 = vadd.f32 %v3002, %v3332
      %v3473 = vadd.f32 %v3003, %v3337
      %v3474 = vadd.f32 %v3004, %v3340
      %v3475 = vadd.f32 %v3005, %v3345
      %v3476 = vadd.f32 %v3006, %v3348
      %v3477 = vadd.f32 %v3007, %v3353
      %v3478 = vadd.f32 %v3008, %v3356
      %v3479 = vadd.f32 %v3009, %v3361
      %v3480 = vadd.f32 %v3010, %v3364
      %v3481 = vadd.f32 %v3011, %v3369
      %v3482 = vadd.f32 %v3012, %v3372
      %v3483 = vadd.f32 %v3013, %v3377
      %v3484 = vadd.f32 %v3014, %v3380
      %v3485 = vadd.f32 %v3015, %v3385
      %v3486 = vadd.f32 %v3016, %v3388
      %v3487 = vadd.f32 %v3017, %v3393
      %v3488 = vadd.f32 %v3018, %v3396
      %v3489 = vadd.f32 %v3019, %v3401
      %v3490 = vadd.f32 %v3020, %v3404
      %v3491 = vadd.f32 %v3021, %v3409
      %v3492 = vadd.f32 %v3022, %v3412
      %v3493 = vadd.f32 %v3023, %v3417
      %v3494 = vadd.f32 %v3024, %v3420
      %v3495 = vadd.f32 %v3025, %v3425
      %v3496 = vadd.f32 %v3026, %v3428
      %v3497 = vadd.f32 %v3027, %v3433
      %v3498 = vadd.f32 %v3028, %v3436
      %v3499 = vadd.f32 %v3029, %v3441
      %v3500 = vadd.f32 %v3030, %v3444
      %v3501 = vadd.f32 %v3031, %v3449
      %v3502 = vadd.f32 %v3032, %v3452
      %v3503 = vadd.f32 %v3033, %v3457
      %v3504 = vadd.f32 %v3034, %v3460
      %v3505 = vadd.f32 %v3035, %v3465
      %v3506 = vadd.f32 %v3036, %v3468
      %v3507 = vld [vmem:[%s165 + $0x10] sm:$0x8]
      %v3508 = vld [vmem:[%s1 + $0x200] sm:$0xf]
      %v3509 = vld [vmem:[%s1 + $0x204] sm:$0xf]
      %v3510 = vld [vmem:[%s1 + $0x208] sm:$0xf]
      %v3511 = vld [vmem:[%s1 + $0x20c] sm:$0xf]
      %v3512 = vld [vmem:[%s1 + $0x210] sm:$0xf]
      %v3513 = vld [vmem:[%s1 + $0x214] sm:$0xf]
      %v3514 = vld [vmem:[%s1 + $0x218] sm:$0xf]
      %v3515 = vld [vmem:[%s1 + $0x21c] sm:$0xf]
      %v3516 = vld [vmem:[%s1 + $0x220] sm:$0xf]
      %v3517 = vld [vmem:[%s1 + $0x224] sm:$0xf]
      %v3518 = vld [vmem:[%s1 + $0x228] sm:$0xf]
      %v3519 = vld [vmem:[%s1 + $0x22c] sm:$0xf]
      %v3520 = vld [vmem:[%s1 + $0x230] sm:$0xf]
      %v3521 = vld [vmem:[%s1 + $0x234] sm:$0xf]
      %v3522 = vld [vmem:[%s1 + $0x238] sm:$0xf]
      %v3523 = vld [vmem:[%s1 + $0x23c] sm:$0xf]
      %v3525 = vunpack.c.l.b16 %v3507
      %v3526 = vpack.c.b16 %v2666, %v3525
      %vm3527 = vcmask 1044480
      %v3528 = vrot.slane %v3526, 3
      %v3529 = vrot.slane %v2703, 3
      %v3530 = vsel %vm3527, %v3528, %v3529
      %v3531 = vrot.slane %v2704, 3
      %v3532 = vsel %vm3527, %v3529, %v3531
      %v3533 = vrot.slane %v2705, 3
      %v3534 = vsel %vm3527, %v3531, %v3533
      %v3535 = vrot.slane %v2706, 3
      %v3536 = vsel %vm3527, %v3533, %v3535
      %v3537 = vrot.slane %v2707, 3
      %v3538 = vsel %vm3527, %v3535, %v3537
      %v3539 = vrot.slane %v2708, 3
      %v3540 = vsel %vm3527, %v3537, %v3539
      %v3541 = vrot.slane %v2709, 3
      %v3542 = vsel %vm3527, %v3539, %v3541
      %v3543 = vrot.slane %v2710, 3
      %v3544 = vsel %vm3527, %v3541, %v3543
      %v3545 = vrot.slane %v2711, 3
      %v3546 = vsel %vm3527, %v3543, %v3545
      %v3547 = vrot.slane %v2712, 3
      %v3548 = vsel %vm3527, %v3545, %v3547
      %v3549 = vrot.slane %v2713, 3
      %v3550 = vsel %vm3527, %v3547, %v3549
      %v3551 = vrot.slane %v2714, 3
      %v3552 = vsel %vm3527, %v3549, %v3551
      %v3553 = vrot.slane %v2715, 3
      %v3554 = vsel %vm3527, %v3551, %v3553
      %v3555 = vrot.slane %v2716, 3
      %v3556 = vsel %vm3527, %v3553, %v3555
      %v3557 = vrot.slane %v2717, 3
      %v3558 = vsel %vm3527, %v3555, %v3557
      %v3559 = vrot.slane %v2718, 3
      %v3560 = vsel %vm3527, %v3557, %v3559
      %v3561 = vrot.slane %v2719, 3
      %v3562 = vsel %vm3527, %v3559, %v3561
      %v3563 = vrot.slane %v3056, 3
      %v3564 = vsel %vm3527, %v3561, %v3563
      %v3599 = vunpack.c.l.b16 %v3508
      %v3600 = vunpack.c.l.b16 %v3509
      %v3601 = vunpack.c.l.b16 %v3510
      %v3602 = vunpack.c.l.b16 %v3511
      %v3603 = vunpack.c.l.b16 %v3512
      %v3604 = vunpack.c.l.b16 %v3513
      %v3605 = vunpack.c.l.b16 %v3514
      %v3606 = vunpack.c.l.b16 %v3515
      %v3607 = vunpack.c.l.b16 %v3516
      %v3608 = vunpack.c.l.b16 %v3517
      %v3609 = vunpack.c.l.b16 %v3518
      %v3610 = vunpack.c.l.b16 %v3519
      %v3611 = vunpack.c.l.b16 %v3520
      %v3612 = vunpack.c.l.b16 %v3521
      %v3613 = vunpack.c.l.b16 %v3522
      %v3614 = vunpack.c.l.b16 %v3523
      %v3615 = vpack.c.b16 %v3600, %v3599
      %v3616 = vpack.c.b16 %v3602, %v3601
      %v3617 = vpack.c.b16 %v3604, %v3603
      %v3618 = vpack.c.b16 %v3606, %v3605
      %v3619 = vpack.c.b16 %v3608, %v3607
      %v3620 = vpack.c.b16 %v3610, %v3609
      %v3621 = vpack.c.b16 %v3612, %v3611
      %v3622 = vpack.c.b16 %v3614, %v3613
      %3631 = vmatprep.subr.bf16.mxu0 0
      %3632 = vmatpush1.bf16.msra.mxu0 %v3615
      %3633 = vmatprep.subr.bf16.mxu0 0
      %3634 = vmatpush1.bf16.msra.mxu0 %v3616
      %3635 = vmatprep.subr.bf16.mxu0 0
      %3636 = vmatpush1.bf16.msra.mxu0 %v3617
      %3637 = vmatprep.subr.bf16.mxu0 0
      %3638 = vmatpush1.bf16.msra.mxu0 %v3618
      %3639 = vmatprep.subr.bf16.mxu0 0
      %3640 = vmatpush1.bf16.msra.mxu0 %v3619
      %3641 = vmatprep.subr.bf16.mxu0 0
      %3642 = vmatpush1.bf16.msra.mxu0 %v3620
      %3643 = vmatprep.subr.bf16.mxu0 0
      %3644 = vmatpush1.bf16.msra.mxu0 %v3621
      %3645 = vmatprep.subr.bf16.mxu0 0
      %3646 = vmatpush1.bf16.msra.mxu0 %v3622
      %3647 = vmatprep.subr.bf16.mxu0 0
      %3648 = vmatpush1.bf16.msra.mxu0 0
      %3649 = vmatprep.subr.bf16.mxu0 0
      %3650 = vmatpush1.bf16.msra.mxu0 0
      %3651 = vmatprep.subr.bf16.mxu0 0
      %3652 = vmatpush1.bf16.msra.mxu0 0
      %3653 = vmatprep.subr.bf16.mxu0 0
      %3654 = vmatpush1.bf16.msra.mxu0 0
      %3655 = vmatprep.subr.bf16.mxu0 0
      %3656 = vmatpush1.bf16.msra.mxu0 0
      %3657 = vmatprep.subr.bf16.mxu0 0
      %3658 = vmatpush1.bf16.msra.mxu0 0
      %3659 = vmatprep.subr.bf16.mxu0 0
      %3660 = vmatpush1.bf16.msra.mxu0 0
      %3661 = vmatprep.subr.bf16.mxu0 0
      %3662 = vmatpush1.bf16.msra.mxu0 0
      %3663 = vmatprep.mubr.bf16.mxu0 0
      %3664 = vmatmul.mubr.bf16.gmra.mrb[0].mxu0 %v3530
      %v3665 = vpop.f32.mrb[0].mxu0
      %v3666 = vadd.f32 0.0, %v3665
      %v3667 = vpop.f32.mrb[0].mxu0
      %v3668 = vpop.f32.mrb[0].mxu0
      %v3669 = vadd.f32 0.0, %v3668
      %v3670 = vpop.f32.mrb[0].mxu0
      %3671 = vmatprep.mubr.bf16.mxu0 0
      %3672 = vmatmul.mubr.bf16.gmra.mrb[0].mxu0 %v3532
      %v3673 = vpop.f32.mrb[0].mxu0
      %v3674 = vadd.f32 0.0, %v3673
      %v3675 = vpop.f32.mrb[0].mxu0
      %v3676 = vpop.f32.mrb[0].mxu0
      %v3677 = vadd.f32 0.0, %v3676
      %v3678 = vpop.f32.mrb[0].mxu0
      %3679 = vmatprep.mubr.bf16.mxu0 0
      %3680 = vmatmul.mubr.bf16.gmra.mrb[0].mxu0 %v3534
      %v3681 = vpop.f32.mrb[0].mxu0
      %v3682 = vadd.f32 0.0, %v3681
      %v3683 = vpop.f32.mrb[0].mxu0
      %v3684 = vpop.f32.mrb[0].mxu0
      %v3685 = vadd.f32 0.0, %v3684
      %v3686 = vpop.f32.mrb[0].mxu0
      %3687 = vmatprep.mubr.bf16.mxu0 0
      %3688 = vmatmul.mubr.bf16.gmra.mrb[0].mxu0 %v3536
      %v3689 = vpop.f32.mrb[0].mxu0
      %v3690 = vadd.f32 0.0, %v3689
      %v3691 = vpop.f32.mrb[0].mxu0
      %v3692 = vpop.f32.mrb[0].mxu0
      %v3693 = vadd.f32 0.0, %v3692
      %v3694 = vpop.f32.mrb[0].mxu0
      %3695 = vmatprep.mubr.bf16.mxu0 0
      %3696 = vmatmul.mubr.bf16.gmra.mrb[0].mxu0 %v3538
      %v3697 = vpop.f32.mrb[0].mxu0
      %v3698 = vadd.f32 0.0, %v3697
      %v3699 = vpop.f32.mrb[0].mxu0
      %v3700 = vpop.f32.mrb[0].mxu0
      %v3701 = vadd.f32 0.0, %v3700
      %v3702 = vpop.f32.mrb[0].mxu0
      %3703 = vmatprep.mubr.bf16.mxu0 0
      %3704 = vmatmul.mubr.bf16.gmra.mrb[0].mxu0 %v3540
      %v3705 = vpop.f32.mrb[0].mxu0
      %v3706 = vadd.f32 0.0, %v3705
      %v3707 = vpop.f32.mrb[0].mxu0
      %v3708 = vpop.f32.mrb[0].mxu0
      %v3709 = vadd.f32 0.0, %v3708
      %v3710 = vpop.f32.mrb[0].mxu0
      %3711 = vmatprep.mubr.bf16.mxu0 0
      %3712 = vmatmul.mubr.bf16.gmra.mrb[0].mxu0 %v3542
      %v3713 = vpop.f32.mrb[0].mxu0
      %v3714 = vadd.f32 0.0, %v3713
      %v3715 = vpop.f32.mrb[0].mxu0
      %v3716 = vpop.f32.mrb[0].mxu0
      %v3717 = vadd.f32 0.0, %v3716
      %v3718 = vpop.f32.mrb[0].mxu0
      %3719 = vmatprep.mubr.bf16.mxu0 0
      %3720 = vmatmul.mubr.bf16.gmra.mrb[0].mxu0 %v3544
      %v3721 = vpop.f32.mrb[0].mxu0
      %v3722 = vadd.f32 0.0, %v3721
      %v3723 = vpop.f32.mrb[0].mxu0
      %v3724 = vpop.f32.mrb[0].mxu0
      %v3725 = vadd.f32 0.0, %v3724
      %v3726 = vpop.f32.mrb[0].mxu0
      %3727 = vmatprep.mubr.bf16.mxu0 0
      %3728 = vmatmul.mubr.bf16.gmra.mrb[0].mxu0 %v3546
      %v3729 = vpop.f32.mrb[0].mxu0
      %v3730 = vadd.f32 0.0, %v3729
      %v3731 = vpop.f32.mrb[0].mxu0
      %v3732 = vpop.f32.mrb[0].mxu0
      %v3733 = vadd.f32 0.0, %v3732
      %v3734 = vpop.f32.mrb[0].mxu0
      %3735 = vmatprep.mubr.bf16.mxu0 0
      %3736 = vmatmul.mubr.bf16.gmra.mrb[0].mxu0 %v3548
      %v3737 = vpop.f32.mrb[0].mxu0
      %v3738 = vadd.f32 0.0, %v3737
      %v3739 = vpop.f32.mrb[0].mxu0
      %v3740 = vpop.f32.mrb[0].mxu0
      %v3741 = vadd.f32 0.0, %v3740
      %v3742 = vpop.f32.mrb[0].mxu0
      %3743 = vmatprep.mubr.bf16.mxu0 0
      %3744 = vmatmul.mubr.bf16.gmra.mrb[0].mxu0 %v3550
      %v3745 = vpop.f32.mrb[0].mxu0
      %v3746 = vadd.f32 0.0, %v3745
      %v3747 = vpop.f32.mrb[0].mxu0
      %v3748 = vpop.f32.mrb[0].mxu0
      %v3749 = vadd.f32 0.0, %v3748
      %v3750 = vpop.f32.mrb[0].mxu0
      %3751 = vmatprep.mubr.bf16.mxu0 0
      %3752 = vmatmul.mubr.bf16.gmra.mrb[0].mxu0 %v3552
      %v3753 = vpop.f32.mrb[0].mxu0
      %v3754 = vadd.f32 0.0, %v3753
      %v3755 = vpop.f32.mrb[0].mxu0
      %v3756 = vpop.f32.mrb[0].mxu0
      %v3757 = vadd.f32 0.0, %v3756
      %v3758 = vpop.f32.mrb[0].mxu0
      %3759 = vmatprep.mubr.bf16.mxu0 0
      %3760 = vmatmul.mubr.bf16.gmra.mrb[0].mxu0 %v3554
      %v3761 = vpop.f32.mrb[0].mxu0
      %v3762 = vadd.f32 0.0, %v3761
      %v3763 = vpop.f32.mrb[0].mxu0
      %v3764 = vpop.f32.mrb[0].mxu0
      %v3765 = vadd.f32 0.0, %v3764
      %v3766 = vpop.f32.mrb[0].mxu0
      %3767 = vmatprep.mubr.bf16.mxu0 0
      %3768 = vmatmul.mubr.bf16.gmra.mrb[0].mxu0 %v3556
      %v3769 = vpop.f32.mrb[0].mxu0
      %v3770 = vadd.f32 0.0, %v3769
      %v3771 = vpop.f32.mrb[0].mxu0
      %v3772 = vpop.f32.mrb[0].mxu0
      %v3773 = vadd.f32 0.0, %v3772
      %v3774 = vpop.f32.mrb[0].mxu0
      %3775 = vmatprep.mubr.bf16.mxu0 0
      %3776 = vmatmul.mubr.bf16.gmra.mrb[0].mxu0 %v3558
      %v3777 = vpop.f32.mrb[0].mxu0
      %v3778 = vadd.f32 0.0, %v3777
      %v3779 = vpop.f32.mrb[0].mxu0
      %v3780 = vpop.f32.mrb[0].mxu0
      %v3781 = vadd.f32 0.0, %v3780
      %v3782 = vpop.f32.mrb[0].mxu0
      %3783 = vmatprep.mubr.bf16.mxu0 0
      %3784 = vmatmul.mubr.bf16.gmra.mrb[0].mxu0 %v3560
      %v3785 = vpop.f32.mrb[0].mxu0
      %v3786 = vadd.f32 0.0, %v3785
      %v3787 = vpop.f32.mrb[0].mxu0
      %v3788 = vpop.f32.mrb[0].mxu0
      %v3789 = vadd.f32 0.0, %v3788
      %v3790 = vpop.f32.mrb[0].mxu0
      %3791 = vmatprep.mubr.bf16.mxu0 0
      %3792 = vmatmul.mubr.bf16.gmra.mrb[0].mxu0 %v3562
      %v3793 = vpop.f32.mrb[0].mxu0
      %v3794 = vadd.f32 0.0, %v3793
      %v3795 = vpop.f32.mrb[0].mxu0
      %v3796 = vpop.f32.mrb[0].mxu0
      %v3797 = vadd.f32 0.0, %v3796
      %v3798 = vpop.f32.mrb[0].mxu0
      %3799 = vmatprep.mubr.bf16.mxu0 0
      %3800 = vmatmul.mubr.bf16.gmra.mrb[0].mxu0 %v3564
      %v3801 = vpop.f32.mrb[0].mxu0
      %v3802 = vadd.f32 0.0, %v3801
      %v3803 = vpop.f32.mrb[0].mxu0
      %v3804 = vpop.f32.mrb[0].mxu0
      %v3805 = vadd.f32 0.0, %v3804
      %v3806 = vpop.f32.mrb[0].mxu0
      %3807 = vdwg.mxu0
      %v3808 = vadd.f32 %v3471, %v3666
      %v3809 = vadd.f32 %v3472, %v3669
      %v3810 = vadd.f32 %v3473, %v3674
      %v3811 = vadd.f32 %v3474, %v3677
      %v3812 = vadd.f32 %v3475, %v3682
      %v3813 = vadd.f32 %v3476, %v3685
      %v3814 = vadd.f32 %v3477, %v3690
      %v3815 = vadd.f32 %v3478, %v3693
      %v3816 = vadd.f32 %v3479, %v3698
      %v3817 = vadd.f32 %v3480, %v3701
      %v3818 = vadd.f32 %v3481, %v3706
      %v3819 = vadd.f32 %v3482, %v3709
      %v3820 = vadd.f32 %v3483, %v3714
      %v3821 = vadd.f32 %v3484, %v3717
      %v3822 = vadd.f32 %v3485, %v3722
      %v3823 = vadd.f32 %v3486, %v3725
      %v3824 = vadd.f32 %v3487, %v3730
      %v3825 = vadd.f32 %v3488, %v3733
      %v3826 = vadd.f32 %v3489, %v3738
      %v3827 = vadd.f32 %v3490, %v3741
      %v3828 = vadd.f32 %v3491, %v3746
      %v3829 = vadd.f32 %v3492, %v3749
      %v3830 = vadd.f32 %v3493, %v3754
      %v3831 = vadd.f32 %v3494, %v3757
      %v3832 = vadd.f32 %v3495, %v3762
      %v3833 = vadd.f32 %v3496, %v3765
      %v3834 = vadd.f32 %v3497, %v3770
      %v3835 = vadd.f32 %v3498, %v3773
      %v3836 = vadd.f32 %v3499, %v3778
      %v3837 = vadd.f32 %v3500, %v3781
      %v3838 = vadd.f32 %v3501, %v3786
      %v3839 = vadd.f32 %v3502, %v3789
      %v3840 = vadd.f32 %v3503, %v3794
      %v3841 = vadd.f32 %v3504, %v3797
      %v3842 = vadd.f32 %v3505, %v3802
      %v3843 = vadd.f32 %v3506, %v3805
      %v3844 = vld [vmem:[%s2] sm:$0x1]
      %v3846 = vlaneseq
      %v3847 = vshrl.u32 %v3846, 7
      %v3848 = vsub.s32 0, %v3847
      %v3849 = vrot.slane %v3844, %v3848
      %v3851 = vadd.f32 %v3808, %v3849
      %v3852 = vadd.f32 %v3809, %v3849
      %v3853 = vadd.f32 %v3810, %v3849
      %v3854 = vadd.f32 %v3811, %v3849
      %v3855 = vadd.f32 %v3812, %v3849
      %v3856 = vadd.f32 %v3813, %v3849
      %v3857 = vadd.f32 %v3814, %v3849
      %v3858 = vadd.f32 %v3815, %v3849
      %v3859 = vadd.f32 %v3816, %v3849
      %v3860 = vadd.f32 %v3817, %v3849
      %v3861 = vadd.f32 %v3818, %v3849
      %v3862 = vadd.f32 %v3819, %v3849
      %v3863 = vadd.f32 %v3820, %v3849
      %v3864 = vadd.f32 %v3821, %v3849
      %v3865 = vadd.f32 %v3822, %v3849
      %v3866 = vadd.f32 %v3823, %v3849
      %v3867 = vadd.f32 %v3824, %v3849
      %v3868 = vadd.f32 %v3825, %v3849
      %v3869 = vadd.f32 %v3826, %v3849
      %v3870 = vadd.f32 %v3827, %v3849
      %v3871 = vadd.f32 %v3828, %v3849
      %v3872 = vadd.f32 %v3829, %v3849
      %v3873 = vadd.f32 %v3830, %v3849
      %v3874 = vadd.f32 %v3831, %v3849
      %v3875 = vadd.f32 %v3832, %v3849
      %v3876 = vadd.f32 %v3833, %v3849
      %v3877 = vadd.f32 %v3834, %v3849
      %v3878 = vadd.f32 %v3835, %v3849
      %v3879 = vadd.f32 %v3836, %v3849
      %v3880 = vadd.f32 %v3837, %v3849
      %v3881 = vadd.f32 %v3838, %v3849
      %v3882 = vadd.f32 %v3839, %v3849
      %v3883 = vadd.f32 %v3840, %v3849
      %v3884 = vadd.f32 %v3841, %v3849
      %v3885 = vadd.f32 %v3842, %v3849
      %v3886 = vadd.f32 %v3843, %v3849
      %v3887 = vmax.f32 %v3851, 0.0
      %v3888 = vmax.f32 %v3852, 0.0
      %v3889 = vmax.f32 %v3853, 0.0
      %v3890 = vmax.f32 %v3854, 0.0
      %v3891 = vmax.f32 %v3855, 0.0
      %v3892 = vmax.f32 %v3856, 0.0
      %v3893 = vmax.f32 %v3857, 0.0
      %v3894 = vmax.f32 %v3858, 0.0
      %v3895 = vmax.f32 %v3859, 0.0
      %v3896 = vmax.f32 %v3860, 0.0
      %v3897 = vmax.f32 %v3861, 0.0
      %v3898 = vmax.f32 %v3862, 0.0
      %v3899 = vmax.f32 %v3863, 0.0
      %v3900 = vmax.f32 %v3864, 0.0
      %v3901 = vmax.f32 %v3865, 0.0
      %v3902 = vmax.f32 %v3866, 0.0
      %v3903 = vmax.f32 %v3867, 0.0
      %v3904 = vmax.f32 %v3868, 0.0
      %v3905 = vmax.f32 %v3869, 0.0
      %v3906 = vmax.f32 %v3870, 0.0
      %v3907 = vmax.f32 %v3871, 0.0
      %v3908 = vmax.f32 %v3872, 0.0
      %v3909 = vmax.f32 %v3873, 0.0
      %v3910 = vmax.f32 %v3874, 0.0
      %v3911 = vmax.f32 %v3875, 0.0
      %v3912 = vmax.f32 %v3876, 0.0
      %v3913 = vmax.f32 %v3877, 0.0
      %v3914 = vmax.f32 %v3878, 0.0
      %v3915 = vmax.f32 %v3879, 0.0
      %v3916 = vmax.f32 %v3880, 0.0
      %v3917 = vmax.f32 %v3881, 0.0
      %v3918 = vmax.f32 %v3882, 0.0
      %v3919 = vmax.f32 %v3883, 0.0
      %v3920 = vmax.f32 %v3884, 0.0
      %v3921 = vmax.f32 %v3885, 0.0
      %v3922 = vmax.f32 %v3886, 0.0
      %v3923 = vpack.c.bf16 %v3888, %v3887
      %v3924 = vpack.c.bf16 %v3890, %v3889
      %v3925 = vpack.c.bf16 %v3892, %v3891
      %v3926 = vpack.c.bf16 %v3894, %v3893
      %v3927 = vpack.c.bf16 %v3896, %v3895
      %v3928 = vpack.c.bf16 %v3898, %v3897
      %v3929 = vpack.c.bf16 %v3900, %v3899
      %v3930 = vpack.c.bf16 %v3902, %v3901
      %v3931 = vpack.c.bf16 %v3904, %v3903
      %v3932 = vpack.c.bf16 %v3906, %v3905
      %v3933 = vpack.c.bf16 %v3908, %v3907
      %v3934 = vpack.c.bf16 %v3910, %v3909
      %v3935 = vpack.c.bf16 %v3912, %v3911
      %v3936 = vpack.c.bf16 %v3914, %v3913
      %v3937 = vpack.c.bf16 %v3916, %v3915
      %v3938 = vpack.c.bf16 %v3918, %v3917
      %v3939 = vpack.c.bf16 %v3920, %v3919
      %v3940 = vpack.c.bf16 %v3922, %v3921
      %v3959 = vunpack.c.l.b16 %v3923
      %v3960 = vunpack.c.h.b16 %v3923
      %v3961 = vunpack.c.l.b16 %v3924
      %v3962 = vunpack.c.h.b16 %v3924
      %v3963 = vunpack.c.l.b16 %v3925
      %v3964 = vunpack.c.h.b16 %v3925
      %v3965 = vunpack.c.l.b16 %v3926
      %v3966 = vunpack.c.h.b16 %v3926
      %v3967 = vunpack.c.l.b16 %v3927
      %v3968 = vunpack.c.h.b16 %v3927
      %v3969 = vunpack.c.l.b16 %v3928
      %v3970 = vunpack.c.h.b16 %v3928
      %v3971 = vunpack.c.l.b16 %v3929
      %v3972 = vunpack.c.h.b16 %v3929
      %v3973 = vunpack.c.l.b16 %v3930
      %v3974 = vunpack.c.h.b16 %v3930
      %v3975 = vunpack.c.l.b16 %v3931
      %v3976 = vunpack.c.h.b16 %v3931
      %v3977 = vunpack.c.l.b16 %v3932
      %v3978 = vunpack.c.h.b16 %v3932
      %v3979 = vunpack.c.l.b16 %v3933
      %v3980 = vunpack.c.h.b16 %v3933
      %v3981 = vunpack.c.l.b16 %v3934
      %v3982 = vunpack.c.h.b16 %v3934
      %v3983 = vunpack.c.l.b16 %v3935
      %v3984 = vunpack.c.h.b16 %v3935
      %v3985 = vunpack.c.l.b16 %v3936
      %v3986 = vunpack.c.h.b16 %v3936
      %v3987 = vunpack.c.l.b16 %v3937
      %v3988 = vunpack.c.h.b16 %v3937
      %v3989 = vunpack.c.l.b16 %v3938
      %v3990 = vunpack.c.h.b16 %v3938
      %v3991 = vunpack.c.l.b16 %v3939
      %v3992 = vunpack.c.h.b16 %v3939
      %v3993 = vunpack.c.l.b16 %v3940
      %v3994 = vunpack.c.h.b16 %v3940
      %v3995 = vpack.c.b16 %v3959, %v3959
      %v3996 = vpack.c.b16 %v3960, %v3960
      %v3997 = vpack.c.b16 %v3961, %v3961
      %v3998 = vpack.c.b16 %v3962, %v3962
      %v3999 = vpack.c.b16 %v3963, %v3963
      %v4000 = vpack.c.b16 %v3964, %v3964
      %v4001 = vpack.c.b16 %v3965, %v3965
      %v4002 = vpack.c.b16 %v3966, %v3966
      %v4003 = vpack.c.b16 %v3967, %v3967
      %v4004 = vpack.c.b16 %v3968, %v3968
      %v4005 = vpack.c.b16 %v3969, %v3969
      %v4006 = vpack.c.b16 %v3970, %v3970
      %v4007 = vpack.c.b16 %v3971, %v3971
      %v4008 = vpack.c.b16 %v3972, %v3972
      %v4009 = vpack.c.b16 %v3973, %v3973
      %v4010 = vpack.c.b16 %v3974, %v3974
      %v4011 = vpack.c.b16 %v3975, %v3975
      %v4012 = vpack.c.b16 %v3976, %v3976
      %v4013 = vpack.c.b16 %v3977, %v3977
      %v4014 = vpack.c.b16 %v3978, %v3978
      %v4015 = vpack.c.b16 %v3979, %v3979
      %v4016 = vpack.c.b16 %v3980, %v3980
      %v4017 = vpack.c.b16 %v3981, %v3981
      %v4018 = vpack.c.b16 %v3982, %v3982
      %v4019 = vpack.c.b16 %v3983, %v3983
      %v4020 = vpack.c.b16 %v3984, %v3984
      %v4021 = vpack.c.b16 %v3985, %v3985
      %v4022 = vpack.c.b16 %v3986, %v3986
      %v4023 = vpack.c.b16 %v3987, %v3987
      %v4024 = vpack.c.b16 %v3988, %v3988
      %v4025 = vpack.c.b16 %v3989, %v3989
      %v4026 = vpack.c.b16 %v3990, %v3990
      %v4027 = vpack.c.b16 %v3991, %v3991
      %v4028 = vpack.c.b16 %v3992, %v3992
      %v4029 = vpack.c.b16 %v3993, %v3993
      %v4030 = vpack.c.b16 %v3994, %v3994
      %4067 = vst [vmem:[%s170] sm:$0xf] %v3995
      %4068 = vst [vmem:[%s170 + $0x4] sm:$0xf] %v3996
      %4069 = vst [vmem:[%s170 + $0x8] sm:$0xf] %v3997
      %4070 = vst [vmem:[%s170 + $0xc] sm:$0xf] %v3998
      %4071 = vst [vmem:[%s170 + $0x10] sm:$0xf] %v3999
      %4072 = vst [vmem:[%s170 + $0x14] sm:$0xf] %v4000
      %4073 = vst [vmem:[%s170 + $0x18] sm:$0xf] %v4001
      %4074 = vst [vmem:[%s170 + $0x1c] sm:$0xf] %v4002
      %4075 = vst [vmem:[%s170 + $0x20] sm:$0xf] %v4003
      %4076 = vst [vmem:[%s170 + $0x24] sm:$0xf] %v4004
      %4077 = vst [vmem:[%s170 + $0x28] sm:$0xf] %v4005
      %4078 = vst [vmem:[%s170 + $0x2c] sm:$0xf] %v4006
      %4079 = vst [vmem:[%s170 + $0x30] sm:$0xf] %v4007
      %4080 = vst [vmem:[%s170 + $0x34] sm:$0xf] %v4008
      %4081 = vst [vmem:[%s170 + $0x38] sm:$0xf] %v4009
      %4082 = vst [vmem:[%s170 + $0x3c] sm:$0xf] %v4010
      %4083 = vst [vmem:[%s170 + $0x40] sm:$0xf] %v4011
      %4084 = vst [vmem:[%s170 + $0x44] sm:$0xf] %v4012
      %4085 = vst [vmem:[%s170 + $0x48] sm:$0xf] %v4013
      %4086 = vst [vmem:[%s170 + $0x4c] sm:$0xf] %v4014
      %4087 = vst [vmem:[%s170 + $0x50] sm:$0xf] %v4015
      %4088 = vst [vmem:[%s170 + $0x54] sm:$0xf] %v4016
      %4089 = vst [vmem:[%s170 + $0x58] sm:$0xf] %v4017
      %4090 = vst [vmem:[%s170 + $0x5c] sm:$0xf] %v4018
      %4091 = vst [vmem:[%s170 + $0x60] sm:$0xf] %v4019
      %4092 = vst [vmem:[%s170 + $0x64] sm:$0xf] %v4020
      %4093 = vst [vmem:[%s170 + $0x68] sm:$0xf] %v4021
      %4094 = vst [vmem:[%s170 + $0x6c] sm:$0xf] %v4022
      %4095 = vst [vmem:[%s170 + $0x70] sm:$0xf] %v4023
      %4096 = vst [vmem:[%s170 + $0x74] sm:$0xf] %v4024
      %4097 = vst [vmem:[%s170 + $0x78] sm:$0xf] %v4025
      %4098 = vst [vmem:[%s170 + $0x7c] sm:$0xf] %v4026
      %4099 = vst [vmem:[%s170 + $0x80] sm:$0xf] %v4027
      %4100 = vst [vmem:[%s170 + $0x84] sm:$0xf] %v4028
      %4101 = vst [vmem:[%s170 + $0x88] sm:$0xf] %v4029
      %4102 = vst [vmem:[%s170 + $0x8c] sm:$0xf] %v4030
      %p4103 = scmp.lt.s32.totalorder %s14, 1
      %s4104 = scalar_select %p4103, %s14, 1
      %s4105 = smul.addr %s4104, 36
      %s4106 = smul.addr %s4105, 4
      %s4107 = scalar_lea.vmem %s3, %s4106
      // Predicated region
      $region33: #{bottleneck_forward.4} parent=31 // pred_check
        %p4108 = pneg %p100
      $region34: #{bottleneck_forward.4} parent=31 // pred_check_branch
        %4110 = sbr.rel (%p4108) target = $region36
      $region35: #{bottleneck_forward.4} parent=31 // pred_region
        _
      $region36: #{bottleneck_forward.4} parent=31 // pred_fallthru
        _
    $region32: #{bottleneck_forward.4} parent=5 // pred_fallthru
      _
    %p4111 = scmp.le.s32.totalorder 2, %s9
    // Predicated region
    $region37: #{bottleneck_forward.4} parent=5 // pred_check
      %p4112 = pneg %p4111
    $region38: #{bottleneck_forward.4} parent=5 // pred_check_branch
      %4114 = sbr.rel (%p4112) target = $region40
    $region39: #{bottleneck_forward.4} parent=5 // pred_region
      %s4115 = ssub.s32 %s9, 2
      // Predicated region
      $region41: #{bottleneck_forward.4} parent=39 // pred_check
        %p4116 = pneg %p106
      $region42: #{bottleneck_forward.4} parent=39 // pred_check_branch
        %4118 = sbr.rel (%p4116) target = $region44
      $region43: #{bottleneck_forward.4} parent=39 // pred_region
        %p4119 = scmp.lt.s32.totalorder %s15, 1
        %s4120 = scalar_select %p4119, %s15, 1
        %s4121 = smul.addr %s4120, 36
        %s4122 = smul.addr %s4121, 4
        %s4123 = scalar_lea.vmem %s3, %s4122
      $region44: #{bottleneck_forward.4} parent=39 // pred_fallthru
        _
    $region40: #{bottleneck_forward.4} parent=5 // pred_fallthru
      _
  $region6: #{bottleneck_forward.4} parent=0 // loop_footer
    %s13 = sadd.s32 1, %s9
  $region7: #{bottleneck_forward.4} parent=0 // loop_footer_branch
    %8 = sbr.rel target = $region3
  $region8: #{bottleneck_forward.4} parent=0 // loop_exit
    _

</llo_original>
